<compile_context>
chip_gen: v6e
topology: v6e:2x2x1
jax: 0.10.0
libtpu: 0.0.40
codegen_flags: <defaults>
</compile_context>

<pallas_src>
import math
import numpy as np
import jax
import jax.numpy as jnp
from jax.experimental import pallas as pl
from jax.experimental.pallas import tpu as pltpu

# ------------------------------- config --------------------------------------
B = 2
L = 8
D = 4
HID = 32                  # config.hid_dim == ttcn_dim
TE = 8                    # config.te_dim
PATCH = 4                 # config.patch_size
MASK_RATIO = 0.5
NLAYERS = 4               # transformer encoder layers
DM = HID // PATCH         # transformer d_model = 8
FFN = 4 * DM              # feed-forward width = 32
F_IN = 1 + TE             # TTCN per-step feature dim = 9
PF = 16                   # F_IN zero-padded for lane alignment
N = B * D                 # flattened (batch * channel) sample count = 8
NL = N * L                # 64 time rows
MASK_LEN = int(PATCH * MASK_RATIO)
FILT = PF * HID           # padded filter width = 512
CH = 128                  # TTCN filter-lane chunk (one vreg of lanes)
NCHUNK = FILT // CH       # 4

assert HID == PATCH * DM and PF >= F_IN and FILT % CH == 0

# ------------------------ w128 slab row offsets (lane width 128) -------------
R_REP = 0                          # (PF, 128) X -> filter-lane repeat matrix
R_W3 = R_REP + PF                  # NCHUNK blocks of (HID, 128): w3 chunks
R_B3 = R_W3 + NCHUNK * HID         # (NCHUNK, 128): b3 chunks
R_WF1 = R_B3 + NCHUNK              # NLAYERS blocks of (HID, 128): FFN-in (blkdiag)
R_BF1 = R_WF1 + NLAYERS * HID      # (NLAYERS, 128)
R_DW1 = R_BF1 + NLAYERS            # (HID, 128): decoder w1 (blkdiag)
R_DB1 = R_DW1 + HID                # (1, 128)
W128_ROWS = 320

# ------------------------ w32 slab row offsets (lane width 32) ---------------
S_W1 = 0                            # (PF, 32)   filter-gen layer 1 (row-padded)
S_W2 = S_W1 + PF                    # (HID, 32)  filter-gen layer 2
S_GRP = S_W2 + HID                  # (FILT, 32) filter-col -> hidden group sum
S_WVO = S_GRP + FILT                # NLAYERS x (HID, 32) folded attn (blkdiag)
S_WF2 = S_WVO + NLAYERS * HID       # NLAYERS x (FFN*PATCH, 32) FFN-out (blkdiag)
S_DW2 = S_WF2 + NLAYERS * FFN * PATCH   # (FFN*PATCH, 32) decoder w2 (blkdiag)
S_GMEAN = S_DW2 + FFN * PATCH       # (HID, 32) per-patch group-mean matrix
S_SIGW = S_GMEAN + HID              # (HID, 32) signal projector (cols 0:L valid)
S_B1 = S_SIGW + HID
S_B2 = S_B1 + 1
S_TBIAS = S_B2 + 1
S_BVO = S_TBIAS + 1                 # NLAYERS rows
S_LN1G = S_BVO + NLAYERS
S_LN1B = S_LN1G + NLAYERS
S_BF2 = S_LN1B + NLAYERS
S_LN2G = S_BF2 + NLAYERS
S_LN2B = S_LN2G + NLAYERS
S_DB2 = S_LN2B + NLAYERS
S_POS = S_DB2 + 1
S_MTOK = S_POS + 1
S_SIGB = S_MTOK + 1
W32_ROWS = 1424
assert S_SIGB + 1 <= W32_ROWS and W32_ROWS % 8 == 0

DATA_ROWS = NL + N                  # 72: rows 0:64 = [Xp | m | 0], rows 64:72 = vis


# ------------------------------ kernel helpers --------------------------------
def _gelu(x):
    # TODO(synk): PyTorch nn.GELU default is exact erf-GELU; tanh approximation
    # used here (erf lowering not guaranteed in Mosaic; ~1e-3 deviation).
    c = math.sqrt(2.0 / math.pi)
    return 0.5 * x * (1.0 + jnp.tanh(c * (x + 0.044715 * x * x * x)))


# ------------------------------ fused gMAE kernel ------------------------------
def gmae_kernel(data_ref, w128_ref, w32_ref, out_ref):
    """TTCN -> (block-diag) 4-layer post-norm transformer encoder -> mask-token
    blend -> decoder MLP -> signal projection -> masked MSE loss, all for the
    N = B*D samples in one gridless invocation."""
    f32 = jnp.float32

    # ------------------------- unpack per-call data --------------------------
    x = data_ref[0:NL, 0:PF]                 # (64, 16) [value | time-embed | 0]
    m = data_ref[0:NL, PF:PF + 1]            # (64, 1)  observation mask
    vis = data_ref[NL:NL + N, :]             # (8, 32)  1.0 = visible patch lane

    # ----------------------- TTCN filter-generator MLP -----------------------
    w1 = w32_ref[S_W1:S_W1 + PF, :]
    b1 = w32_ref[S_B1:S_B1 + 1, :]
    w2 = w32_ref[S_W2:S_W2 + HID, :]
    b2 = w32_ref[S_B2:S_B2 + 1, :]
    h1 = jnp.maximum(jnp.dot(x, w1, preferred_element_type=f32) + b1, 0.0)
    h2 = jnp.maximum(jnp.dot(h1, w2, preferred_element_type=f32) + b2, 0.0)

    # X broadcast to 128 filter lanes via one tiny matmul on the idle MXU
    # (the repeat pattern is identical for every chunk).
    rep = w128_ref[R_REP:R_REP + PF, :]                          # (16, 128)
    x3 = jnp.dot(x, rep, preferred_element_type=f32).reshape(N, L, CH)
    neg = (1.0 - m) * (-1e8)                                     # (64, 1)

    # -------------- chunked masked-softmax TTCN contraction ------------------
    # Loop over FILT in 128-lane chunks; live set stays small (no vreg spills).
    def ttcn_chunk(c, acc):
        r3 = pl.multiple_of(R_W3 + c * HID, 8)
        rg = pl.multiple_of(S_GRP + c * CH, 8)
        w3c = w128_ref[pl.ds(r3, HID), :]                        # (32, 128)
        b3c = w128_ref[pl.ds(R_B3 + c, 1), :]                    # (1, 128)
        grpc = w32_ref[pl.ds(rg, CH), :]                         # (128, 32)

        filt = jnp.dot(h2, w3c, preferred_element_type=f32) + b3c      # (64, 128)
        fm3 = (filt * m + neg).reshape(N, L, CH)                 # (8, 8, 128)
        # exact per-sample softmax over time (fixes global-max fragility)
        mx = jnp.max(fm3, axis=1, keepdims=True)
        e3 = jnp.exp(fm3 - mx)
        den = jnp.sum(e3, axis=1)                                # (8, 128), >= 1
        num = jnp.sum(x3 * e3, axis=1)                           # (8, 128)
        avg = num * pl.reciprocal(den, approx=True)
        # contract 16-feature groups into the 8 hidden units owned by chunk c
        return acc + jnp.dot(avg, grpc, preferred_element_type=f32)

    ttcn = jax.lax.fori_loop(0, NCHUNK, ttcn_chunk, jnp.zeros((N, HID), f32))
    tb = w32_ref[S_TBIAS:S_TBIAS + 1, :]
    enc = jnp.maximum(ttcn + tb, 0.0)        # encoded_representation (8, 32)

    # ------------- transformer encoder (block-diag, post-norm) ---------------
    # Length-1 self-attention is pre-folded: out_proj(v_proj(x)) per patch.
    # Per-patch weights are block-diagonal so everything stays (N, HID).
    # Dropout layers are inference-mode identity (deterministic).
    gmean = w32_ref[S_GMEAN:S_GMEAN + HID, :]
    pos = w32_ref[S_POS:S_POS + 1, :]

    def _groupnorm(v, g, b, eps=1e-5):
        # per-patch LayerNorm over 8-lane groups via a constant group-mean matmul
        mu = jnp.dot(v, gmean, preferred_element_type=f32)
        vc = v - mu
        var = jnp.dot(vc * vc, gmean, preferred_element_type=f32)
        return vc * jax.lax.rsqrt(var + eps) * g + b

    xe = enc + pos
    for l in range(NLAYERS):
        wvo = w32_ref[S_WVO + l * HID:S_WVO + (l + 1) * HID, :]
        bvo = w32_ref[S_BVO + l:S_BVO + l + 1, :]
        sa = jnp.dot(xe, wvo, preferred_element_type=f32) + bvo
        xe = _groupnorm(xe + sa,
                        w32_ref[S_LN1G + l:S_LN1G + l + 1, :],
                        w32_ref[S_LN1B + l:S_LN1B + l + 1, :])
        wf1 = w128_ref[R_WF1 + l * HID:R_WF1 + (l + 1) * HID, :]
        bf1 = w128_ref[R_BF1 + l:R_BF1 + l + 1, :]
        hf = _gelu(jnp.dot(xe, wf1, preferred_element_type=f32) + bf1)   # (8, 128)
        wf2 = w32_ref[S_WF2 + l * FFN * PATCH:S_WF2 + (l + 1) * FFN * PATCH, :]
        bf2 = w32_ref[S_BF2 + l:S_BF2 + l + 1, :]
        ff = jnp.dot(hf, wf2, preferred_element_type=f32) + bf2
        xe = _groupnorm(xe + ff,
                        w32_ref[S_LN2G + l:S_LN2G + l + 1, :],
                        w32_ref[S_LN2B + l:S_LN2B + l + 1, :])

    # ------------------- mask-token blend + decoder MLP ----------------------
    mtok = w32_ref[S_MTOK:S_MTOK + 1, :]
    dec_in = vis * xe + (1.0 - vis) * mtok + pos
    dw1 = w128_ref[R_DW1:R_DW1 + HID, :]
    db1 = w128_ref[R_DB1:R_DB1 + 1, :]
    hd = _gelu(jnp.dot(dec_in, dw1, preferred_element_type=f32) + db1)   # (8, 128)
    dw2 = w32_ref[S_DW2:S_DW2 + FFN * PATCH, :]
    db2 = w32_ref[S_DB2:S_DB2 + 1, :]
    dec = jnp.dot(hd, dw2, preferred_element_type=f32) + db2             # (8, 32)

    # --------------------------- signal projection ---------------------------
    sw = w32_ref[S_SIGW:S_SIGW + HID, :]     # cols 0:L valid, rest zero
    sb = w32_ref[S_SIGB:S_SIGB + 1, :]
    sig = jnp.dot(dec, sw, preferred_element_type=f32) + sb              # (8, 32)

    # --------------- masked MSE loss (mean over masked elements) -------------
    dd = (dec - enc) * (1.0 - vis)
    ls = jnp.sum(jnp.sum(dd * dd, axis=1, keepdims=True), axis=0, keepdims=True)
    lossb = jnp.broadcast_to(ls * (1.0 / float(N * MASK_LEN * DM)), (N, HID))

    # single lane-dense (8, 128) output slab: enc | sig | loss | pad
    out_ref[...] = jnp.concatenate(
        [enc, sig, lossb, jnp.zeros((N, HID), f32)], axis=1)


# --------------------------- one-time weight packing ---------------------------
def _block_diag(w, n):
    a, b = w.shape
    out = np.zeros((n * a, n * b), np.float32)
    for p in range(n):
        out[p * a:(p + 1) * a, p * b:(p + 1) * b] = w
    return out


def prepare_params(p):
    """Fold / pad / block-diagonalize all static weights into two slabs (numpy,
    runs once at init -- zero per-call cost)."""
    f = lambda k: np.asarray(p[k], np.float32)

    # ---------- w128 slab ----------
    w128 = np.zeros((W128_ROWS, 128), np.float32)
    rep = np.zeros((PF, CH), np.float32)
    rep[np.arange(CH) % PF, np.arange(CH)] = 1.0
    w128[R_REP:R_REP + PF, :] = rep

    w3 = f("fg_w3").reshape(HID, HID, F_IN)              # out col k = h*F_IN + f
    w3p = np.zeros((HID, HID, PF), np.float32)
    w3p[:, :, :F_IN] = w3
    w3p = w3p.reshape(HID, FILT)
    b3 = f("fg_b3").reshape(HID, F_IN)
    b3p = np.zeros((HID, PF), np.float32)
    b3p[:, :F_IN] = b3
    b3p = b3p.reshape(1, FILT)
    for c in range(NCHUNK):
        w128[R_W3 + c * HID:R_W3 + (c + 1) * HID, :] = w3p[:, c * CH:(c + 1) * CH]
        w128[R_B3 + c, :] = b3p[0, c * CH:(c + 1) * CH]

    wf1 = f("enc_wf1"); bf1 = f("enc_bf1")
    for l in range(NLAYERS):
        w128[R_WF1 + l * HID:R_WF1 + (l + 1) * HID, :] = _block_diag(wf1[l], PATCH)
        w128[R_BF1 + l, :] = np.tile(bf1[l, 0], PATCH)
    w128[R_DW1:R_DW1 + HID, :] = _block_diag(f("dec_w1"), PATCH)
    w128[R_DB1, :] = np.tile(f("dec_b1")[0], PATCH)

    # ---------- w32 slab ----------
    w32 = np.zeros((W32_ROWS, HID), np.float32)
    w32[S_W1:S_W1 + F_IN, :] = f("fg_w1")                 # rows F_IN..PF stay zero
    w32[S_W2:S_W2 + HID, :] = f("fg_w2")
    kk = np.arange(FILT)
    w32[S_GRP:S_GRP + FILT, :] = (
        kk[:, None] // PF == np.arange(HID)[None, :]).astype(np.float32)

    wv, wo, bv, bo = f("enc_wv"), f("enc_wo"), f("enc_bv"), f("enc_bo")
    for l in range(NLAYERS):
        # length-1 attention fold: out_proj(v_proj(x)) = x @ (Wv Wo) + (bv Wo + bo)
        wvo = wv[l] @ wo[l]
        bvo = bv[l] @ wo[l] + bo[l]
        w32[S_WVO + l * HID:S_WVO + (l + 1) * HID, :] = _block_diag(wvo, PATCH)
        w32[S_BVO + l, :] = np.tile(bvo[0], PATCH)
        w32[S_LN1G + l, :] = np.tile(f("ln1_g")[l, 0], PATCH)
        w32[S_LN1B + l, :] = np.tile(f("ln1_b")[l, 0], PATCH)
        w32[S_LN2G + l, :] = np.tile(f("ln2_g")[l, 0], PATCH)
        w32[S_LN2B + l, :] = np.tile(f("ln2_b")[l, 0], PATCH)

    wf2, bf2 = f("enc_wf2"), f("enc_bf2")
    for l in range(NLAYERS):
        w32[S_WF2 + l * FFN * PATCH:S_WF2 + (l + 1) * FFN * PATCH, :] = \
            _block_diag(wf2[l], PATCH)
        w32[S_BF2 + l, :] = np.tile(bf2[l, 0], PATCH)

    w32[S_DW2:S_DW2 + FFN * PATCH, :] = _block_diag(f("dec_w2"), PATCH)
    w32[S_DB2, :] = np.tile(f("dec_b2")[0], PATCH)
    w32[S_GMEAN:S_GMEAN + HID, :] = _block_diag(
        np.full((DM, DM), 1.0 / DM, np.float32), PATCH)
    w32[S_SIGW:S_SIGW + HID, :L] = f("sig_w")
    w32[S_SIGB, :L] = f("sig_b")[0]
    w32[S_B1, :] = f("fg_b1")[0]
    w32[S_B2, :] = f("fg_b2")[0]
    w32[S_TBIAS, :] = f("t_bias")[0]
    w32[S_POS, :] = f("pos_embed").reshape(-1)
    w32[S_MTOK, :] = np.tile(f("mask_token")[0], PATCH)

    return {"w128": jnp.asarray(w128), "w32": jnp.asarray(w32),
            "te_scale_w": p["te_scale_w"], "te_scale_b": p["te_scale_b"],
            "te_per_w": p["te_per_w"], "te_per_b": p["te_per_b"]}


# ------------------------------ full forward (glue) ----------------------------
@jax.jit
def gmae_forward(prepared, value, truth_time_steps, mask, mask_key):
    """value: (B, L, D); truth_time_steps: (B, L); mask: (B, L, D)."""
    f32 = jnp.float32
    # sample-major layout exactly as the reference forward
    X = jnp.transpose(value, (0, 2, 1)).reshape(NL, 1)
    tt = jnp.broadcast_to(truth_time_steps[:, None, :], (B, D, L)).reshape(NL, 1)
    m = jnp.transpose(mask, (0, 2, 1)).reshape(NL, 1).astype(f32)

    # LearnableTE kept as tiny wrapper glue (sin not moved in-kernel).
    out1 = tt * prepared["te_scale_w"] + prepared["te_scale_b"]
    out2 = jnp.sin(tt * prepared["te_per_w"][None, :] + prepared["te_per_b"][None, :])
    xp = jnp.concatenate([X, out1, out2, jnp.zeros((NL, PF - F_IN), f32)], axis=-1)

    # random MAE masking (deterministic replacement for torch.rand().argsort();
    # the MASK_LEN smallest noise values are masked, as in the reference).
    rand = jax.random.uniform(mask_key, (N, PATCH))
    rank = jnp.argsort(jnp.argsort(rand, axis=1), axis=1)
    vis = (rank >= MASK_LEN).astype(f32)                       # (N, PATCH)
    vis_wide = jnp.repeat(vis, DM, axis=1)                     # (N, HID)

    # single packed per-call data slab (one input DMA)
    top = jnp.concatenate([xp, m, jnp.zeros((NL, HID - PF - 1), f32)], axis=1)
    data = jnp.concatenate([top, vis_wide], axis=0)            # (72, 32)

    vmem = pl.BlockSpec(memory_space=pltpu.MemorySpace.VMEM)
    out = pl.pallas_call(
        gmae_kernel,
        out_shape=jax.ShapeDtypeStruct((N, 4 * HID), jnp.float32),
        in_specs=[vmem, vmem, vmem],
        out_specs=vmem,
    )(data, prepared["w128"], prepared["w32"])

    enc = out[:, 0:HID]
    sig = out[:, HID:HID + L]
    loss = out[0, 2 * HID]
    return {"loss": loss,
            "reconstructed_signal": sig.reshape(B, D, L).transpose(0, 2, 1),
            "encoded_representation": enc.reshape(B, D, HID)}


# ------------------------------- parameter init --------------------------------
def init_params(key):
    keys = jax.random.split(key, 40)
    it = iter(keys)

    def nrm(shape, scale=0.1):
        return (scale * jax.random.normal(next(it), shape)).astype(jnp.float32)

    p = {}
    # time embedding (te_scale: Linear(1,1); te_periodic: Linear(1, te_dim-1))
    p["te_scale_w"] = nrm(())
    p["te_scale_b"] = nrm(())
    p["te_per_w"] = nrm((TE - 1,))
    p["te_per_b"] = nrm((TE - 1,))
    # Filter_Generators: Linear(F_IN,HID)->ReLU->Linear(HID,HID)->ReLU
    #                    ->Linear(HID, F_IN*HID); weights stored (in, out);
    #                    last-layer output column index k = h*F_IN + f.
    p["fg_w1"] = nrm((F_IN, HID))
    p["fg_b1"] = nrm((1, HID))
    p["fg_w2"] = nrm((HID, HID))
    p["fg_b2"] = nrm((1, HID))
    p["fg_w3"] = nrm((HID, F_IN * HID))
    p["fg_b3"] = nrm((1, F_IN * HID))
    p["t_bias"] = nrm((1, HID), 1.0)                      # torch.randn(1, ttcn_dim)
    # transformer encoder (length-1 seq path only needs V / out_proj + LN + FFN)
    p["enc_wv"] = nrm((NLAYERS, DM, DM))
    p["enc_bv"] = nrm((NLAYERS, 1, DM))
    p["enc_wo"] = nrm((NLAYERS, DM, DM))
    p["enc_bo"] = nrm((NLAYERS, 1, DM))
    p["ln1_g"] = jnp.ones((NLAYERS, 1, DM), jnp.float32)
    p["ln1_b"] = jnp.zeros((NLAYERS, 1, DM), jnp.float32)
    p["enc_wf1"] = nrm((NLAYERS, DM, FFN))
    p["enc_bf1"] = nrm((NLAYERS, 1, FFN))
    p["enc_wf2"] = nrm((NLAYERS, FFN, DM))
    p["enc_bf2"] = nrm((NLAYERS, 1, DM))
    p["ln2_g"] = jnp.ones((NLAYERS, 1, DM), jnp.float32)
    p["ln2_b"] = jnp.zeros((NLAYERS, 1, DM), jnp.float32)
    # MAE tokens
    p["pos_embed"] = nrm((PATCH, DM), 0.02)
    p["mask_token"] = nrm((1, DM), 0.02)
    # decoder MLP
    p["dec_w1"] = nrm((DM, FFN))
    p["dec_b1"] = nrm((1, FFN))
    p["dec_w2"] = nrm((FFN, DM))
    p["dec_b2"] = nrm((1, DM))
    # TODO(synk): reference re-creates nn.Linear(hid_dim, L) with fresh random
    # weights every forward call; modelled here as a fixed parameter.
    p["sig_w"] = nrm((HID, L))
    p["sig_b"] = nrm((1, L))
    return p


# ------------------------------------- main ------------------------------------
if __name__ == "__main__":
    key = jax.random.PRNGKey(0)
    k_val, k_time, k_mask, k_param, k_maemask = jax.random.split(key, 5)

    value = jax.random.normal(k_val, (B, L, D), dtype=jnp.float32)
    truth_time_steps = jnp.sort(jax.random.uniform(k_time, (B, L)), axis=1).astype(jnp.float32)
    mask = (jax.random.uniform(k_mask, (B, L, D)) < 0.8).astype(jnp.float32)

    params = init_params(k_param)
    prepared = prepare_params(params)       # one-time weight packing (numpy)

    out = gmae_forward(prepared, value, truth_time_steps, mask, k_maemask)
    jax.block_until_ready(out)

    assert out["loss"].shape == ()
    assert bool(jnp.isfinite(out["loss"]))
    assert out["reconstructed_signal"].shape == (B, L, D)
    assert out["encoded_representation"].shape == (B, D, HID)
    assert bool(jnp.all(jnp.isfinite(out["reconstructed_signal"])))
    assert bool(jnp.all(jnp.isfinite(out["encoded_representation"])))
    print("KERNEL_OK")
</pallas_src>

<mosaic_0001>
module attributes {stable_mosaic.version = 11 : i64} {
  func.func @gmae_kernel(%arg0: memref<72x32xf32, #tpu.memory_space<vmem>>, %arg1: memref<320x128xf32, #tpu.memory_space<vmem>>, %arg2: memref<1424x32xf32, #tpu.memory_space<vmem>>, %arg3: memref<8x128xf32, #tpu.memory_space<vmem>>) attributes {dimension_semantics = [], scalar_prefetch = 0 : i64, scratch_operands = 0 : i64, tpu.core_type = #tpu.core_type<tc>} {
    %c0 = arith.constant 0 : index
    %c0_0 = arith.constant 0 : index
    %0 = vector.load %arg0[%c0, %c0_0] : memref<72x32xf32, #tpu.memory_space<vmem>>, vector<64x16xf32>
    %c0_1 = arith.constant 0 : index
    %c16 = arith.constant 16 : index
    %1 = vector.load %arg0[%c0_1, %c16] : memref<72x32xf32, #tpu.memory_space<vmem>>, vector<64x1xf32>
    %c64 = arith.constant 64 : index
    %c0_2 = arith.constant 0 : index
    %2 = vector.load %arg0[%c64, %c0_2] : memref<72x32xf32, #tpu.memory_space<vmem>>, vector<8x32xf32>
    %c0_3 = arith.constant 0 : index
    %c0_4 = arith.constant 0 : index
    %3 = vector.load %arg2[%c0_3, %c0_4] : memref<1424x32xf32, #tpu.memory_space<vmem>>, vector<16x32xf32>
    %c1392 = arith.constant 1392 : index
    %c0_5 = arith.constant 0 : index
    %4 = vector.load %arg2[%c1392, %c0_5] : memref<1424x32xf32, #tpu.memory_space<vmem>>, vector<1x32xf32>
    %c16_6 = arith.constant 16 : index
    %c0_7 = arith.constant 0 : index
    %5 = vector.load %arg2[%c16_6, %c0_7] : memref<1424x32xf32, #tpu.memory_space<vmem>>, vector<32x32xf32>
    %c1393 = arith.constant 1393 : index
    %c0_8 = arith.constant 0 : index
    %6 = vector.load %arg2[%c1393, %c0_8] : memref<1424x32xf32, #tpu.memory_space<vmem>>, vector<1x32xf32>
    %cst = arith.constant dense<0.000000e+00> : vector<64x32xf32>
    %7 = tpu.matmul %0, %3, %cst {dimension_numbers = #tpu.dot_dimension_numbers<[1], [0], [0], [1], [0, 0, 1, 1], [], []>} : vector<64x16xf32>, vector<16x32xf32>, vector<64x32xf32> -> vector<64x32xf32>
    %8 = vector.broadcast %4 : vector<1x32xf32> to vector<64x32xf32>
    %9 = arith.addf %7, %8 : vector<64x32xf32>
    %cst_9 = arith.constant 0.000000e+00 : f32
    %10 = vector.broadcast %cst_9 : f32 to vector<64x32xf32>
    %11 = arith.maximumf %9, %10 : vector<64x32xf32>
    %cst_10 = arith.constant dense<0.000000e+00> : vector<64x32xf32>
    %12 = tpu.matmul %11, %5, %cst_10 {dimension_numbers = #tpu.dot_dimension_numbers<[1], [0], [0], [1], [0, 0, 1, 1], [], []>} : vector<64x32xf32>, vector<32x32xf32>, vector<64x32xf32> -> vector<64x32xf32>
    %13 = vector.broadcast %6 : vector<1x32xf32> to vector<64x32xf32>
    %14 = arith.addf %12, %13 : vector<64x32xf32>
    %cst_11 = arith.constant 0.000000e+00 : f32
    %15 = vector.broadcast %cst_11 : f32 to vector<64x32xf32>
    %16 = arith.maximumf %14, %15 : vector<64x32xf32>
    %c0_12 = arith.constant 0 : index
    %c0_13 = arith.constant 0 : index
    %17 = vector.load %arg1[%c0_12, %c0_13] : memref<320x128xf32, #tpu.memory_space<vmem>>, vector<16x128xf32>
    %cst_14 = arith.constant dense<0.000000e+00> : vector<64x128xf32>
    %18 = tpu.matmul %0, %17, %cst_14 {dimension_numbers = #tpu.dot_dimension_numbers<[1], [0], [0], [1], [0, 0, 1, 1], [], []>} : vector<64x16xf32>, vector<16x128xf32>, vector<64x128xf32> -> vector<64x128xf32>
    %19 = vector.shape_cast %18 : vector<64x128xf32> to vector<8x8x128xf32>
    %cst_15 = arith.constant 1.000000e+00 : f32
    %20 = vector.broadcast %cst_15 : f32 to vector<64x1xf32>
    %21 = arith.subf %20, %1 : vector<64x1xf32>
    %cst_16 = arith.constant -1.000000e+08 : f32
    %22 = vector.broadcast %cst_16 : f32 to vector<64x1xf32>
    %23 = arith.mulf %21, %22 : vector<64x1xf32>
    %cst_17 = arith.constant 0.000000e+00 : f32
    %24 = vector.broadcast %cst_17 : f32 to vector<8x32xf32>
    %c0_i32 = arith.constant 0 : i32
    %c4_i32 = arith.constant 4 : i32
    %25 = arith.addi %c0_i32, %c4_i32 : i32
    %c1_i32 = arith.constant 1 : i32
    %26 = scf.for %arg4 = %c0_i32 to %25 step %c1_i32 iter_args(%arg5 = %24) -> (vector<8x32xf32>)  : i32 {
      %c32_i32 = arith.constant 32 : i32
      %321 = arith.muli %arg4, %c32_i32 : i32
      %c16_i32 = arith.constant 16 : i32
      %322 = arith.addi %c16_i32, %321 : i32
      %323 = tpu.assume_multiple %322, 8 : i32
      %c128_i32 = arith.constant 128 : i32
      %324 = arith.muli %arg4, %c128_i32 : i32
      %c48_i32 = arith.constant 48 : i32
      %325 = arith.addi %c48_i32, %324 : i32
      %326 = tpu.assume_multiple %325, 8 : i32
      %327 = arith.index_cast %323 : i32 to index
      %c0_137 = arith.constant 0 : index
      %328 = vector.load %arg1[%327, %c0_137] : memref<320x128xf32, #tpu.memory_space<vmem>>, vector<32x128xf32>
      %c144_i32 = arith.constant 144 : i32
      %329 = arith.addi %c144_i32, %arg4 : i32
      %330 = arith.index_cast %329 : i32 to index
      %c0_138 = arith.constant 0 : index
      %331 = vector.load %arg1[%330, %c0_138] : memref<320x128xf32, #tpu.memory_space<vmem>>, vector<1x128xf32>
      %332 = arith.index_cast %326 : i32 to index
      %c0_139 = arith.constant 0 : index
      %333 = vector.load %arg2[%332, %c0_139] : memref<1424x32xf32, #tpu.memory_space<vmem>>, vector<128x32xf32>
      %cst_140 = arith.constant dense<0.000000e+00> : vector<64x128xf32>
      %334 = tpu.matmul %16, %328, %cst_140 {dimension_numbers = #tpu.dot_dimension_numbers<[1], [0], [0], [1], [0, 0, 1, 1], [], []>} : vector<64x32xf32>, vector<32x128xf32>, vector<64x128xf32> -> vector<64x128xf32>
      %335 = vector.broadcast %331 : vector<1x128xf32> to vector<64x128xf32>
      %336 = arith.addf %334, %335 : vector<64x128xf32>
      %337 = vector.broadcast %1 : vector<64x1xf32> to vector<64x128xf32>
      %338 = arith.mulf %336, %337 : vector<64x128xf32>
      %339 = vector.broadcast %23 : vector<64x1xf32> to vector<64x128xf32>
      %340 = arith.addf %338, %339 : vector<64x128xf32>
      %341 = vector.shape_cast %340 : vector<64x128xf32> to vector<8x8x128xf32>
      %cst_141 = arith.constant dense<0xFF800000> : vector<8x128xf32>
      %342 = vector.multi_reduction <maximumf>, %341, %cst_141 [1] : vector<8x8x128xf32> to vector<8x128xf32>
      %343 = vector.shape_cast %342 : vector<8x128xf32> to vector<8x1x128xf32>
      %344 = vector.broadcast %343 : vector<8x1x128xf32> to vector<8x8x128xf32>
      %345 = arith.subf %341, %344 : vector<8x8x128xf32>
      %346 = math.exp %345 : vector<8x8x128xf32>
      %cst_142 = arith.constant dense<0.000000e+00> : vector<8x128xf32>
      %347 = vector.multi_reduction <add>, %346, %cst_142 [1] : vector<8x8x128xf32> to vector<8x128xf32>
      %348 = arith.mulf %19, %346 : vector<8x8x128xf32>
      %cst_143 = arith.constant dense<0.000000e+00> : vector<8x128xf32>
      %349 = vector.multi_reduction <add>, %348, %cst_143 [1] : vector<8x8x128xf32> to vector<8x128xf32>
      %350 = tpu.reciprocal %347 {approx = true} : vector<8x128xf32> -> vector<8x128xf32>
      %351 = arith.mulf %349, %350 : vector<8x128xf32>
      %cst_144 = arith.constant dense<0.000000e+00> : vector<8x32xf32>
      %352 = tpu.matmul %351, %333, %cst_144 {dimension_numbers = #tpu.dot_dimension_numbers<[1], [0], [0], [1], [0, 0, 1, 1], [], []>} : vector<8x128xf32>, vector<128x32xf32>, vector<8x32xf32> -> vector<8x32xf32>
      %353 = arith.addf %arg5, %352 : vector<8x32xf32>
      scf.yield %353 : vector<8x32xf32>
    }
    %c4_i32_18 = arith.constant 4 : i32
    %c1394 = arith.constant 1394 : index
    %c0_19 = arith.constant 0 : index
    %27 = vector.load %arg2[%c1394, %c0_19] : memref<1424x32xf32, #tpu.memory_space<vmem>>, vector<1x32xf32>
    %28 = vector.broadcast %27 : vector<1x32xf32> to vector<8x32xf32>
    %29 = arith.addf %26, %28 : vector<8x32xf32>
    %cst_20 = arith.constant 0.000000e+00 : f32
    %30 = vector.broadcast %cst_20 : f32 to vector<8x32xf32>
    %31 = arith.maximumf %29, %30 : vector<8x32xf32>
    %c1328 = arith.constant 1328 : index
    %c0_21 = arith.constant 0 : index
    %32 = vector.load %arg2[%c1328, %c0_21] : memref<1424x32xf32, #tpu.memory_space<vmem>>, vector<32x32xf32>
    %c1420 = arith.constant 1420 : index
    %c0_22 = arith.constant 0 : index
    %33 = vector.load %arg2[%c1420, %c0_22] : memref<1424x32xf32, #tpu.memory_space<vmem>>, vector<1x32xf32>
    %34 = vector.broadcast %33 : vector<1x32xf32> to vector<8x32xf32>
    %35 = arith.addf %31, %34 : vector<8x32xf32>
    %c560 = arith.constant 560 : index
    %c0_23 = arith.constant 0 : index
    %36 = vector.load %arg2[%c560, %c0_23] : memref<1424x32xf32, #tpu.memory_space<vmem>>, vector<32x32xf32>
    %c1395 = arith.constant 1395 : index
    %c0_24 = arith.constant 0 : index
    %37 = vector.load %arg2[%c1395, %c0_24] : memref<1424x32xf32, #tpu.memory_space<vmem>>, vector<1x32xf32>
    %cst_25 = arith.constant dense<0.000000e+00> : vector<8x32xf32>
    %38 = tpu.matmul %35, %36, %cst_25 {dimension_numbers = #tpu.dot_dimension_numbers<[1], [0], [0], [1], [0, 0, 1, 1], [], []>} : vector<8x32xf32>, vector<32x32xf32>, vector<8x32xf32> -> vector<8x32xf32>
    %39 = vector.broadcast %37 : vector<1x32xf32> to vector<8x32xf32>
    %40 = arith.addf %38, %39 : vector<8x32xf32>
    %41 = arith.addf %35, %40 : vector<8x32xf32>
    %c1399 = arith.constant 1399 : index
    %c0_26 = arith.constant 0 : index
    %42 = vector.load %arg2[%c1399, %c0_26] : memref<1424x32xf32, #tpu.memory_space<vmem>>, vector<1x32xf32>
    %c1403 = arith.constant 1403 : index
    %c0_27 = arith.constant 0 : index
    %43 = vector.load %arg2[%c1403, %c0_27] : memref<1424x32xf32, #tpu.memory_space<vmem>>, vector<1x32xf32>
    %cst_28 = arith.constant dense<0.000000e+00> : vector<8x32xf32>
    %44 = tpu.matmul %41, %32, %cst_28 {dimension_numbers = #tpu.dot_dimension_numbers<[1], [0], [0], [1], [0, 0, 1, 1], [], []>} : vector<8x32xf32>, vector<32x32xf32>, vector<8x32xf32> -> vector<8x32xf32>
    %45 = arith.subf %41, %44 : vector<8x32xf32>
    %46 = arith.mulf %45, %45 : vector<8x32xf32>
    %cst_29 = arith.constant dense<0.000000e+00> : vector<8x32xf32>
    %47 = tpu.matmul %46, %32, %cst_29 {dimension_numbers = #tpu.dot_dimension_numbers<[1], [0], [0], [1], [0, 0, 1, 1], [], []>} : vector<8x32xf32>, vector<32x32xf32>, vector<8x32xf32> -> vector<8x32xf32>
    %cst_30 = arith.constant 9.99999974E-6 : f32
    %48 = vector.broadcast %cst_30 : f32 to vector<8x32xf32>
    %49 = arith.addf %47, %48 : vector<8x32xf32>
    %50 = math.rsqrt %49 : vector<8x32xf32>
    %51 = arith.mulf %45, %50 : vector<8x32xf32>
    %52 = vector.broadcast %42 : vector<1x32xf32> to vector<8x32xf32>
    %53 = arith.mulf %51, %52 : vector<8x32xf32>
    %54 = vector.broadcast %43 : vector<1x32xf32> to vector<8x32xf32>
    %55 = arith.addf %53, %54 : vector<8x32xf32>
    %c148 = arith.constant 148 : index
    %c0_31 = arith.constant 0 : index
    %56 = vector.load %arg1[%c148, %c0_31] : memref<320x128xf32, #tpu.memory_space<vmem>>, vector<32x128xf32>
    %c276 = arith.constant 276 : index
    %c0_32 = arith.constant 0 : index
    %57 = vector.load %arg1[%c276, %c0_32] : memref<320x128xf32, #tpu.memory_space<vmem>>, vector<1x128xf32>
    %cst_33 = arith.constant dense<0.000000e+00> : vector<8x128xf32>
    %58 = tpu.matmul %55, %56, %cst_33 {dimension_numbers = #tpu.dot_dimension_numbers<[1], [0], [0], [1], [0, 0, 1, 1], [], []>} : vector<8x32xf32>, vector<32x128xf32>, vector<8x128xf32> -> vector<8x128xf32>
    %59 = vector.broadcast %57 : vector<1x128xf32> to vector<8x128xf32>
    %60 = arith.addf %58, %59 : vector<8x128xf32>
    %cst_34 = arith.constant 5.000000e-01 : f32
    %61 = vector.broadcast %cst_34 : f32 to vector<8x128xf32>
    %62 = arith.mulf %61, %60 : vector<8x128xf32>
    %cst_35 = arith.constant 4.471500e-02 : f32
    %63 = vector.broadcast %cst_35 : f32 to vector<8x128xf32>
    %64 = arith.mulf %63, %60 : vector<8x128xf32>
    %65 = arith.mulf %64, %60 : vector<8x128xf32>
    %66 = arith.mulf %65, %60 : vector<8x128xf32>
    %67 = arith.addf %60, %66 : vector<8x128xf32>
    %cst_36 = arith.constant 0.797884583 : f32
    %68 = vector.broadcast %cst_36 : f32 to vector<8x128xf32>
    %69 = arith.mulf %68, %67 : vector<8x128xf32>
    %70 = math.tanh %69 : vector<8x128xf32>
    %cst_37 = arith.constant 1.000000e+00 : f32
    %71 = vector.broadcast %cst_37 : f32 to vector<8x128xf32>
    %72 = arith.addf %71, %70 : vector<8x128xf32>
    %73 = arith.mulf %62, %72 : vector<8x128xf32>
    %c688 = arith.constant 688 : index
    %c0_38 = arith.constant 0 : index
    %74 = vector.load %arg2[%c688, %c0_38] : memref<1424x32xf32, #tpu.memory_space<vmem>>, vector<128x32xf32>
    %c1407 = arith.constant 1407 : index
    %c0_39 = arith.constant 0 : index
    %75 = vector.load %arg2[%c1407, %c0_39] : memref<1424x32xf32, #tpu.memory_space<vmem>>, vector<1x32xf32>
    %cst_40 = arith.constant dense<0.000000e+00> : vector<8x32xf32>
    %76 = tpu.matmul %73, %74, %cst_40 {dimension_numbers = #tpu.dot_dimension_numbers<[1], [0], [0], [1], [0, 0, 1, 1], [], []>} : vector<8x128xf32>, vector<128x32xf32>, vector<8x32xf32> -> vector<8x32xf32>
    %77 = vector.broadcast %75 : vector<1x32xf32> to vector<8x32xf32>
    %78 = arith.addf %76, %77 : vector<8x32xf32>
    %79 = arith.addf %55, %78 : vector<8x32xf32>
    %c1411 = arith.constant 1411 : index
    %c0_41 = arith.constant 0 : index
    %80 = vector.load %arg2[%c1411, %c0_41] : memref<1424x32xf32, #tpu.memory_space<vmem>>, vector<1x32xf32>
    %c1415 = arith.constant 1415 : index
    %c0_42 = arith.constant 0 : index
    %81 = vector.load %arg2[%c1415, %c0_42] : memref<1424x32xf32, #tpu.memory_space<vmem>>, vector<1x32xf32>
    %cst_43 = arith.constant dense<0.000000e+00> : vector<8x32xf32>
    %82 = tpu.matmul %79, %32, %cst_43 {dimension_numbers = #tpu.dot_dimension_numbers<[1], [0], [0], [1], [0, 0, 1, 1], [], []>} : vector<8x32xf32>, vector<32x32xf32>, vector<8x32xf32> -> vector<8x32xf32>
    %83 = arith.subf %79, %82 : vector<8x32xf32>
    %84 = arith.mulf %83, %83 : vector<8x32xf32>
    %cst_44 = arith.constant dense<0.000000e+00> : vector<8x32xf32>
    %85 = tpu.matmul %84, %32, %cst_44 {dimension_numbers = #tpu.dot_dimension_numbers<[1], [0], [0], [1], [0, 0, 1, 1], [], []>} : vector<8x32xf32>, vector<32x32xf32>, vector<8x32xf32> -> vector<8x32xf32>
    %cst_45 = arith.constant 9.99999974E-6 : f32
    %86 = vector.broadcast %cst_45 : f32 to vector<8x32xf32>
    %87 = arith.addf %85, %86 : vector<8x32xf32>
    %88 = math.rsqrt %87 : vector<8x32xf32>
    %89 = arith.mulf %83, %88 : vector<8x32xf32>
    %90 = vector.broadcast %80 : vector<1x32xf32> to vector<8x32xf32>
    %91 = arith.mulf %89, %90 : vector<8x32xf32>
    %92 = vector.broadcast %81 : vector<1x32xf32> to vector<8x32xf32>
    %93 = arith.addf %91, %92 : vector<8x32xf32>
    %c592 = arith.constant 592 : index
    %c0_46 = arith.constant 0 : index
    %94 = vector.load %arg2[%c592, %c0_46] : memref<1424x32xf32, #tpu.memory_space<vmem>>, vector<32x32xf32>
    %c1396 = arith.constant 1396 : index
    %c0_47 = arith.constant 0 : index
    %95 = vector.load %arg2[%c1396, %c0_47] : memref<1424x32xf32, #tpu.memory_space<vmem>>, vector<1x32xf32>
    %cst_48 = arith.constant dense<0.000000e+00> : vector<8x32xf32>
    %96 = tpu.matmul %93, %94, %cst_48 {dimension_numbers = #tpu.dot_dimension_numbers<[1], [0], [0], [1], [0, 0, 1, 1], [], []>} : vector<8x32xf32>, vector<32x32xf32>, vector<8x32xf32> -> vector<8x32xf32>
    %97 = vector.broadcast %95 : vector<1x32xf32> to vector<8x32xf32>
    %98 = arith.addf %96, %97 : vector<8x32xf32>
    %99 = arith.addf %93, %98 : vector<8x32xf32>
    %c1400 = arith.constant 1400 : index
    %c0_49 = arith.constant 0 : index
    %100 = vector.load %arg2[%c1400, %c0_49] : memref<1424x32xf32, #tpu.memory_space<vmem>>, vector<1x32xf32>
    %c1404 = arith.constant 1404 : index
    %c0_50 = arith.constant 0 : index
    %101 = vector.load %arg2[%c1404, %c0_50] : memref<1424x32xf32, #tpu.memory_space<vmem>>, vector<1x32xf32>
    %cst_51 = arith.constant dense<0.000000e+00> : vector<8x32xf32>
    %102 = tpu.matmul %99, %32, %cst_51 {dimension_numbers = #tpu.dot_dimension_numbers<[1], [0], [0], [1], [0, 0, 1, 1], [], []>} : vector<8x32xf32>, vector<32x32xf32>, vector<8x32xf32> -> vector<8x32xf32>
    %103 = arith.subf %99, %102 : vector<8x32xf32>
    %104 = arith.mulf %103, %103 : vector<8x32xf32>
    %cst_52 = arith.constant dense<0.000000e+00> : vector<8x32xf32>
    %105 = tpu.matmul %104, %32, %cst_52 {dimension_numbers = #tpu.dot_dimension_numbers<[1], [0], [0], [1], [0, 0, 1, 1], [], []>} : vector<8x32xf32>, vector<32x32xf32>, vector<8x32xf32> -> vector<8x32xf32>
    %cst_53 = arith.constant 9.99999974E-6 : f32
    %106 = vector.broadcast %cst_53 : f32 to vector<8x32xf32>
    %107 = arith.addf %105, %106 : vector<8x32xf32>
    %108 = math.rsqrt %107 : vector<8x32xf32>
    %109 = arith.mulf %103, %108 : vector<8x32xf32>
    %110 = vector.broadcast %100 : vector<1x32xf32> to vector<8x32xf32>
    %111 = arith.mulf %109, %110 : vector<8x32xf32>
    %112 = vector.broadcast %101 : vector<1x32xf32> to vector<8x32xf32>
    %113 = arith.addf %111, %112 : vector<8x32xf32>
    %c180 = arith.constant 180 : index
    %c0_54 = arith.constant 0 : index
    %114 = vector.load %arg1[%c180, %c0_54] : memref<320x128xf32, #tpu.memory_space<vmem>>, vector<32x128xf32>
    %c277 = arith.constant 277 : index
    %c0_55 = arith.constant 0 : index
    %115 = vector.load %arg1[%c277, %c0_55] : memref<320x128xf32, #tpu.memory_space<vmem>>, vector<1x128xf32>
    %cst_56 = arith.constant dense<0.000000e+00> : vector<8x128xf32>
    %116 = tpu.matmul %113, %114, %cst_56 {dimension_numbers = #tpu.dot_dimension_numbers<[1], [0], [0], [1], [0, 0, 1, 1], [], []>} : vector<8x32xf32>, vector<32x128xf32>, vector<8x128xf32> -> vector<8x128xf32>
    %117 = vector.broadcast %115 : vector<1x128xf32> to vector<8x128xf32>
    %118 = arith.addf %116, %117 : vector<8x128xf32>
    %cst_57 = arith.constant 5.000000e-01 : f32
    %119 = vector.broadcast %cst_57 : f32 to vector<8x128xf32>
    %120 = arith.mulf %119, %118 : vector<8x128xf32>
    %cst_58 = arith.constant 4.471500e-02 : f32
    %121 = vector.broadcast %cst_58 : f32 to vector<8x128xf32>
    %122 = arith.mulf %121, %118 : vector<8x128xf32>
    %123 = arith.mulf %122, %118 : vector<8x128xf32>
    %124 = arith.mulf %123, %118 : vector<8x128xf32>
    %125 = arith.addf %118, %124 : vector<8x128xf32>
    %cst_59 = arith.constant 0.797884583 : f32
    %126 = vector.broadcast %cst_59 : f32 to vector<8x128xf32>
    %127 = arith.mulf %126, %125 : vector<8x128xf32>
    %128 = math.tanh %127 : vector<8x128xf32>
    %cst_60 = arith.constant 1.000000e+00 : f32
    %129 = vector.broadcast %cst_60 : f32 to vector<8x128xf32>
    %130 = arith.addf %129, %128 : vector<8x128xf32>
    %131 = arith.mulf %120, %130 : vector<8x128xf32>
    %c816 = arith.constant 816 : index
    %c0_61 = arith.constant 0 : index
    %132 = vector.load %arg2[%c816, %c0_61] : memref<1424x32xf32, #tpu.memory_space<vmem>>, vector<128x32xf32>
    %c1408 = arith.constant 1408 : index
    %c0_62 = arith.constant 0 : index
    %133 = vector.load %arg2[%c1408, %c0_62] : memref<1424x32xf32, #tpu.memory_space<vmem>>, vector<1x32xf32>
    %cst_63 = arith.constant dense<0.000000e+00> : vector<8x32xf32>
    %134 = tpu.matmul %131, %132, %cst_63 {dimension_numbers = #tpu.dot_dimension_numbers<[1], [0], [0], [1], [0, 0, 1, 1], [], []>} : vector<8x128xf32>, vector<128x32xf32>, vector<8x32xf32> -> vector<8x32xf32>
    %135 = vector.broadcast %133 : vector<1x32xf32> to vector<8x32xf32>
    %136 = arith.addf %134, %135 : vector<8x32xf32>
    %137 = arith.addf %113, %136 : vector<8x32xf32>
    %c1412 = arith.constant 1412 : index
    %c0_64 = arith.constant 0 : index
    %138 = vector.load %arg2[%c1412, %c0_64] : memref<1424x32xf32, #tpu.memory_space<vmem>>, vector<1x32xf32>
    %c1416 = arith.constant 1416 : index
    %c0_65 = arith.constant 0 : index
    %139 = vector.load %arg2[%c1416, %c0_65] : memref<1424x32xf32, #tpu.memory_space<vmem>>, vector<1x32xf32>
    %cst_66 = arith.constant dense<0.000000e+00> : vector<8x32xf32>
    %140 = tpu.matmul %137, %32, %cst_66 {dimension_numbers = #tpu.dot_dimension_numbers<[1], [0], [0], [1], [0, 0, 1, 1], [], []>} : vector<8x32xf32>, vector<32x32xf32>, vector<8x32xf32> -> vector<8x32xf32>
    %141 = arith.subf %137, %140 : vector<8x32xf32>
    %142 = arith.mulf %141, %141 : vector<8x32xf32>
    %cst_67 = arith.constant dense<0.000000e+00> : vector<8x32xf32>
    %143 = tpu.matmul %142, %32, %cst_67 {dimension_numbers = #tpu.dot_dimension_numbers<[1], [0], [0], [1], [0, 0, 1, 1], [], []>} : vector<8x32xf32>, vector<32x32xf32>, vector<8x32xf32> -> vector<8x32xf32>
    %cst_68 = arith.constant 9.99999974E-6 : f32
    %144 = vector.broadcast %cst_68 : f32 to vector<8x32xf32>
    %145 = arith.addf %143, %144 : vector<8x32xf32>
    %146 = math.rsqrt %145 : vector<8x32xf32>
    %147 = arith.mulf %141, %146 : vector<8x32xf32>
    %148 = vector.broadcast %138 : vector<1x32xf32> to vector<8x32xf32>
    %149 = arith.mulf %147, %148 : vector<8x32xf32>
    %150 = vector.broadcast %139 : vector<1x32xf32> to vector<8x32xf32>
    %151 = arith.addf %149, %150 : vector<8x32xf32>
    %c624 = arith.constant 624 : index
    %c0_69 = arith.constant 0 : index
    %152 = vector.load %arg2[%c624, %c0_69] : memref<1424x32xf32, #tpu.memory_space<vmem>>, vector<32x32xf32>
    %c1397 = arith.constant 1397 : index
    %c0_70 = arith.constant 0 : index
    %153 = vector.load %arg2[%c1397, %c0_70] : memref<1424x32xf32, #tpu.memory_space<vmem>>, vector<1x32xf32>
    %cst_71 = arith.constant dense<0.000000e+00> : vector<8x32xf32>
    %154 = tpu.matmul %151, %152, %cst_71 {dimension_numbers = #tpu.dot_dimension_numbers<[1], [0], [0], [1], [0, 0, 1, 1], [], []>} : vector<8x32xf32>, vector<32x32xf32>, vector<8x32xf32> -> vector<8x32xf32>
    %155 = vector.broadcast %153 : vector<1x32xf32> to vector<8x32xf32>
    %156 = arith.addf %154, %155 : vector<8x32xf32>
    %157 = arith.addf %151, %156 : vector<8x32xf32>
    %c1401 = arith.constant 1401 : index
    %c0_72 = arith.constant 0 : index
    %158 = vector.load %arg2[%c1401, %c0_72] : memref<1424x32xf32, #tpu.memory_space<vmem>>, vector<1x32xf32>
    %c1405 = arith.constant 1405 : index
    %c0_73 = arith.constant 0 : index
    %159 = vector.load %arg2[%c1405, %c0_73] : memref<1424x32xf32, #tpu.memory_space<vmem>>, vector<1x32xf32>
    %cst_74 = arith.constant dense<0.000000e+00> : vector<8x32xf32>
    %160 = tpu.matmul %157, %32, %cst_74 {dimension_numbers = #tpu.dot_dimension_numbers<[1], [0], [0], [1], [0, 0, 1, 1], [], []>} : vector<8x32xf32>, vector<32x32xf32>, vector<8x32xf32> -> vector<8x32xf32>
    %161 = arith.subf %157, %160 : vector<8x32xf32>
    %162 = arith.mulf %161, %161 : vector<8x32xf32>
    %cst_75 = arith.constant dense<0.000000e+00> : vector<8x32xf32>
    %163 = tpu.matmul %162, %32, %cst_75 {dimension_numbers = #tpu.dot_dimension_numbers<[1], [0], [0], [1], [0, 0, 1, 1], [], []>} : vector<8x32xf32>, vector<32x32xf32>, vector<8x32xf32> -> vector<8x32xf32>
    %cst_76 = arith.constant 9.99999974E-6 : f32
    %164 = vector.broadcast %cst_76 : f32 to vector<8x32xf32>
    %165 = arith.addf %163, %164 : vector<8x32xf32>
    %166 = math.rsqrt %165 : vector<8x32xf32>
    %167 = arith.mulf %161, %166 : vector<8x32xf32>
    %168 = vector.broadcast %158 : vector<1x32xf32> to vector<8x32xf32>
    %169 = arith.mulf %167, %168 : vector<8x32xf32>
    %170 = vector.broadcast %159 : vector<1x32xf32> to vector<8x32xf32>
    %171 = arith.addf %169, %170 : vector<8x32xf32>
    %c212 = arith.constant 212 : index
    %c0_77 = arith.constant 0 : index
    %172 = vector.load %arg1[%c212, %c0_77] : memref<320x128xf32, #tpu.memory_space<vmem>>, vector<32x128xf32>
    %c278 = arith.constant 278 : index
    %c0_78 = arith.constant 0 : index
    %173 = vector.load %arg1[%c278, %c0_78] : memref<320x128xf32, #tpu.memory_space<vmem>>, vector<1x128xf32>
    %cst_79 = arith.constant dense<0.000000e+00> : vector<8x128xf32>
    %174 = tpu.matmul %171, %172, %cst_79 {dimension_numbers = #tpu.dot_dimension_numbers<[1], [0], [0], [1], [0, 0, 1, 1], [], []>} : vector<8x32xf32>, vector<32x128xf32>, vector<8x128xf32> -> vector<8x128xf32>
    %175 = vector.broadcast %173 : vector<1x128xf32> to vector<8x128xf32>
    %176 = arith.addf %174, %175 : vector<8x128xf32>
    %cst_80 = arith.constant 5.000000e-01 : f32
    %177 = vector.broadcast %cst_80 : f32 to vector<8x128xf32>
    %178 = arith.mulf %177, %176 : vector<8x128xf32>
    %cst_81 = arith.constant 4.471500e-02 : f32
    %179 = vector.broadcast %cst_81 : f32 to vector<8x128xf32>
    %180 = arith.mulf %179, %176 : vector<8x128xf32>
    %181 = arith.mulf %180, %176 : vector<8x128xf32>
    %182 = arith.mulf %181, %176 : vector<8x128xf32>
    %183 = arith.addf %176, %182 : vector<8x128xf32>
    %cst_82 = arith.constant 0.797884583 : f32
    %184 = vector.broadcast %cst_82 : f32 to vector<8x128xf32>
    %185 = arith.mulf %184, %183 : vector<8x128xf32>
    %186 = math.tanh %185 : vector<8x128xf32>
    %cst_83 = arith.constant 1.000000e+00 : f32
    %187 = vector.broadcast %cst_83 : f32 to vector<8x128xf32>
    %188 = arith.addf %187, %186 : vector<8x128xf32>
    %189 = arith.mulf %178, %188 : vector<8x128xf32>
    %c944 = arith.constant 944 : index
    %c0_84 = arith.constant 0 : index
    %190 = vector.load %arg2[%c944, %c0_84] : memref<1424x32xf32, #tpu.memory_space<vmem>>, vector<128x32xf32>
    %c1409 = arith.constant 1409 : index
    %c0_85 = arith.constant 0 : index
    %191 = vector.load %arg2[%c1409, %c0_85] : memref<1424x32xf32, #tpu.memory_space<vmem>>, vector<1x32xf32>
    %cst_86 = arith.constant dense<0.000000e+00> : vector<8x32xf32>
    %192 = tpu.matmul %189, %190, %cst_86 {dimension_numbers = #tpu.dot_dimension_numbers<[1], [0], [0], [1], [0, 0, 1, 1], [], []>} : vector<8x128xf32>, vector<128x32xf32>, vector<8x32xf32> -> vector<8x32xf32>
    %193 = vector.broadcast %191 : vector<1x32xf32> to vector<8x32xf32>
    %194 = arith.addf %192, %193 : vector<8x32xf32>
    %195 = arith.addf %171, %194 : vector<8x32xf32>
    %c1413 = arith.constant 1413 : index
    %c0_87 = arith.constant 0 : index
    %196 = vector.load %arg2[%c1413, %c0_87] : memref<1424x32xf32, #tpu.memory_space<vmem>>, vector<1x32xf32>
    %c1417 = arith.constant 1417 : index
    %c0_88 = arith.constant 0 : index
    %197 = vector.load %arg2[%c1417, %c0_88] : memref<1424x32xf32, #tpu.memory_space<vmem>>, vector<1x32xf32>
    %cst_89 = arith.constant dense<0.000000e+00> : vector<8x32xf32>
    %198 = tpu.matmul %195, %32, %cst_89 {dimension_numbers = #tpu.dot_dimension_numbers<[1], [0], [0], [1], [0, 0, 1, 1], [], []>} : vector<8x32xf32>, vector<32x32xf32>, vector<8x32xf32> -> vector<8x32xf32>
    %199 = arith.subf %195, %198 : vector<8x32xf32>
    %200 = arith.mulf %199, %199 : vector<8x32xf32>
    %cst_90 = arith.constant dense<0.000000e+00> : vector<8x32xf32>
    %201 = tpu.matmul %200, %32, %cst_90 {dimension_numbers = #tpu.dot_dimension_numbers<[1], [0], [0], [1], [0, 0, 1, 1], [], []>} : vector<8x32xf32>, vector<32x32xf32>, vector<8x32xf32> -> vector<8x32xf32>
    %cst_91 = arith.constant 9.99999974E-6 : f32
    %202 = vector.broadcast %cst_91 : f32 to vector<8x32xf32>
    %203 = arith.addf %201, %202 : vector<8x32xf32>
    %204 = math.rsqrt %203 : vector<8x32xf32>
    %205 = arith.mulf %199, %204 : vector<8x32xf32>
    %206 = vector.broadcast %196 : vector<1x32xf32> to vector<8x32xf32>
    %207 = arith.mulf %205, %206 : vector<8x32xf32>
    %208 = vector.broadcast %197 : vector<1x32xf32> to vector<8x32xf32>
    %209 = arith.addf %207, %208 : vector<8x32xf32>
    %c656 = arith.constant 656 : index
    %c0_92 = arith.constant 0 : index
    %210 = vector.load %arg2[%c656, %c0_92] : memref<1424x32xf32, #tpu.memory_space<vmem>>, vector<32x32xf32>
    %c1398 = arith.constant 1398 : index
    %c0_93 = arith.constant 0 : index
    %211 = vector.load %arg2[%c1398, %c0_93] : memref<1424x32xf32, #tpu.memory_space<vmem>>, vector<1x32xf32>
    %cst_94 = arith.constant dense<0.000000e+00> : vector<8x32xf32>
    %212 = tpu.matmul %209, %210, %cst_94 {dimension_numbers = #tpu.dot_dimension_numbers<[1], [0], [0], [1], [0, 0, 1, 1], [], []>} : vector<8x32xf32>, vector<32x32xf32>, vector<8x32xf32> -> vector<8x32xf32>
    %213 = vector.broadcast %211 : vector<1x32xf32> to vector<8x32xf32>
    %214 = arith.addf %212, %213 : vector<8x32xf32>
    %215 = arith.addf %209, %214 : vector<8x32xf32>
    %c1402 = arith.constant 1402 : index
    %c0_95 = arith.constant 0 : index
    %216 = vector.load %arg2[%c1402, %c0_95] : memref<1424x32xf32, #tpu.memory_space<vmem>>, vector<1x32xf32>
    %c1406 = arith.constant 1406 : index
    %c0_96 = arith.constant 0 : index
    %217 = vector.load %arg2[%c1406, %c0_96] : memref<1424x32xf32, #tpu.memory_space<vmem>>, vector<1x32xf32>
    %cst_97 = arith.constant dense<0.000000e+00> : vector<8x32xf32>
    %218 = tpu.matmul %215, %32, %cst_97 {dimension_numbers = #tpu.dot_dimension_numbers<[1], [0], [0], [1], [0, 0, 1, 1], [], []>} : vector<8x32xf32>, vector<32x32xf32>, vector<8x32xf32> -> vector<8x32xf32>
    %219 = arith.subf %215, %218 : vector<8x32xf32>
    %220 = arith.mulf %219, %219 : vector<8x32xf32>
    %cst_98 = arith.constant dense<0.000000e+00> : vector<8x32xf32>
    %221 = tpu.matmul %220, %32, %cst_98 {dimension_numbers = #tpu.dot_dimension_numbers<[1], [0], [0], [1], [0, 0, 1, 1], [], []>} : vector<8x32xf32>, vector<32x32xf32>, vector<8x32xf32> -> vector<8x32xf32>
    %cst_99 = arith.constant 9.99999974E-6 : f32
    %222 = vector.broadcast %cst_99 : f32 to vector<8x32xf32>
    %223 = arith.addf %221, %222 : vector<8x32xf32>
    %224 = math.rsqrt %223 : vector<8x32xf32>
    %225 = arith.mulf %219, %224 : vector<8x32xf32>
    %226 = vector.broadcast %216 : vector<1x32xf32> to vector<8x32xf32>
    %227 = arith.mulf %225, %226 : vector<8x32xf32>
    %228 = vector.broadcast %217 : vector<1x32xf32> to vector<8x32xf32>
    %229 = arith.addf %227, %228 : vector<8x32xf32>
    %c244 = arith.constant 244 : index
    %c0_100 = arith.constant 0 : index
    %230 = vector.load %arg1[%c244, %c0_100] : memref<320x128xf32, #tpu.memory_space<vmem>>, vector<32x128xf32>
    %c279 = arith.constant 279 : index
    %c0_101 = arith.constant 0 : index
    %231 = vector.load %arg1[%c279, %c0_101] : memref<320x128xf32, #tpu.memory_space<vmem>>, vector<1x128xf32>
    %cst_102 = arith.constant dense<0.000000e+00> : vector<8x128xf32>
    %232 = tpu.matmul %229, %230, %cst_102 {dimension_numbers = #tpu.dot_dimension_numbers<[1], [0], [0], [1], [0, 0, 1, 1], [], []>} : vector<8x32xf32>, vector<32x128xf32>, vector<8x128xf32> -> vector<8x128xf32>
    %233 = vector.broadcast %231 : vector<1x128xf32> to vector<8x128xf32>
    %234 = arith.addf %232, %233 : vector<8x128xf32>
    %cst_103 = arith.constant 5.000000e-01 : f32
    %235 = vector.broadcast %cst_103 : f32 to vector<8x128xf32>
    %236 = arith.mulf %235, %234 : vector<8x128xf32>
    %cst_104 = arith.constant 4.471500e-02 : f32
    %237 = vector.broadcast %cst_104 : f32 to vector<8x128xf32>
    %238 = arith.mulf %237, %234 : vector<8x128xf32>
    %239 = arith.mulf %238, %234 : vector<8x128xf32>
    %240 = arith.mulf %239, %234 : vector<8x128xf32>
    %241 = arith.addf %234, %240 : vector<8x128xf32>
    %cst_105 = arith.constant 0.797884583 : f32
    %242 = vector.broadcast %cst_105 : f32 to vector<8x128xf32>
    %243 = arith.mulf %242, %241 : vector<8x128xf32>
    %244 = math.tanh %243 : vector<8x128xf32>
    %cst_106 = arith.constant 1.000000e+00 : f32
    %245 = vector.broadcast %cst_106 : f32 to vector<8x128xf32>
    %246 = arith.addf %245, %244 : vector<8x128xf32>
    %247 = arith.mulf %236, %246 : vector<8x128xf32>
    %c1072 = arith.constant 1072 : index
    %c0_107 = arith.constant 0 : index
    %248 = vector.load %arg2[%c1072, %c0_107] : memref<1424x32xf32, #tpu.memory_space<vmem>>, vector<128x32xf32>
    %c1410 = arith.constant 1410 : index
    %c0_108 = arith.constant 0 : index
    %249 = vector.load %arg2[%c1410, %c0_108] : memref<1424x32xf32, #tpu.memory_space<vmem>>, vector<1x32xf32>
    %cst_109 = arith.constant dense<0.000000e+00> : vector<8x32xf32>
    %250 = tpu.matmul %247, %248, %cst_109 {dimension_numbers = #tpu.dot_dimension_numbers<[1], [0], [0], [1], [0, 0, 1, 1], [], []>} : vector<8x128xf32>, vector<128x32xf32>, vector<8x32xf32> -> vector<8x32xf32>
    %251 = vector.broadcast %249 : vector<1x32xf32> to vector<8x32xf32>
    %252 = arith.addf %250, %251 : vector<8x32xf32>
    %253 = arith.addf %229, %252 : vector<8x32xf32>
    %c1414 = arith.constant 1414 : index
    %c0_110 = arith.constant 0 : index
    %254 = vector.load %arg2[%c1414, %c0_110] : memref<1424x32xf32, #tpu.memory_space<vmem>>, vector<1x32xf32>
    %c1418 = arith.constant 1418 : index
    %c0_111 = arith.constant 0 : index
    %255 = vector.load %arg2[%c1418, %c0_111] : memref<1424x32xf32, #tpu.memory_space<vmem>>, vector<1x32xf32>
    %cst_112 = arith.constant dense<0.000000e+00> : vector<8x32xf32>
    %256 = tpu.matmul %253, %32, %cst_112 {dimension_numbers = #tpu.dot_dimension_numbers<[1], [0], [0], [1], [0, 0, 1, 1], [], []>} : vector<8x32xf32>, vector<32x32xf32>, vector<8x32xf32> -> vector<8x32xf32>
    %257 = arith.subf %253, %256 : vector<8x32xf32>
    %258 = arith.mulf %257, %257 : vector<8x32xf32>
    %cst_113 = arith.constant dense<0.000000e+00> : vector<8x32xf32>
    %259 = tpu.matmul %258, %32, %cst_113 {dimension_numbers = #tpu.dot_dimension_numbers<[1], [0], [0], [1], [0, 0, 1, 1], [], []>} : vector<8x32xf32>, vector<32x32xf32>, vector<8x32xf32> -> vector<8x32xf32>
    %cst_114 = arith.constant 9.99999974E-6 : f32
    %260 = vector.broadcast %cst_114 : f32 to vector<8x32xf32>
    %261 = arith.addf %259, %260 : vector<8x32xf32>
    %262 = math.rsqrt %261 : vector<8x32xf32>
    %263 = arith.mulf %257, %262 : vector<8x32xf32>
    %264 = vector.broadcast %254 : vector<1x32xf32> to vector<8x32xf32>
    %265 = arith.mulf %263, %264 : vector<8x32xf32>
    %266 = vector.broadcast %255 : vector<1x32xf32> to vector<8x32xf32>
    %267 = arith.addf %265, %266 : vector<8x32xf32>
    %c1421 = arith.constant 1421 : index
    %c0_115 = arith.constant 0 : index
    %268 = vector.load %arg2[%c1421, %c0_115] : memref<1424x32xf32, #tpu.memory_space<vmem>>, vector<1x32xf32>
    %269 = arith.mulf %2, %267 : vector<8x32xf32>
    %cst_116 = arith.constant 1.000000e+00 : f32
    %270 = vector.broadcast %cst_116 : f32 to vector<8x32xf32>
    %271 = arith.subf %270, %2 : vector<8x32xf32>
    %272 = vector.broadcast %268 : vector<1x32xf32> to vector<8x32xf32>
    %273 = arith.mulf %271, %272 : vector<8x32xf32>
    %274 = arith.addf %269, %273 : vector<8x32xf32>
    %275 = vector.broadcast %33 : vector<1x32xf32> to vector<8x32xf32>
    %276 = arith.addf %274, %275 : vector<8x32xf32>
    %c280 = arith.constant 280 : index
    %c0_117 = arith.constant 0 : index
    %277 = vector.load %arg1[%c280, %c0_117] : memref<320x128xf32, #tpu.memory_space<vmem>>, vector<32x128xf32>
    %c312 = arith.constant 312 : index
    %c0_118 = arith.constant 0 : index
    %278 = vector.load %arg1[%c312, %c0_118] : memref<320x128xf32, #tpu.memory_space<vmem>>, vector<1x128xf32>
    %cst_119 = arith.constant dense<0.000000e+00> : vector<8x128xf32>
    %279 = tpu.matmul %276, %277, %cst_119 {dimension_numbers = #tpu.dot_dimension_numbers<[1], [0], [0], [1], [0, 0, 1, 1], [], []>} : vector<8x32xf32>, vector<32x128xf32>, vector<8x128xf32> -> vector<8x128xf32>
    %280 = vector.broadcast %278 : vector<1x128xf32> to vector<8x128xf32>
    %281 = arith.addf %279, %280 : vector<8x128xf32>
    %cst_120 = arith.constant 5.000000e-01 : f32
    %282 = vector.broadcast %cst_120 : f32 to vector<8x128xf32>
    %283 = arith.mulf %282, %281 : vector<8x128xf32>
    %cst_121 = arith.constant 4.471500e-02 : f32
    %284 = vector.broadcast %cst_121 : f32 to vector<8x128xf32>
    %285 = arith.mulf %284, %281 : vector<8x128xf32>
    %286 = arith.mulf %285, %281 : vector<8x128xf32>
    %287 = arith.mulf %286, %281 : vector<8x128xf32>
    %288 = arith.addf %281, %287 : vector<8x128xf32>
    %cst_122 = arith.constant 0.797884583 : f32
    %289 = vector.broadcast %cst_122 : f32 to vector<8x128xf32>
    %290 = arith.mulf %289, %288 : vector<8x128xf32>
    %291 = math.tanh %290 : vector<8x128xf32>
    %cst_123 = arith.constant 1.000000e+00 : f32
    %292 = vector.broadcast %cst_123 : f32 to vector<8x128xf32>
    %293 = arith.addf %292, %291 : vector<8x128xf32>
    %294 = arith.mulf %283, %293 : vector<8x128xf32>
    %c1200 = arith.constant 1200 : index
    %c0_124 = arith.constant 0 : index
    %295 = vector.load %arg2[%c1200, %c0_124] : memref<1424x32xf32, #tpu.memory_space<vmem>>, vector<128x32xf32>
    %c1419 = arith.constant 1419 : index
    %c0_125 = arith.constant 0 : index
    %296 = vector.load %arg2[%c1419, %c0_125] : memref<1424x32xf32, #tpu.memory_space<vmem>>, vector<1x32xf32>
    %cst_126 = arith.constant dense<0.000000e+00> : vector<8x32xf32>
    %297 = tpu.matmul %294, %295, %cst_126 {dimension_numbers = #tpu.dot_dimension_numbers<[1], [0], [0], [1], [0, 0, 1, 1], [], []>} : vector<8x128xf32>, vector<128x32xf32>, vector<8x32xf32> -> vector<8x32xf32>
    %298 = vector.broadcast %296 : vector<1x32xf32> to vector<8x32xf32>
    %299 = arith.addf %297, %298 : vector<8x32xf32>
    %c1360 = arith.constant 1360 : index
    %c0_127 = arith.constant 0 : index
    %300 = vector.load %arg2[%c1360, %c0_127] : memref<1424x32xf32, #tpu.memory_space<vmem>>, vector<32x32xf32>
    %c1422 = arith.constant 1422 : index
    %c0_128 = arith.constant 0 : index
    %301 = vector.load %arg2[%c1422, %c0_128] : memref<1424x32xf32, #tpu.memory_space<vmem>>, vector<1x32xf32>
    %cst_129 = arith.constant dense<0.000000e+00> : vector<8x32xf32>
    %302 = tpu.matmul %299, %300, %cst_129 {dimension_numbers = #tpu.dot_dimension_numbers<[1], [0], [0], [1], [0, 0, 1, 1], [], []>} : vector<8x32xf32>, vector<32x32xf32>, vector<8x32xf32> -> vector<8x32xf32>
    %303 = vector.broadcast %301 : vector<1x32xf32> to vector<8x32xf32>
    %304 = arith.addf %302, %303 : vector<8x32xf32>
    %305 = arith.subf %299, %31 : vector<8x32xf32>
    %cst_130 = arith.constant 1.000000e+00 : f32
    %306 = vector.broadcast %cst_130 : f32 to vector<8x32xf32>
    %307 = arith.subf %306, %2 : vector<8x32xf32>
    %308 = arith.mulf %305, %307 : vector<8x32xf32>
    %309 = arith.mulf %308, %308 : vector<8x32xf32>
    %cst_131 = arith.constant dense<0.000000e+00> : vector<8xf32>
    %310 = vector.multi_reduction <add>, %309, %cst_131 [1] : vector<8x32xf32> to vector<8xf32>
    %311 = vector.shape_cast %310 : vector<8xf32> to vector<8x1xf32>
    %cst_132 = arith.constant dense<0.000000e+00> : vector<1xf32>
    %312 = vector.multi_reduction <add>, %311, %cst_132 [0] : vector<8x1xf32> to vector<1xf32>
    %313 = vector.shape_cast %312 : vector<1xf32> to vector<1x1xf32>
    %cst_133 = arith.constant 7.812500e-03 : f32
    %314 = vector.broadcast %cst_133 : f32 to vector<1x1xf32>
    %315 = arith.mulf %313, %314 : vector<1x1xf32>
    %316 = vector.shape_cast %315 : vector<1x1xf32> to vector<1x1xf32>
    %317 = vector.broadcast %316 : vector<1x1xf32> to vector<8x32xf32>
    %cst_134 = arith.constant 0.000000e+00 : f32
    %318 = vector.broadcast %cst_134 : f32 to vector<8x32xf32>
    %319 = tpu.concatenate %31, %304, %317, %318 in 1 : vector<8x32xf32>, vector<8x32xf32>, vector<8x32xf32>, vector<8x32xf32> -> vector<8x128xf32>
    %c0_135 = arith.constant 0 : index
    %c0_136 = arith.constant 0 : index
    %320 = vector.load %arg3[%c0_135, %c0_136] : memref<8x128xf32, #tpu.memory_space<vmem>>, vector<8x128xf32>
    tpu.vector_store %arg3[%c0_135, %c0_136], %319 {strides = array<i32>} : memref<8x128xf32, #tpu.memory_space<vmem>>, vector<8x128xf32>,
    return
  }
}

</mosaic_0001>

<llo_original>
// kernel: mul.20
$region0: #{mul.20}
  %s0 = inlined_call_operand.vmem [shape: f32[2,4,8], index: 0, kind: input, shape index: {}]
  %s1 = inlined_call_operand.vmem [shape: f32[64], index: 1, kind: output, shape index: {}]
  $region1: #{mul.20} parent=0
    #allocation0 [shape = 'u8[4096]{0}', space=vmem, size = 0x1000, scoped, tag = 'scoped mem for output reshape']
    #allocation1 [shape = 'u8[8192]{0}', space=vmem, size = 0x2000, scoped, tag = 'scoped mem for input reshape']
    %s3 = sshll.u32 1, 4
    %s4 = ssub.s32 %s3, 1
    %s5 = scalar_lea.vmem %s0, 4
    %v6 = vld [vmem:[%s5] sm:%s4]
    %s7 = scalar_lea.vmem [#allocation1], 8
    %8 = vst [vmem:[%s7] sm:%s4] %v6
    %v9 = vld [vmem:[%s0] sm:%s4]
    %10 = vst [vmem:[#allocation1] sm:%s4] %v9
    %v11 = vld [vmem:[#allocation1] sm:$0x1]
    %vm12 = vcmask 64512
    %13 = vst.msk [vmem:[#allocation0] sm:$0x1] %vm12, %v11
    %s14 = scalar_lea.vmem [#allocation1], 11
    %v15 = vld [vmem:[%s14] sm:$0x1]
    %16 = vrot.lane.b32.xlu0 %v15, 56
    %v17 = vpop.permute.xlu0 %16
    %vm18 = vcmask 523712
    %19 = vst.msk [vmem:[#allocation0] sm:$0x1] %vm18, %v17
    %s20 = scalar_lea.vmem [#allocation1], 10
    %v21 = vld [vmem:[%s20] sm:$0x1]
    %22 = vrot.lane.b32.xlu0 %v21, 48
    %v23 = vpop.permute.xlu0 %22
    %vm24 = vcmask 458112
    %25 = vst.msk [vmem:[#allocation0] sm:$0x1] %vm24, %v23
    %s26 = scalar_lea.vmem [#allocation1], 9
    %v27 = vld [vmem:[%s26] sm:$0x1]
    %28 = vrot.lane.b32.xlu0 %v27, 40
    %v29 = vpop.permute.xlu0 %28
    %vm30 = vcmask 392512
    %31 = vst.msk [vmem:[#allocation0] sm:$0x1] %vm30, %v29
    %s32 = scalar_lea.vmem [#allocation1], 8
    %v33 = vld [vmem:[%s32] sm:$0x1]
    %34 = vrot.lane.b32.xlu0 %v33, 32
    %v35 = vpop.permute.xlu0 %34
    %vm36 = vcmask 326912
    %37 = vst.msk [vmem:[#allocation0] sm:$0x1] %vm36, %v35
    %s38 = scalar_lea.vmem [#allocation1], 3
    %v39 = vld [vmem:[%s38] sm:$0x1]
    %40 = vrot.lane.b32.xlu0 %v39, 24
    %v41 = vpop.permute.xlu0 %40
    %vm42 = vcmask 261312
    %43 = vst.msk [vmem:[#allocation0] sm:$0x1] %vm42, %v41
    %s44 = scalar_lea.vmem [#allocation1], 2
    %v45 = vld [vmem:[%s44] sm:$0x1]
    %46 = vrot.lane.b32.xlu0 %v45, 16
    %v47 = vpop.permute.xlu0 %46
    %vm48 = vcmask 195712
    %49 = vst.msk [vmem:[#allocation0] sm:$0x1] %vm48, %v47
    %s50 = scalar_lea.vmem [#allocation1], 1
    %v51 = vld [vmem:[%s50] sm:$0x1]
    %52 = vrot.lane.b32.xlu0 %v51, 8
    %v53 = vpop.permute.xlu0 %52
    %vm54 = vcmask 130112
    %55 = vst.msk [vmem:[#allocation0] sm:$0x1] %vm54, %v53
    %s57 = sshll.u32 1, 1
    %s58 = ssub.s32 %s57, 1
    %v60 = vld [vmem:[#allocation0] sm:%s58]
    %s61 = sshll.u32 1, 1
    %s62 = ssub.s32 %s61, 1
    %63 = vst [vmem:[%s1] sm:%s62] %v60

// kernel: gmae_forward.1
$region0: #{gmae_forward.1}
  #allocation0 [shape = 'u32[]', space=smem, size = 0x4, offset = 0x4, fixed_abs, tag = 'smem constant byte address 0x4 - core index']
  #allocation1 [shape = 'u32[144,128]{1,0:T(1,128)}', space=vmem, size = 0x12000, scoped, tag = 'internal scratch']
  %s0 = inlined_call_operand.vmem [shape: f32[72,32], index: 0, kind: input, shape index: {}]
  %s1 = inlined_call_operand.vmem [shape: f32[320,128], index: 1, kind: input, shape index: {}]
  %s2 = inlined_call_operand.vmem [shape: f32[1424,32], index: 2, kind: input, shape index: {}]
  %s3 = inlined_call_operand.vmem [shape: f32[8,128], index: 3, kind: output, shape index: {}]
  %s4 = sld [smem:[#allocation0]]
  $region29: #{gmae_forward.1} parent=0
    _
  %s6 = ssub.s32 1, %s4
  %s7 = scalar_select 0, %s6, %s4
  // Predicated region
  $region2: #{gmae_forward.1} parent=0 // pred_check
    _
  $region3: #{gmae_forward.1} parent=0 // pred_check_branch
    %9 = sbr.rel (0) target = $region5
  $region4: #{gmae_forward.1} parent=0 // pred_region
    _
  $region5: #{gmae_forward.1} parent=0 // pred_fallthru
    _
  // Predicated region
  $region6: #{gmae_forward.1} parent=0 // pred_check
    _
  $region7: #{gmae_forward.1} parent=0 // pred_check_branch
    %11 = sbr.rel (0) target = $region9
  $region8: #{gmae_forward.1} parent=0 // pred_region
    _
  $region9: #{gmae_forward.1} parent=0 // pred_fallthru
    _
  // Predicated region
  $region10: #{gmae_forward.1} parent=0 // pred_check
    _
  $region11: #{gmae_forward.1} parent=0 // pred_check_branch
    %13 = sbr.rel (0) target = $region13
  $region12: #{gmae_forward.1} parent=0 // pred_region
    _
  $region13: #{gmae_forward.1} parent=0 // pred_fallthru
    _
  %v14 = vld [vmem:[%s0] sm:$0xff]
  %v15 = vld [vmem:[%s0 + $0x8] sm:$0xff]
  %v16 = vld [vmem:[%s0 + $0x10] sm:$0xff]
  %v17 = vld [vmem:[%s0 + $0x18] sm:$0xff]
  %v18 = vld [vmem:[%s0 + $0x20] sm:$0xff]
  %v19 = vld [vmem:[%s0 + $0x28] sm:$0xff]
  %v20 = vld [vmem:[%s0 + $0x30] sm:$0xff]
  %v21 = vld [vmem:[%s0 + $0x38] sm:$0xff]
  %v22 = vld [vmem:[%s0 + $0x40] sm:$0xff]
  %v23 = vld [vmem:[%s2] sm:$0xff]
  %v24 = vld [vmem:[%s2 + $0x8] sm:$0xff]
  %v25 = vld [vmem:[%s2 + $0x570] sm:$0x1]
  %v26 = vld [vmem:[%s2 + $0x10] sm:$0xff]
  %v27 = vld [vmem:[%s2 + $0x18] sm:$0xff]
  %v28 = vld [vmem:[%s2 + $0x20] sm:$0xff]
  %v29 = vld [vmem:[%s2 + $0x28] sm:$0xff]
  %v30 = vld [vmem:[%s2 + $0x571] sm:$0x1]
  %v31 = vlaneseq
  %v32 = vshrl.u32 %v31, 7
  %v33 = vsub.s32 0, %v32
  %v34 = vrot.slane %v25, %v33
  %vm35 = vcmask 130048
  %v37 = vsel %vm35, %v14, 0
  %v40 = vsel %vm35, %v15, 0
  %v43 = vsel %vm35, %v16, 0
  %v46 = vsel %vm35, %v17, 0
  %v49 = vsel %vm35, %v18, 0
  %v52 = vsel %vm35, %v19, 0
  %v55 = vsel %vm35, %v20, 0
  %v58 = vsel %vm35, %v21, 0
  %60 = vmatprep.subr.mxu0 0.0
  %61 = vmatpush1.msra.mxu0 0.0
  %62 = vmatprep.subr.mxu0 0.0
  %63 = vmatpush1.msra.mxu0 0.0
  %64 = vmatprep.subr.mxu0 0.0
  %65 = vmatpush1.msra.mxu0 0.0
  %66 = vmatprep.subr.mxu0 0.0
  %67 = vmatpush1.msra.mxu0 0.0
  %68 = vmatprep.subr.mxu0 0.0
  %69 = vmatpush1.msra.mxu0 0.0
  %70 = vmatprep.subr.mxu0 0.0
  %71 = vmatpush1.msra.mxu0 0.0
  %72 = vmatprep.subr.mxu0 0.0
  %73 = vmatpush1.msra.mxu0 0.0
  %74 = vmatprep.subr.mxu0 0.0
  %75 = vmatpush1.msra.mxu0 0.0
  %76 = vmatprep.subr.mxu0 0.0
  %77 = vmatpush1.msra.mxu0 0.0
  %78 = vmatprep.subr.mxu0 0.0
  %79 = vmatpush1.msra.mxu0 0.0
  %80 = vmatprep.subr.mxu0 0.0
  %81 = vmatpush1.msra.mxu0 0.0
  %82 = vmatprep.subr.mxu0 0.0
  %83 = vmatpush1.msra.mxu0 0.0
  %84 = vmatprep.subr.mxu0 0.0
  %85 = vmatpush1.msra.mxu0 0.0
  %86 = vmatprep.subr.mxu0 0.0
  %87 = vmatpush1.msra.mxu0 0.0
  %88 = vmatprep.subr.mxu0 0.0
  %89 = vmatpush1.msra.mxu0 %v24
  %90 = vmatprep.subr.mxu0 0.0
  %91 = vmatpush1.msra.mxu0 %v23
  %92 = vmatprep.subr.mxu0 0.0
  %93 = vmatpush2.msra.mxu0 0.0
  %94 = vmatprep.subr.mxu0 0.0
  %95 = vmatpush2.msra.mxu0 0.0
  %96 = vmatprep.subr.mxu0 0.0
  %97 = vmatpush2.msra.mxu0 0.0
  %98 = vmatprep.subr.mxu0 0.0
  %99 = vmatpush2.msra.mxu0 0.0
  %100 = vmatprep.subr.mxu0 0.0
  %101 = vmatpush2.msra.mxu0 0.0
  %102 = vmatprep.subr.mxu0 0.0
  %103 = vmatpush2.msra.mxu0 0.0
  %104 = vmatprep.subr.mxu0 0.0
  %105 = vmatpush2.msra.mxu0 0.0
  %106 = vmatprep.subr.mxu0 0.0
  %107 = vmatpush2.msra.mxu0 0.0
  %108 = vmatprep.subr.mxu0 0.0
  %109 = vmatpush2.msra.mxu0 0.0
  %110 = vmatprep.subr.mxu0 0.0
  %111 = vmatpush2.msra.mxu0 0.0
  %112 = vmatprep.subr.mxu0 0.0
  %113 = vmatpush2.msra.mxu0 0.0
  %114 = vmatprep.subr.mxu0 0.0
  %115 = vmatpush2.msra.mxu0 0.0
  %116 = vmatprep.subr.mxu0 0.0
  %117 = vmatpush2.msra.mxu0 0.0
  %118 = vmatprep.subr.mxu0 0.0
  %119 = vmatpush2.msra.mxu0 0.0
  %120 = vmatprep.subr.mxu0 0.0
  %121 = vmatpush2.msra.mxu0 0.0
  %122 = vmatprep.subr.mxu0 0.0
  %123 = vmatpush2.msra.mxu0 0.0
  %124 = vmatprep.mubr.f32.mxu0 0.0
  %125 = vmatmul.mubr.f32.gmra.mxu0 %v37
  %v126 = vpop.f32.mrf.mxu0
  %v127 = vadd.f32 %v34, %v126
  %v128 = vpop.f32.mrf.mxu0
  %129 = vmatprep.mubr.f32.mxu0 0.0
  %130 = vmatmul.mubr.f32.gmra.mxu0 %v40
  %v131 = vpop.f32.mrf.mxu0
  %v132 = vadd.f32 %v34, %v131
  %v133 = vpop.f32.mrf.mxu0
  %134 = vmatprep.mubr.f32.mxu0 0.0
  %135 = vmatmul.mubr.f32.gmra.mxu0 %v43
  %v136 = vpop.f32.mrf.mxu0
  %v137 = vadd.f32 %v34, %v136
  %v138 = vpop.f32.mrf.mxu0
  %139 = vmatprep.mubr.f32.mxu0 0.0
  %140 = vmatmul.mubr.f32.gmra.mxu0 %v46
  %v141 = vpop.f32.mrf.mxu0
  %v142 = vadd.f32 %v34, %v141
  %v143 = vpop.f32.mrf.mxu0
  %144 = vmatprep.mubr.f32.mxu0 0.0
  %145 = vmatmul.mubr.f32.gmra.mxu0 %v49
  %v146 = vpop.f32.mrf.mxu0
  %v147 = vadd.f32 %v34, %v146
  %v148 = vpop.f32.mrf.mxu0
  %149 = vmatprep.mubr.f32.mxu0 0.0
  %150 = vmatmul.mubr.f32.gmra.mxu0 %v52
  %v151 = vpop.f32.mrf.mxu0
  %v152 = vadd.f32 %v34, %v151
  %v153 = vpop.f32.mrf.mxu0
  %154 = vmatprep.mubr.f32.mxu0 0.0
  %155 = vmatmul.mubr.f32.gmra.mxu0 %v55
  %v156 = vpop.f32.mrf.mxu0
  %v157 = vadd.f32 %v34, %v156
  %v158 = vpop.f32.mrf.mxu0
  %159 = vmatprep.mubr.f32.mxu0 0.0
  %160 = vmatmul.mubr.f32.gmra.mxu0 %v58
  %v161 = vpop.f32.mrf.mxu0
  %v162 = vadd.f32 %v34, %v161
  %v163 = vpop.f32.mrf.mxu0
  %164 = vdwg.mxu0
  %v165 = vmax.f32 %v127, 0.0
  %v166 = vmax.f32 %v132, 0.0
  %v167 = vmax.f32 %v137, 0.0
  %v168 = vmax.f32 %v142, 0.0
  %v169 = vmax.f32 %v147, 0.0
  %v170 = vmax.f32 %v152, 0.0
  %v171 = vmax.f32 %v157, 0.0
  %v172 = vmax.f32 %v162, 0.0
  %v173 = vlaneseq
  %v174 = vshrl.u32 %v173, 7
  %v175 = vsub.s32 0, %v174
  %v176 = vrot.slane %v30, %v175
  %vm177 = vcmask 261120
  %v179 = vsel %vm177, %v165, 0
  %v182 = vsel %vm177, %v166, 0
  %v185 = vsel %vm177, %v167, 0
  %v188 = vsel %vm177, %v168, 0
  %v191 = vsel %vm177, %v169, 0
  %v194 = vsel %vm177, %v170, 0
  %v197 = vsel %vm177, %v171, 0
  %v200 = vsel %vm177, %v172, 0
  %202 = vmatprep.subr.mxu0 0.0
  %203 = vmatpush1.msra.mxu0 0.0
  %204 = vmatprep.subr.mxu0 0.0
  %205 = vmatpush1.msra.mxu0 0.0
  %206 = vmatprep.subr.mxu0 0.0
  %207 = vmatpush1.msra.mxu0 0.0
  %208 = vmatprep.subr.mxu0 0.0
  %209 = vmatpush1.msra.mxu0 0.0
  %210 = vmatprep.subr.mxu0 0.0
  %211 = vmatpush1.msra.mxu0 0.0
  %212 = vmatprep.subr.mxu0 0.0
  %213 = vmatpush1.msra.mxu0 0.0
  %214 = vmatprep.subr.mxu0 0.0
  %215 = vmatpush1.msra.mxu0 0.0
  %216 = vmatprep.subr.mxu0 0.0
  %217 = vmatpush1.msra.mxu0 0.0
  %218 = vmatprep.subr.mxu0 0.0
  %219 = vmatpush1.msra.mxu0 0.0
  %220 = vmatprep.subr.mxu0 0.0
  %221 = vmatpush1.msra.mxu0 0.0
  %222 = vmatprep.subr.mxu0 0.0
  %223 = vmatpush1.msra.mxu0 0.0
  %224 = vmatprep.subr.mxu0 0.0
  %225 = vmatpush1.msra.mxu0 0.0
  %226 = vmatprep.subr.mxu0 0.0
  %227 = vmatpush1.msra.mxu0 %v29
  %228 = vmatprep.subr.mxu0 0.0
  %229 = vmatpush1.msra.mxu0 %v28
  %230 = vmatprep.subr.mxu0 0.0
  %231 = vmatpush1.msra.mxu0 %v27
  %232 = vmatprep.subr.mxu0 0.0
  %233 = vmatpush1.msra.mxu0 %v26
  %234 = vmatprep.subr.mxu0 0.0
  %235 = vmatpush2.msra.mxu0 0.0
  %236 = vmatprep.subr.mxu0 0.0
  %237 = vmatpush2.msra.mxu0 0.0
  %238 = vmatprep.subr.mxu0 0.0
  %239 = vmatpush2.msra.mxu0 0.0
  %240 = vmatprep.subr.mxu0 0.0
  %241 = vmatpush2.msra.mxu0 0.0
  %242 = vmatprep.subr.mxu0 0.0
  %243 = vmatpush2.msra.mxu0 0.0
  %244 = vmatprep.subr.mxu0 0.0
  %245 = vmatpush2.msra.mxu0 0.0
  %246 = vmatprep.subr.mxu0 0.0
  %247 = vmatpush2.msra.mxu0 0.0
  %248 = vmatprep.subr.mxu0 0.0
  %249 = vmatpush2.msra.mxu0 0.0
  %250 = vmatprep.subr.mxu0 0.0
  %251 = vmatpush2.msra.mxu0 0.0
  %252 = vmatprep.subr.mxu0 0.0
  %253 = vmatpush2.msra.mxu0 0.0
  %254 = vmatprep.subr.mxu0 0.0
  %255 = vmatpush2.msra.mxu0 0.0
  %256 = vmatprep.subr.mxu0 0.0
  %257 = vmatpush2.msra.mxu0 0.0
  %258 = vmatprep.subr.mxu0 0.0
  %259 = vmatpush2.msra.mxu0 0.0
  %260 = vmatprep.subr.mxu0 0.0
  %261 = vmatpush2.msra.mxu0 0.0
  %262 = vmatprep.subr.mxu0 0.0
  %263 = vmatpush2.msra.mxu0 0.0
  %264 = vmatprep.subr.mxu0 0.0
  %265 = vmatpush2.msra.mxu0 0.0
  %266 = vmatprep.mubr.f32.mxu0 0.0
  %267 = vmatmul.mubr.f32.gmra.mxu0 %v179
  %v268 = vpop.f32.mrf.mxu0
  %v269 = vadd.f32 %v176, %v268
  %v270 = vpop.f32.mrf.mxu0
  %271 = vmatprep.mubr.f32.mxu0 0.0
  %272 = vmatmul.mubr.f32.gmra.mxu0 %v182
  %v273 = vpop.f32.mrf.mxu0
  %v274 = vadd.f32 %v176, %v273
  %v275 = vpop.f32.mrf.mxu0
  %276 = vmatprep.mubr.f32.mxu0 0.0
  %277 = vmatmul.mubr.f32.gmra.mxu0 %v185
  %v278 = vpop.f32.mrf.mxu0
  %v279 = vadd.f32 %v176, %v278
  %v280 = vpop.f32.mrf.mxu0
  %281 = vmatprep.mubr.f32.mxu0 0.0
  %282 = vmatmul.mubr.f32.gmra.mxu0 %v188
  %v283 = vpop.f32.mrf.mxu0
  %v284 = vadd.f32 %v176, %v283
  %v285 = vpop.f32.mrf.mxu0
  %286 = vmatprep.mubr.f32.mxu0 0.0
  %287 = vmatmul.mubr.f32.gmra.mxu0 %v191
  %v288 = vpop.f32.mrf.mxu0
  %v289 = vadd.f32 %v176, %v288
  %v290 = vpop.f32.mrf.mxu0
  %291 = vmatprep.mubr.f32.mxu0 0.0
  %292 = vmatmul.mubr.f32.gmra.mxu0 %v194
  %v293 = vpop.f32.mrf.mxu0
  %v294 = vadd.f32 %v176, %v293
  %v295 = vpop.f32.mrf.mxu0
  %296 = vmatprep.mubr.f32.mxu0 0.0
  %297 = vmatmul.mubr.f32.gmra.mxu0 %v197
  %v298 = vpop.f32.mrf.mxu0
  %v299 = vadd.f32 %v176, %v298
  %v300 = vpop.f32.mrf.mxu0
  %301 = vmatprep.mubr.f32.mxu0 0.0
  %302 = vmatmul.mubr.f32.gmra.mxu0 %v200
  %v303 = vpop.f32.mrf.mxu0
  %v304 = vadd.f32 %v176, %v303
  %v305 = vpop.f32.mrf.mxu0
  %306 = vdwg.mxu0
  %v307 = vmax.f32 %v269, 0.0
  %v308 = vmax.f32 %v274, 0.0
  %v309 = vmax.f32 %v279, 0.0
  %v310 = vmax.f32 %v284, 0.0
  %v311 = vmax.f32 %v289, 0.0
  %v312 = vmax.f32 %v294, 0.0
  %v313 = vmax.f32 %v299, 0.0
  %v314 = vmax.f32 %v304, 0.0
  %v315 = vld [vmem:[%s1] sm:$0xff]
  %v316 = vld [vmem:[%s1 + $0x8] sm:$0xff]
  %317 = vmatprep.subr.mxu0 0.0
  %318 = vmatpush1.msra.mxu0 0.0
  %319 = vmatprep.subr.mxu0 0.0
  %320 = vmatpush1.msra.mxu0 0.0
  %321 = vmatprep.subr.mxu0 0.0
  %322 = vmatpush1.msra.mxu0 0.0
  %323 = vmatprep.subr.mxu0 0.0
  %324 = vmatpush1.msra.mxu0 0.0
  %325 = vmatprep.subr.mxu0 0.0
  %326 = vmatpush1.msra.mxu0 0.0
  %327 = vmatprep.subr.mxu0 0.0
  %328 = vmatpush1.msra.mxu0 0.0
  %329 = vmatprep.subr.mxu0 0.0
  %330 = vmatpush1.msra.mxu0 0.0
  %331 = vmatprep.subr.mxu0 0.0
  %332 = vmatpush1.msra.mxu0 0.0
  %333 = vmatprep.subr.mxu0 0.0
  %334 = vmatpush1.msra.mxu0 0.0
  %335 = vmatprep.subr.mxu0 0.0
  %336 = vmatpush1.msra.mxu0 0.0
  %337 = vmatprep.subr.mxu0 0.0
  %338 = vmatpush1.msra.mxu0 0.0
  %339 = vmatprep.subr.mxu0 0.0
  %340 = vmatpush1.msra.mxu0 0.0
  %341 = vmatprep.subr.mxu0 0.0
  %342 = vmatpush1.msra.mxu0 0.0
  %343 = vmatprep.subr.mxu0 0.0
  %344 = vmatpush1.msra.mxu0 0.0
  %345 = vmatprep.subr.mxu0 0.0
  %346 = vmatpush1.msra.mxu0 %v316
  %347 = vmatprep.subr.mxu0 0.0
  %348 = vmatpush1.msra.mxu0 %v315
  %349 = vmatprep.subr.mxu0 0.0
  %350 = vmatpush2.msra.mxu0 0.0
  %351 = vmatprep.subr.mxu0 0.0
  %352 = vmatpush2.msra.mxu0 0.0
  %353 = vmatprep.subr.mxu0 0.0
  %354 = vmatpush2.msra.mxu0 0.0
  %355 = vmatprep.subr.mxu0 0.0
  %356 = vmatpush2.msra.mxu0 0.0
  %357 = vmatprep.subr.mxu0 0.0
  %358 = vmatpush2.msra.mxu0 0.0
  %359 = vmatprep.subr.mxu0 0.0
  %360 = vmatpush2.msra.mxu0 0.0
  %361 = vmatprep.subr.mxu0 0.0
  %362 = vmatpush2.msra.mxu0 0.0
  %363 = vmatprep.subr.mxu0 0.0
  %364 = vmatpush2.msra.mxu0 0.0
  %365 = vmatprep.subr.mxu0 0.0
  %366 = vmatpush2.msra.mxu0 0.0
  %367 = vmatprep.subr.mxu0 0.0
  %368 = vmatpush2.msra.mxu0 0.0
  %369 = vmatprep.subr.mxu0 0.0
  %370 = vmatpush2.msra.mxu0 0.0
  %371 = vmatprep.subr.mxu0 0.0
  %372 = vmatpush2.msra.mxu0 0.0
  %373 = vmatprep.subr.mxu0 0.0
  %374 = vmatpush2.msra.mxu0 0.0
  %375 = vmatprep.subr.mxu0 0.0
  %376 = vmatpush2.msra.mxu0 0.0
  %377 = vmatprep.subr.mxu0 0.0
  %378 = vmatpush2.msra.mxu0 0.0
  %379 = vmatprep.subr.mxu0 0.0
  %380 = vmatpush2.msra.mxu0 0.0
  %381 = vmatprep.mubr.f32.mxu0 0.0
  %382 = vmatmul.mubr.f32.gmra.mxu0 %v37
  %v383 = vpop.f32.mrf.mxu0
  %v384 = vadd.f32 0.0, %v383
  %v385 = vpop.f32.mrf.mxu0
  %386 = vmatprep.mubr.f32.mxu0 0.0
  %387 = vmatmul.mubr.f32.gmra.mxu0 %v40
  %v388 = vpop.f32.mrf.mxu0
  %v389 = vadd.f32 0.0, %v388
  %v390 = vpop.f32.mrf.mxu0
  %391 = vmatprep.mubr.f32.mxu0 0.0
  %392 = vmatmul.mubr.f32.gmra.mxu0 %v43
  %v393 = vpop.f32.mrf.mxu0
  %v394 = vadd.f32 0.0, %v393
  %v395 = vpop.f32.mrf.mxu0
  %396 = vmatprep.mubr.f32.mxu0 0.0
  %397 = vmatmul.mubr.f32.gmra.mxu0 %v46
  %v398 = vpop.f32.mrf.mxu0
  %v399 = vadd.f32 0.0, %v398
  %v400 = vpop.f32.mrf.mxu0
  %401 = vmatprep.mubr.f32.mxu0 0.0
  %402 = vmatmul.mubr.f32.gmra.mxu0 %v49
  %v403 = vpop.f32.mrf.mxu0
  %v404 = vadd.f32 0.0, %v403
  %v405 = vpop.f32.mrf.mxu0
  %406 = vmatprep.mubr.f32.mxu0 0.0
  %407 = vmatmul.mubr.f32.gmra.mxu0 %v52
  %v408 = vpop.f32.mrf.mxu0
  %v409 = vadd.f32 0.0, %v408
  %v410 = vpop.f32.mrf.mxu0
  %411 = vmatprep.mubr.f32.mxu0 0.0
  %412 = vmatmul.mubr.f32.gmra.mxu0 %v55
  %v413 = vpop.f32.mrf.mxu0
  %v414 = vadd.f32 0.0, %v413
  %v415 = vpop.f32.mrf.mxu0
  %416 = vmatprep.mubr.f32.mxu0 0.0
  %417 = vmatmul.mubr.f32.gmra.mxu0 %v58
  %v418 = vpop.f32.mrf.mxu0
  %v419 = vadd.f32 0.0, %v418
  %v420 = vpop.f32.mrf.mxu0
  %421 = vdwg.mxu0
  %v422 = vsub.f32 1.0, %v14
  %v423 = vsub.f32 1.0, %v15
  %v424 = vsub.f32 1.0, %v16
  %v425 = vsub.f32 1.0, %v17
  %v426 = vsub.f32 1.0, %v18
  %v427 = vsub.f32 1.0, %v19
  %v428 = vsub.f32 1.0, %v20
  %v429 = vsub.f32 1.0, %v21
  %v430 = vmul.f32 %v422, -1e+08
  %v431 = vmul.f32 %v423, -1e+08
  %v432 = vmul.f32 %v424, -1e+08
  %v433 = vmul.f32 %v425, -1e+08
  %v434 = vmul.f32 %v426, -1e+08
  %v435 = vmul.f32 %v427, -1e+08
  %v436 = vmul.f32 %v428, -1e+08
  %v437 = vmul.f32 %v429, -1e+08
  loop: start=0, step=1, limit=4
  $region14: #{gmae_forward.1} parent=0 // loop_pre_header
    _
  $region15: #{gmae_forward.1} parent=0 // loop_header
    %s439 = sphi 0, %s443
    %p440 = scmp.ge.s32.totalorder %s439, 4
    %v444 = vphi 0.0, %v980
  $region16: #{gmae_forward.1} parent=0 // loop_header_branch
    %442 = sbr.rel (%p440) target = $region20
  $region17: #{gmae_forward.1} parent=0 // loop_body
    %s445 = smul.u32 %s439, 32
    %s446 = sadd.s32 %s445, 16
    %s447 = smul.u32 %s439, 128
    %s448 = sadd.s32 %s447, 48
    %s449 = scalar_lea.vmem %s1, %s446
    %v450 = vld [vmem:[%s449] sm:$0xff]
    %v451 = vld [vmem:[%s449 + $0x8] sm:$0xff]
    %v452 = vld [vmem:[%s449 + $0x10] sm:$0xff]
    %v453 = vld [vmem:[%s449 + $0x18] sm:$0xff]
    %s454 = sadd.s32 %s439, 144
    %s455 = scalar_lea.vmem %s1, %s454
    %v456 = vld [vmem:[%s455] sm:$0x1]
    %s457 = scalar_lea.vmem %s2, %s448
    %v458 = vld [vmem:[%s457] sm:$0xff]
    %v459 = vld [vmem:[%s457 + $0x8] sm:$0xff]
    %v460 = vld [vmem:[%s457 + $0x10] sm:$0xff]
    %v461 = vld [vmem:[%s457 + $0x18] sm:$0xff]
    %v462 = vld [vmem:[%s457 + $0x20] sm:$0xff]
    %v463 = vld [vmem:[%s457 + $0x28] sm:$0xff]
    %v464 = vld [vmem:[%s457 + $0x30] sm:$0xff]
    %v465 = vld [vmem:[%s457 + $0x38] sm:$0xff]
    %v466 = vld [vmem:[%s457 + $0x40] sm:$0xff]
    %v467 = vld [vmem:[%s457 + $0x48] sm:$0xff]
    %v468 = vld [vmem:[%s457 + $0x50] sm:$0xff]
    %v469 = vld [vmem:[%s457 + $0x58] sm:$0xff]
    %v470 = vld [vmem:[%s457 + $0x60] sm:$0xff]
    %v471 = vld [vmem:[%s457 + $0x68] sm:$0xff]
    %v472 = vld [vmem:[%s457 + $0x70] sm:$0xff]
    %v473 = vld [vmem:[%s457 + $0x78] sm:$0xff]
    %v474 = vlaneseq
    %v475 = vshrl.u32 %v474, 7
    %v476 = vsub.s32 0, %v475
    %v477 = vrot.slane %v456, %v476
    %v479 = vsel %vm177, %v307, 0
    %v482 = vsel %vm177, %v308, 0
    %v485 = vsel %vm177, %v309, 0
    %v488 = vsel %vm177, %v310, 0
    %v491 = vsel %vm177, %v311, 0
    %v494 = vsel %vm177, %v312, 0
    %v497 = vsel %vm177, %v313, 0
    %v500 = vsel %vm177, %v314, 0
    %502 = vmatprep.subr.mxu0 0.0
    %503 = vmatpush1.msra.mxu0 0.0
    %504 = vmatprep.subr.mxu0 0.0
    %505 = vmatpush1.msra.mxu0 0.0
    %506 = vmatprep.subr.mxu0 0.0
    %507 = vmatpush1.msra.mxu0 0.0
    %508 = vmatprep.subr.mxu0 0.0
    %509 = vmatpush1.msra.mxu0 0.0
    %510 = vmatprep.subr.mxu0 0.0
    %511 = vmatpush1.msra.mxu0 0.0
    %512 = vmatprep.subr.mxu0 0.0
    %513 = vmatpush1.msra.mxu0 0.0
    %514 = vmatprep.subr.mxu0 0.0
    %515 = vmatpush1.msra.mxu0 0.0
    %516 = vmatprep.subr.mxu0 0.0
    %517 = vmatpush1.msra.mxu0 0.0
    %518 = vmatprep.subr.mxu0 0.0
    %519 = vmatpush1.msra.mxu0 0.0
    %520 = vmatprep.subr.mxu0 0.0
    %521 = vmatpush1.msra.mxu0 0.0
    %522 = vmatprep.subr.mxu0 0.0
    %523 = vmatpush1.msra.mxu0 0.0
    %524 = vmatprep.subr.mxu0 0.0
    %525 = vmatpush1.msra.mxu0 0.0
    %526 = vmatprep.subr.mxu0 0.0
    %527 = vmatpush1.msra.mxu0 %v453
    %528 = vmatprep.subr.mxu0 0.0
    %529 = vmatpush1.msra.mxu0 %v452
    %530 = vmatprep.subr.mxu0 0.0
    %531 = vmatpush1.msra.mxu0 %v451
    %532 = vmatprep.subr.mxu0 0.0
    %533 = vmatpush1.msra.mxu0 %v450
    %534 = vmatprep.subr.mxu0 0.0
    %535 = vmatpush2.msra.mxu0 0.0
    %536 = vmatprep.subr.mxu0 0.0
    %537 = vmatpush2.msra.mxu0 0.0
    %538 = vmatprep.subr.mxu0 0.0
    %539 = vmatpush2.msra.mxu0 0.0
    %540 = vmatprep.subr.mxu0 0.0
    %541 = vmatpush2.msra.mxu0 0.0
    %542 = vmatprep.subr.mxu0 0.0
    %543 = vmatpush2.msra.mxu0 0.0
    %544 = vmatprep.subr.mxu0 0.0
    %545 = vmatpush2.msra.mxu0 0.0
    %546 = vmatprep.subr.mxu0 0.0
    %547 = vmatpush2.msra.mxu0 0.0
    %548 = vmatprep.subr.mxu0 0.0
    %549 = vmatpush2.msra.mxu0 0.0
    %550 = vmatprep.subr.mxu0 0.0
    %551 = vmatpush2.msra.mxu0 0.0
    %552 = vmatprep.subr.mxu0 0.0
    %553 = vmatpush2.msra.mxu0 0.0
    %554 = vmatprep.subr.mxu0 0.0
    %555 = vmatpush2.msra.mxu0 0.0
    %556 = vmatprep.subr.mxu0 0.0
    %557 = vmatpush2.msra.mxu0 0.0
    %558 = vmatprep.subr.mxu0 0.0
    %559 = vmatpush2.msra.mxu0 0.0
    %560 = vmatprep.subr.mxu0 0.0
    %561 = vmatpush2.msra.mxu0 0.0
    %562 = vmatprep.subr.mxu0 0.0
    %563 = vmatpush2.msra.mxu0 0.0
    %564 = vmatprep.subr.mxu0 0.0
    %565 = vmatpush2.msra.mxu0 0.0
    %566 = vmatprep.mubr.f32.mxu0 0.0
    %567 = vmatmul.mubr.f32.gmra.mxu0 %v479
    %v568 = vpop.f32.mrf.mxu0
    %v569 = vadd.f32 %v477, %v568
    %v570 = vpop.f32.mrf.mxu0
    %571 = vmatprep.mubr.f32.mxu0 0.0
    %572 = vmatmul.mubr.f32.gmra.mxu0 %v482
    %v573 = vpop.f32.mrf.mxu0
    %v574 = vadd.f32 %v477, %v573
    %v575 = vpop.f32.mrf.mxu0
    %576 = vmatprep.mubr.f32.mxu0 0.0
    %577 = vmatmul.mubr.f32.gmra.mxu0 %v485
    %v578 = vpop.f32.mrf.mxu0
    %v579 = vadd.f32 %v477, %v578
    %v580 = vpop.f32.mrf.mxu0
    %581 = vmatprep.mubr.f32.mxu0 0.0
    %582 = vmatmul.mubr.f32.gmra.mxu0 %v488
    %v583 = vpop.f32.mrf.mxu0
    %v584 = vadd.f32 %v477, %v583
    %v585 = vpop.f32.mrf.mxu0
    %586 = vmatprep.mubr.f32.mxu0 0.0
    %587 = vmatmul.mubr.f32.gmra.mxu0 %v491
    %v588 = vpop.f32.mrf.mxu0
    %v589 = vadd.f32 %v477, %v588
    %v590 = vpop.f32.mrf.mxu0
    %591 = vmatprep.mubr.f32.mxu0 0.0
    %592 = vmatmul.mubr.f32.gmra.mxu0 %v494
    %v593 = vpop.f32.mrf.mxu0
    %v594 = vadd.f32 %v477, %v593
    %v595 = vpop.f32.mrf.mxu0
    %596 = vmatprep.mubr.f32.mxu0 0.0
    %597 = vmatmul.mubr.f32.gmra.mxu0 %v497
    %v598 = vpop.f32.mrf.mxu0
    %v599 = vadd.f32 %v477, %v598
    %v600 = vpop.f32.mrf.mxu0
    %601 = vmatprep.mubr.f32.mxu0 0.0
    %602 = vmatmul.mubr.f32.gmra.mxu0 %v500
    %v603 = vpop.f32.mrf.mxu0
    %v604 = vadd.f32 %v477, %v603
    %v605 = vpop.f32.mrf.mxu0
    %606 = vdwg.mxu0
    %607 = vset.pattern.permute.xlu0 16
    %608 = vperm.xlu0 %607, %v14
    %v609 = vpop.permute.xlu0 %608
    %611 = vset.pattern.permute.xlu0 16
    %612 = vperm.xlu0 %611, %v15
    %v613 = vpop.permute.xlu0 %612
    %615 = vset.pattern.permute.xlu0 16
    %616 = vperm.xlu0 %615, %v16
    %v617 = vpop.permute.xlu0 %616
    %619 = vset.pattern.permute.xlu0 16
    %620 = vperm.xlu0 %619, %v17
    %v621 = vpop.permute.xlu0 %620
    %623 = vset.pattern.permute.xlu0 16
    %624 = vperm.xlu0 %623, %v18
    %v625 = vpop.permute.xlu0 %624
    %627 = vset.pattern.permute.xlu0 16
    %628 = vperm.xlu0 %627, %v19
    %v629 = vpop.permute.xlu0 %628
    %631 = vset.pattern.permute.xlu0 16
    %632 = vperm.xlu0 %631, %v20
    %v633 = vpop.permute.xlu0 %632
    %635 = vset.pattern.permute.xlu0 16
    %636 = vperm.xlu0 %635, %v21
    %v637 = vpop.permute.xlu0 %636
    %v639 = vmul.f32 %v569, %v609
    %v640 = vmul.f32 %v574, %v613
    %v641 = vmul.f32 %v579, %v617
    %v642 = vmul.f32 %v584, %v621
    %v643 = vmul.f32 %v589, %v625
    %v644 = vmul.f32 %v594, %v629
    %v645 = vmul.f32 %v599, %v633
    %v646 = vmul.f32 %v604, %v637
    %648 = vset.pattern.permute.xlu0 16
    %649 = vperm.xlu0 %648, %v430
    %v650 = vpop.permute.xlu0 %649
    %653 = vset.pattern.permute.xlu0 16
    %654 = vperm.xlu0 %653, %v431
    %v655 = vpop.permute.xlu0 %654
    %658 = vset.pattern.permute.xlu0 16
    %659 = vperm.xlu0 %658, %v432
    %v660 = vpop.permute.xlu0 %659
    %663 = vset.pattern.permute.xlu0 16
    %664 = vperm.xlu0 %663, %v433
    %v665 = vpop.permute.xlu0 %664
    %668 = vset.pattern.permute.xlu0 16
    %669 = vperm.xlu0 %668, %v434
    %v670 = vpop.permute.xlu0 %669
    %673 = vset.pattern.permute.xlu0 16
    %674 = vperm.xlu0 %673, %v435
    %v675 = vpop.permute.xlu0 %674
    %678 = vset.pattern.permute.xlu0 16
    %679 = vperm.xlu0 %678, %v436
    %v680 = vpop.permute.xlu0 %679
    %683 = vset.pattern.permute.xlu0 16
    %684 = vperm.xlu0 %683, %v437
    %v685 = vpop.permute.xlu0 %684
    %v687 = vadd.f32 %v639, %v650
    %v688 = vadd.f32 %v640, %v655
    %v689 = vadd.f32 %v641, %v660
    %v690 = vadd.f32 %v642, %v665
    %v691 = vadd.f32 %v643, %v670
    %v692 = vadd.f32 %v644, %v675
    %v693 = vadd.f32 %v645, %v680
    %v694 = vadd.f32 %v646, %v685
    %v695 = vrot.slane %v687, 4
    %v696 = vmax.f32 %v687, %v695
    %v697 = vrot.slane %v696, 2
    %v698 = vmax.f32 %v696, %v697
    %v699 = vrot.slane %v698, 1
    %v700 = vmax.f32 %v698, %v699
    %v701 = vrot.slane %v688, 4
    %v702 = vmax.f32 %v688, %v701
    %v703 = vrot.slane %v702, 2
    %v704 = vmax.f32 %v702, %v703
    %v705 = vrot.slane %v704, 1
    %v706 = vmax.f32 %v704, %v705
    %v707 = vrot.slane %v689, 4
    %v708 = vmax.f32 %v689, %v707
    %v709 = vrot.slane %v708, 2
    %v710 = vmax.f32 %v708, %v709
    %v711 = vrot.slane %v710, 1
    %v712 = vmax.f32 %v710, %v711
    %v713 = vrot.slane %v690, 4
    %v714 = vmax.f32 %v690, %v713
    %v715 = vrot.slane %v714, 2
    %v716 = vmax.f32 %v714, %v715
    %v717 = vrot.slane %v716, 1
    %v718 = vmax.f32 %v716, %v717
    %v719 = vrot.slane %v691, 4
    %v720 = vmax.f32 %v691, %v719
    %v721 = vrot.slane %v720, 2
    %v722 = vmax.f32 %v720, %v721
    %v723 = vrot.slane %v722, 1
    %v724 = vmax.f32 %v722, %v723
    %v725 = vrot.slane %v692, 4
    %v726 = vmax.f32 %v692, %v725
    %v727 = vrot.slane %v726, 2
    %v728 = vmax.f32 %v726, %v727
    %v729 = vrot.slane %v728, 1
    %v730 = vmax.f32 %v728, %v729
    %v731 = vrot.slane %v693, 4
    %v732 = vmax.f32 %v693, %v731
    %v733 = vrot.slane %v732, 2
    %v734 = vmax.f32 %v732, %v733
    %v735 = vrot.slane %v734, 1
    %v736 = vmax.f32 %v734, %v735
    %v737 = vrot.slane %v694, 4
    %v738 = vmax.f32 %v694, %v737
    %v739 = vrot.slane %v738, 2
    %v740 = vmax.f32 %v738, %v739
    %v741 = vrot.slane %v740, 1
    %v742 = vmax.f32 %v740, %v741
    %v743 = vsub.f32 %v687, %v700
    %v744 = vsub.f32 %v688, %v706
    %v745 = vsub.f32 %v689, %v712
    %v746 = vsub.f32 %v690, %v718
    %v747 = vsub.f32 %v691, %v724
    %v748 = vsub.f32 %v692, %v730
    %v749 = vsub.f32 %v693, %v736
    %v750 = vsub.f32 %v694, %v742
    %v751 = vmul.f32 %v743, 1.442695
    %v752 = vpow.pop %v751
    %v753 = vmul.f32 %v744, 1.442695
    %v754 = vpow.pop %v753
    %v755 = vmul.f32 %v745, 1.442695
    %v756 = vpow.pop %v755
    %v757 = vmul.f32 %v746, 1.442695
    %v758 = vpow.pop %v757
    %v759 = vmul.f32 %v747, 1.442695
    %v760 = vpow.pop %v759
    %v761 = vmul.f32 %v748, 1.442695
    %v762 = vpow.pop %v761
    %v763 = vmul.f32 %v749, 1.442695
    %v764 = vpow.pop %v763
    %v765 = vmul.f32 %v750, 1.442695
    %v766 = vpow.pop %v765
    %v767 = vrot.slane %v752, 4
    %v768 = vadd.f32 %v752, %v767
    %v769 = vrot.slane %v768, 2
    %v770 = vadd.f32 %v768, %v769
    %v771 = vrot.slane %v770, 1
    %v772 = vadd.f32 %v770, %v771
    %v773 = vrot.slane %v754, 4
    %v774 = vadd.f32 %v754, %v773
    %v775 = vrot.slane %v774, 2
    %v776 = vadd.f32 %v774, %v775
    %v777 = vrot.slane %v776, 1
    %v778 = vadd.f32 %v776, %v777
    %v779 = vrot.slane %v756, 4
    %v780 = vadd.f32 %v756, %v779
    %v781 = vrot.slane %v780, 2
    %v782 = vadd.f32 %v780, %v781
    %v783 = vrot.slane %v782, 1
    %v784 = vadd.f32 %v782, %v783
    %v785 = vrot.slane %v758, 4
    %v786 = vadd.f32 %v758, %v785
    %v787 = vrot.slane %v786, 2
    %v788 = vadd.f32 %v786, %v787
    %v789 = vrot.slane %v788, 1
    %v790 = vadd.f32 %v788, %v789
    %v791 = vrot.slane %v760, 4
    %v792 = vadd.f32 %v760, %v791
    %v793 = vrot.slane %v792, 2
    %v794 = vadd.f32 %v792, %v793
    %v795 = vrot.slane %v794, 1
    %v796 = vadd.f32 %v794, %v795
    %v797 = vrot.slane %v762, 4
    %v798 = vadd.f32 %v762, %v797
    %v799 = vrot.slane %v798, 2
    %v800 = vadd.f32 %v798, %v799
    %v801 = vrot.slane %v800, 1
    %v802 = vadd.f32 %v800, %v801
    %v803 = vrot.slane %v764, 4
    %v804 = vadd.f32 %v764, %v803
    %v805 = vrot.slane %v804, 2
    %v806 = vadd.f32 %v804, %v805
    %v807 = vrot.slane %v806, 1
    %v808 = vadd.f32 %v806, %v807
    %v809 = vrot.slane %v766, 4
    %v810 = vadd.f32 %v766, %v809
    %v811 = vrot.slane %v810, 2
    %v812 = vadd.f32 %v810, %v811
    %v813 = vrot.slane %v812, 1
    %v814 = vadd.f32 %v812, %v813
    %v815 = vmul.f32 %v384, %v752
    %v816 = vmul.f32 %v389, %v754
    %v817 = vmul.f32 %v394, %v756
    %v818 = vmul.f32 %v399, %v758
    %v819 = vmul.f32 %v404, %v760
    %v820 = vmul.f32 %v409, %v762
    %v821 = vmul.f32 %v414, %v764
    %v822 = vmul.f32 %v419, %v766
    %v823 = vrot.slane %v815, 4
    %v824 = vadd.f32 %v815, %v823
    %v825 = vrot.slane %v824, 2
    %v826 = vadd.f32 %v824, %v825
    %v827 = vrot.slane %v826, 1
    %v828 = vadd.f32 %v826, %v827
    %v829 = vrot.slane %v816, 4
    %v830 = vadd.f32 %v816, %v829
    %v831 = vrot.slane %v830, 2
    %v832 = vadd.f32 %v830, %v831
    %v833 = vrot.slane %v832, 1
    %v834 = vadd.f32 %v832, %v833
    %v835 = vrot.slane %v817, 4
    %v836 = vadd.f32 %v817, %v835
    %v837 = vrot.slane %v836, 2
    %v838 = vadd.f32 %v836, %v837
    %v839 = vrot.slane %v838, 1
    %v840 = vadd.f32 %v838, %v839
    %v841 = vrot.slane %v818, 4
    %v842 = vadd.f32 %v818, %v841
    %v843 = vrot.slane %v842, 2
    %v844 = vadd.f32 %v842, %v843
    %v845 = vrot.slane %v844, 1
    %v846 = vadd.f32 %v844, %v845
    %v847 = vrot.slane %v819, 4
    %v848 = vadd.f32 %v819, %v847
    %v849 = vrot.slane %v848, 2
    %v850 = vadd.f32 %v848, %v849
    %v851 = vrot.slane %v850, 1
    %v852 = vadd.f32 %v850, %v851
    %v853 = vrot.slane %v820, 4
    %v854 = vadd.f32 %v820, %v853
    %v855 = vrot.slane %v854, 2
    %v856 = vadd.f32 %v854, %v855
    %v857 = vrot.slane %v856, 1
    %v858 = vadd.f32 %v856, %v857
    %v859 = vrot.slane %v821, 4
    %v860 = vadd.f32 %v821, %v859
    %v861 = vrot.slane %v860, 2
    %v862 = vadd.f32 %v860, %v861
    %v863 = vrot.slane %v862, 1
    %v864 = vadd.f32 %v862, %v863
    %v865 = vrot.slane %v822, 4
    %v866 = vadd.f32 %v822, %v865
    %v867 = vrot.slane %v866, 2
    %v868 = vadd.f32 %v866, %v867
    %v869 = vrot.slane %v868, 1
    %v870 = vadd.f32 %v868, %v869
    %v871 = vrcp.pop %v772
    %v872 = vrcp.pop %v778
    %v873 = vrcp.pop %v784
    %v874 = vrcp.pop %v790
    %v875 = vrcp.pop %v796
    %v876 = vrcp.pop %v802
    %v877 = vrcp.pop %v808
    %v878 = vrcp.pop %v814
    %v879 = vmul.f32 %v828, %v871
    %v880 = vmul.f32 %v834, %v872
    %v881 = vmul.f32 %v840, %v873
    %v882 = vmul.f32 %v846, %v874
    %v883 = vmul.f32 %v852, %v875
    %v884 = vmul.f32 %v858, %v876
    %v885 = vmul.f32 %v864, %v877
    %v886 = vmul.f32 %v870, %v878
    %vm895 = vcmask 1041409
    %v896 = vsel %vm895, %v880, %v879
    %vm897 = vcmask 1042434
    %v898 = vsel %vm897, %v881, %v896
    %vm899 = vcmask 1043459
    %v900 = vsel %vm899, %v882, %v898
    %vm901 = vcmask 1044484
    %v902 = vsel %vm901, %v883, %v900
    %vm903 = vcmask 1045509
    %v904 = vsel %vm903, %v884, %v902
    %vm905 = vcmask 1046534
    %v906 = vsel %vm905, %v885, %v904
    %vm907 = vcmask 1047559
    %v908 = vsel %vm907, %v886, %v906
    %910 = vmatprep.subr.mxu0 0.0
    %911 = vmatpush1.msra.mxu0 %v473
    %912 = vmatprep.subr.mxu0 0.0
    %913 = vmatpush1.msra.mxu0 %v472
    %914 = vmatprep.subr.mxu0 0.0
    %915 = vmatpush1.msra.mxu0 %v471
    %916 = vmatprep.subr.mxu0 0.0
    %917 = vmatpush1.msra.mxu0 %v470
    %918 = vmatprep.subr.mxu0 0.0
    %919 = vmatpush1.msra.mxu0 %v469
    %920 = vmatprep.subr.mxu0 0.0
    %921 = vmatpush1.msra.mxu0 %v468
    %922 = vmatprep.subr.mxu0 0.0
    %923 = vmatpush1.msra.mxu0 %v467
    %924 = vmatprep.subr.mxu0 0.0
    %925 = vmatpush1.msra.mxu0 %v466
    %926 = vmatprep.subr.mxu0 0.0
    %927 = vmatpush1.msra.mxu0 %v465
    %928 = vmatprep.subr.mxu0 0.0
    %929 = vmatpush1.msra.mxu0 %v464
    %930 = vmatprep.subr.mxu0 0.0
    %931 = vmatpush1.msra.mxu0 %v463
    %932 = vmatprep.subr.mxu0 0.0
    %933 = vmatpush1.msra.mxu0 %v462
    %934 = vmatprep.subr.mxu0 0.0
    %935 = vmatpush1.msra.mxu0 %v461
    %936 = vmatprep.subr.mxu0 0.0
    %937 = vmatpush1.msra.mxu0 %v460
    %938 = vmatprep.subr.mxu0 0.0
    %939 = vmatpush1.msra.mxu0 %v459
    %940 = vmatprep.subr.mxu0 0.0
    %941 = vmatpush1.msra.mxu0 %v458
    %942 = vmatprep.subr.mxu0 0.0
    %943 = vmatpush2.msra.mxu0 0.0
    %944 = vmatprep.subr.mxu0 0.0
    %945 = vmatpush2.msra.mxu0 0.0
    %946 = vmatprep.subr.mxu0 0.0
    %947 = vmatpush2.msra.mxu0 0.0
    %948 = vmatprep.subr.mxu0 0.0
    %949 = vmatpush2.msra.mxu0 0.0
    %950 = vmatprep.subr.mxu0 0.0
    %951 = vmatpush2.msra.mxu0 0.0
    %952 = vmatprep.subr.mxu0 0.0
    %953 = vmatpush2.msra.mxu0 0.0
    %954 = vmatprep.subr.mxu0 0.0
    %955 = vmatpush2.msra.mxu0 0.0
    %956 = vmatprep.subr.mxu0 0.0
    %957 = vmatpush2.msra.mxu0 0.0
    %958 = vmatprep.subr.mxu0 0.0
    %959 = vmatpush2.msra.mxu0 0.0
    %960 = vmatprep.subr.mxu0 0.0
    %961 = vmatpush2.msra.mxu0 0.0
    %962 = vmatprep.subr.mxu0 0.0
    %963 = vmatpush2.msra.mxu0 0.0
    %964 = vmatprep.subr.mxu0 0.0
    %965 = vmatpush2.msra.mxu0 0.0
    %966 = vmatprep.subr.mxu0 0.0
    %967 = vmatpush2.msra.mxu0 0.0
    %968 = vmatprep.subr.mxu0 0.0
    %969 = vmatpush2.msra.mxu0 0.0
    %970 = vmatprep.subr.mxu0 0.0
    %971 = vmatpush2.msra.mxu0 0.0
    %972 = vmatprep.subr.mxu0 0.0
    %973 = vmatpush2.msra.mxu0 0.0
    %974 = vmatprep.mubr.f32.mxu0 0.0
    %975 = vmatmul.mubr.f32.gmra.mxu0 %v908
    %v976 = vpop.f32.mrf.mxu0
    %v977 = vadd.f32 0.0, %v976
    %v978 = vpop.f32.mrf.mxu0
    %979 = vdwg.mxu0
    %v980 = vadd.f32 %v444, %v977
  $region18: #{gmae_forward.1} parent=0 // loop_footer
    %s443 = sadd.s32 1, %s439
  $region19: #{gmae_forward.1} parent=0 // loop_footer_branch
    %438 = sbr.rel target = $region15
  $region20: #{gmae_forward.1} parent=0 // loop_exit
    _
  %v981 = vld [vmem:[%s2 + $0x572] sm:$0x1]
  %v982 = vlaneseq
  %v983 = vshrl.u32 %v982, 7
  %v984 = vsub.s32 0, %v983
  %v985 = vrot.slane %v981, %v984
  %v986 = vadd.f32 %v444, %v985
  %v987 = vmax.f32 %v986, 0.0
  %v988 = vld [vmem:[%s2 + $0x530] sm:$0xff]
  %v989 = vld [vmem:[%s2 + $0x538] sm:$0xff]
  %v990 = vld [vmem:[%s2 + $0x540] sm:$0xff]
  %v991 = vld [vmem:[%s2 + $0x548] sm:$0xff]
  %v992 = vld [vmem:[%s2 + $0x58c] sm:$0x1]
  %v993 = vlaneseq
  %v994 = vshrl.u32 %v993, 7
  %v995 = vsub.s32 0, %v994
  %v996 = vrot.slane %v992, %v995
  %v997 = vadd.f32 %v987, %v996
  %v998 = vld [vmem:[%s2 + $0x230] sm:$0xff]
  %v999 = vld [vmem:[%s2 + $0x238] sm:$0xff]
  %v1000 = vld [vmem:[%s2 + $0x240] sm:$0xff]
  %v1001 = vld [vmem:[%s2 + $0x248] sm:$0xff]
  %v1002 = vld [vmem:[%s2 + $0x573] sm:$0x1]
  %v1003 = vlaneseq
  %v1004 = vshrl.u32 %v1003, 7
  %v1005 = vsub.s32 0, %v1004
  %v1006 = vrot.slane %v1002, %v1005
  %v1008 = vsel %vm177, %v997, 0
  %1010 = vmatprep.subr.mxu0 0.0
  %1011 = vmatpush1.msra.mxu0 0.0
  %1012 = vmatprep.subr.mxu0 0.0
  %1013 = vmatpush1.msra.mxu0 0.0
  %1014 = vmatprep.subr.mxu0 0.0
  %1015 = vmatpush1.msra.mxu0 0.0
  %1016 = vmatprep.subr.mxu0 0.0
  %1017 = vmatpush1.msra.mxu0 0.0
  %1018 = vmatprep.subr.mxu0 0.0
  %1019 = vmatpush1.msra.mxu0 0.0
  %1020 = vmatprep.subr.mxu0 0.0
  %1021 = vmatpush1.msra.mxu0 0.0
  %1022 = vmatprep.subr.mxu0 0.0
  %1023 = vmatpush1.msra.mxu0 0.0
  %1024 = vmatprep.subr.mxu0 0.0
  %1025 = vmatpush1.msra.mxu0 0.0
  %1026 = vmatprep.subr.mxu0 0.0
  %1027 = vmatpush1.msra.mxu0 0.0
  %1028 = vmatprep.subr.mxu0 0.0
  %1029 = vmatpush1.msra.mxu0 0.0
  %1030 = vmatprep.subr.mxu0 0.0
  %1031 = vmatpush1.msra.mxu0 0.0
  %1032 = vmatprep.subr.mxu0 0.0
  %1033 = vmatpush1.msra.mxu0 0.0
  %1034 = vmatprep.subr.mxu0 0.0
  %1035 = vmatpush1.msra.mxu0 %v1001
  %1036 = vmatprep.subr.mxu0 0.0
  %1037 = vmatpush1.msra.mxu0 %v1000
  %1038 = vmatprep.subr.mxu0 0.0
  %1039 = vmatpush1.msra.mxu0 %v999
  %1040 = vmatprep.subr.mxu0 0.0
  %1041 = vmatpush1.msra.mxu0 %v998
  %1042 = vmatprep.subr.mxu0 0.0
  %1043 = vmatpush2.msra.mxu0 0.0
  %1044 = vmatprep.subr.mxu0 0.0
  %1045 = vmatpush2.msra.mxu0 0.0
  %1046 = vmatprep.subr.mxu0 0.0
  %1047 = vmatpush2.msra.mxu0 0.0
  %1048 = vmatprep.subr.mxu0 0.0
  %1049 = vmatpush2.msra.mxu0 0.0
  %1050 = vmatprep.subr.mxu0 0.0
  %1051 = vmatpush2.msra.mxu0 0.0
  %1052 = vmatprep.subr.mxu0 0.0
  %1053 = vmatpush2.msra.mxu0 0.0
  %1054 = vmatprep.subr.mxu0 0.0
  %1055 = vmatpush2.msra.mxu0 0.0
  %1056 = vmatprep.subr.mxu0 0.0
  %1057 = vmatpush2.msra.mxu0 0.0
  %1058 = vmatprep.subr.mxu0 0.0
  %1059 = vmatpush2.msra.mxu0 0.0
  %1060 = vmatprep.subr.mxu0 0.0
  %1061 = vmatpush2.msra.mxu0 0.0
  %1062 = vmatprep.subr.mxu0 0.0
  %1063 = vmatpush2.msra.mxu0 0.0
  %1064 = vmatprep.subr.mxu0 0.0
  %1065 = vmatpush2.msra.mxu0 0.0
  %1066 = vmatprep.subr.mxu0 0.0
  %1067 = vmatpush2.msra.mxu0 0.0
  %1068 = vmatprep.subr.mxu0 0.0
  %1069 = vmatpush2.msra.mxu0 0.0
  %1070 = vmatprep.subr.mxu0 0.0
  %1071 = vmatpush2.msra.mxu0 0.0
  %1072 = vmatprep.subr.mxu0 0.0
  %1073 = vmatpush2.msra.mxu0 0.0
  %1074 = vmatprep.mubr.f32.mxu0 0.0
  %1075 = vmatmul.mubr.f32.gmra.mxu0 %v1008
  %v1076 = vpop.f32.mrf.mxu0
  %v1077 = vadd.f32 %v1006, %v1076
  %v1078 = vpop.f32.mrf.mxu0
  %1079 = vdwg.mxu0
  %v1080 = vadd.f32 %v997, %v1077
  %v1081 = vld [vmem:[%s2 + $0x577] sm:$0x1]
  %v1082 = vld [vmem:[%s2 + $0x57b] sm:$0x1]
  %v1084 = vsel %vm177, %v1080, 0
  %1086 = vmatprep.subr.mxu0 0.0
  %1087 = vmatpush1.msra.mxu0 0.0
  %1088 = vmatprep.subr.mxu0 0.0
  %1089 = vmatpush1.msra.mxu0 0.0
  %1090 = vmatprep.subr.mxu0 0.0
  %1091 = vmatpush1.msra.mxu0 0.0
  %1092 = vmatprep.subr.mxu0 0.0
  %1093 = vmatpush1.msra.mxu0 0.0
  %1094 = vmatprep.subr.mxu0 0.0
  %1095 = vmatpush1.msra.mxu0 0.0
  %1096 = vmatprep.subr.mxu0 0.0
  %1097 = vmatpush1.msra.mxu0 0.0
  %1098 = vmatprep.subr.mxu0 0.0
  %1099 = vmatpush1.msra.mxu0 0.0
  %1100 = vmatprep.subr.mxu0 0.0
  %1101 = vmatpush1.msra.mxu0 0.0
  %1102 = vmatprep.subr.mxu0 0.0
  %1103 = vmatpush1.msra.mxu0 0.0
  %1104 = vmatprep.subr.mxu0 0.0
  %1105 = vmatpush1.msra.mxu0 0.0
  %1106 = vmatprep.subr.mxu0 0.0
  %1107 = vmatpush1.msra.mxu0 0.0
  %1108 = vmatprep.subr.mxu0 0.0
  %1109 = vmatpush1.msra.mxu0 0.0
  %1110 = vmatprep.subr.mxu0 0.0
  %1111 = vmatpush1.msra.mxu0 %v991
  %1112 = vmatprep.subr.mxu0 0.0
  %1113 = vmatpush1.msra.mxu0 %v990
  %1114 = vmatprep.subr.mxu0 0.0
  %1115 = vmatpush1.msra.mxu0 %v989
  %1116 = vmatprep.subr.mxu0 0.0
  %1117 = vmatpush1.msra.mxu0 %v988
  %1118 = vmatprep.subr.mxu0 0.0
  %1119 = vmatpush2.msra.mxu0 0.0
  %1120 = vmatprep.subr.mxu0 0.0
  %1121 = vmatpush2.msra.mxu0 0.0
  %1122 = vmatprep.subr.mxu0 0.0
  %1123 = vmatpush2.msra.mxu0 0.0
  %1124 = vmatprep.subr.mxu0 0.0
  %1125 = vmatpush2.msra.mxu0 0.0
  %1126 = vmatprep.subr.mxu0 0.0
  %1127 = vmatpush2.msra.mxu0 0.0
  %1128 = vmatprep.subr.mxu0 0.0
  %1129 = vmatpush2.msra.mxu0 0.0
  %1130 = vmatprep.subr.mxu0 0.0
  %1131 = vmatpush2.msra.mxu0 0.0
  %1132 = vmatprep.subr.mxu0 0.0
  %1133 = vmatpush2.msra.mxu0 0.0
  %1134 = vmatprep.subr.mxu0 0.0
  %1135 = vmatpush2.msra.mxu0 0.0
  %1136 = vmatprep.subr.mxu0 0.0
  %1137 = vmatpush2.msra.mxu0 0.0
  %1138 = vmatprep.subr.mxu0 0.0
  %1139 = vmatpush2.msra.mxu0 0.0
  %1140 = vmatprep.subr.mxu0 0.0
  %1141 = vmatpush2.msra.mxu0 0.0
  %1142 = vmatprep.subr.mxu0 0.0
  %1143 = vmatpush2.msra.mxu0 0.0
  %1144 = vmatprep.subr.mxu0 0.0
  %1145 = vmatpush2.msra.mxu0 0.0
  %1146 = vmatprep.subr.mxu0 0.0
  %1147 = vmatpush2.msra.mxu0 0.0
  %1148 = vmatprep.subr.mxu0 0.0
  %1149 = vmatpush2.msra.mxu0 0.0
  %1150 = vmatprep.mubr.f32.mxu0 0.0
  %1151 = vmatmul.mubr.f32.gmra.mxu0 %v1084
  %v1152 = vpop.f32.mrf.mxu0
  %v1153 = vadd.f32 0.0, %v1152
  %v1154 = vpop.f32.mrf.mxu0
  %1155 = vdwg.mxu0
  %v1156 = vsub.f32 %v1080, %v1153
  %v1157 = vmul.f32 %v1156, %v1156
  %v1159 = vsel %vm177, %v1157, 0
  %1161 = vmatprep.subr.mxu0 0.0
  %1162 = vmatpush1.msra.mxu0 0.0
  %1163 = vmatprep.subr.mxu0 0.0
  %1164 = vmatpush1.msra.mxu0 0.0
  %1165 = vmatprep.subr.mxu0 0.0
  %1166 = vmatpush1.msra.mxu0 0.0
  %1167 = vmatprep.subr.mxu0 0.0
  %1168 = vmatpush1.msra.mxu0 0.0
  %1169 = vmatprep.subr.mxu0 0.0
  %1170 = vmatpush1.msra.mxu0 0.0
  %1171 = vmatprep.subr.mxu0 0.0
  %1172 = vmatpush1.msra.mxu0 0.0
  %1173 = vmatprep.subr.mxu0 0.0
  %1174 = vmatpush1.msra.mxu0 0.0
  %1175 = vmatprep.subr.mxu0 0.0
  %1176 = vmatpush1.msra.mxu0 0.0
  %1177 = vmatprep.subr.mxu0 0.0
  %1178 = vmatpush1.msra.mxu0 0.0
  %1179 = vmatprep.subr.mxu0 0.0
  %1180 = vmatpush1.msra.mxu0 0.0
  %1181 = vmatprep.subr.mxu0 0.0
  %1182 = vmatpush1.msra.mxu0 0.0
  %1183 = vmatprep.subr.mxu0 0.0
  %1184 = vmatpush1.msra.mxu0 0.0
  %1185 = vmatprep.subr.mxu0 0.0
  %1186 = vmatpush1.msra.mxu0 %v991
  %1187 = vmatprep.subr.mxu0 0.0
  %1188 = vmatpush1.msra.mxu0 %v990
  %1189 = vmatprep.subr.mxu0 0.0
  %1190 = vmatpush1.msra.mxu0 %v989
  %1191 = vmatprep.subr.mxu0 0.0
  %1192 = vmatpush1.msra.mxu0 %v988
  %1193 = vmatprep.subr.mxu0 0.0
  %1194 = vmatpush2.msra.mxu0 0.0
  %1195 = vmatprep.subr.mxu0 0.0
  %1196 = vmatpush2.msra.mxu0 0.0
  %1197 = vmatprep.subr.mxu0 0.0
  %1198 = vmatpush2.msra.mxu0 0.0
  %1199 = vmatprep.subr.mxu0 0.0
  %1200 = vmatpush2.msra.mxu0 0.0
  %1201 = vmatprep.subr.mxu0 0.0
  %1202 = vmatpush2.msra.mxu0 0.0
  %1203 = vmatprep.subr.mxu0 0.0
  %1204 = vmatpush2.msra.mxu0 0.0
  %1205 = vmatprep.subr.mxu0 0.0
  %1206 = vmatpush2.msra.mxu0 0.0
  %1207 = vmatprep.subr.mxu0 0.0
  %1208 = vmatpush2.msra.mxu0 0.0
  %1209 = vmatprep.subr.mxu0 0.0
  %1210 = vmatpush2.msra.mxu0 0.0
  %1211 = vmatprep.subr.mxu0 0.0
  %1212 = vmatpush2.msra.mxu0 0.0
  %1213 = vmatprep.subr.mxu0 0.0
  %1214 = vmatpush2.msra.mxu0 0.0
  %1215 = vmatprep.subr.mxu0 0.0
  %1216 = vmatpush2.msra.mxu0 0.0
  %1217 = vmatprep.subr.mxu0 0.0
  %1218 = vmatpush2.msra.mxu0 0.0
  %1219 = vmatprep.subr.mxu0 0.0
  %1220 = vmatpush2.msra.mxu0 0.0
  %1221 = vmatprep.subr.mxu0 0.0
  %1222 = vmatpush2.msra.mxu0 0.0
  %1223 = vmatprep.subr.mxu0 0.0
  %1224 = vmatpush2.msra.mxu0 0.0
  %1225 = vmatprep.mubr.f32.mxu0 0.0
  %1226 = vmatmul.mubr.f32.gmra.mxu0 %v1159
  %v1227 = vpop.f32.mrf.mxu0
  %v1228 = vadd.f32 1e-05, %v1227
  %v1229 = vpop.f32.mrf.mxu0
  %1230 = vdwg.mxu0
  %v1231 = vrsqrt.pop %v1228
  %v1232 = vmul.f32 %v1156, %v1231
  %v1233 = vlaneseq
  %v1234 = vshrl.u32 %v1233, 7
  %v1235 = vsub.s32 0, %v1234
  %v1236 = vrot.slane %v1081, %v1235
  %v1237 = vmul.f32 %v1232, %v1236
  %v1238 = vlaneseq
  %v1239 = vshrl.u32 %v1238, 7
  %v1240 = vsub.s32 0, %v1239
  %v1241 = vrot.slane %v1082, %v1240
  %v1242 = vadd.f32 %v1237, %v1241
  %v1243 = vld [vmem:[%s1 + $0x94] sm:$0xff]
  %v1244 = vld [vmem:[%s1 + $0x9c] sm:$0xff]
  %v1245 = vld [vmem:[%s1 + $0xa4] sm:$0xff]
  %v1246 = vld [vmem:[%s1 + $0xac] sm:$0xff]
  %v1247 = vld [vmem:[%s1 + $0x114] sm:$0x1]
  %v1248 = vlaneseq
  %v1249 = vshrl.u32 %v1248, 7
  %v1250 = vsub.s32 0, %v1249
  %v1251 = vrot.slane %v1247, %v1250
  %v1253 = vsel %vm177, %v1242, 0
  %1255 = vmatprep.subr.mxu0 0.0
  %1256 = vmatpush1.msra.mxu0 0.0
  %1257 = vmatprep.subr.mxu0 0.0
  %1258 = vmatpush1.msra.mxu0 0.0
  %1259 = vmatprep.subr.mxu0 0.0
  %1260 = vmatpush1.msra.mxu0 0.0
  %1261 = vmatprep.subr.mxu0 0.0
  %1262 = vmatpush1.msra.mxu0 0.0
  %1263 = vmatprep.subr.mxu0 0.0
  %1264 = vmatpush1.msra.mxu0 0.0
  %1265 = vmatprep.subr.mxu0 0.0
  %1266 = vmatpush1.msra.mxu0 0.0
  %1267 = vmatprep.subr.mxu0 0.0
  %1268 = vmatpush1.msra.mxu0 0.0
  %1269 = vmatprep.subr.mxu0 0.0
  %1270 = vmatpush1.msra.mxu0 0.0
  %1271 = vmatprep.subr.mxu0 0.0
  %1272 = vmatpush1.msra.mxu0 0.0
  %1273 = vmatprep.subr.mxu0 0.0
  %1274 = vmatpush1.msra.mxu0 0.0
  %1275 = vmatprep.subr.mxu0 0.0
  %1276 = vmatpush1.msra.mxu0 0.0
  %1277 = vmatprep.subr.mxu0 0.0
  %1278 = vmatpush1.msra.mxu0 0.0
  %1279 = vmatprep.subr.mxu0 0.0
  %1280 = vmatpush1.msra.mxu0 %v1246
  %1281 = vmatprep.subr.mxu0 0.0
  %1282 = vmatpush1.msra.mxu0 %v1245
  %1283 = vmatprep.subr.mxu0 0.0
  %1284 = vmatpush1.msra.mxu0 %v1244
  %1285 = vmatprep.subr.mxu0 0.0
  %1286 = vmatpush1.msra.mxu0 %v1243
  %1287 = vmatprep.subr.mxu0 0.0
  %1288 = vmatpush2.msra.mxu0 0.0
  %1289 = vmatprep.subr.mxu0 0.0
  %1290 = vmatpush2.msra.mxu0 0.0
  %1291 = vmatprep.subr.mxu0 0.0
  %1292 = vmatpush2.msra.mxu0 0.0
  %1293 = vmatprep.subr.mxu0 0.0
  %1294 = vmatpush2.msra.mxu0 0.0
  %1295 = vmatprep.subr.mxu0 0.0
  %1296 = vmatpush2.msra.mxu0 0.0
  %1297 = vmatprep.subr.mxu0 0.0
  %1298 = vmatpush2.msra.mxu0 0.0
  %1299 = vmatprep.subr.mxu0 0.0
  %1300 = vmatpush2.msra.mxu0 0.0
  %1301 = vmatprep.subr.mxu0 0.0
  %1302 = vmatpush2.msra.mxu0 0.0
  %1303 = vmatprep.subr.mxu0 0.0
  %1304 = vmatpush2.msra.mxu0 0.0
  %1305 = vmatprep.subr.mxu0 0.0
  %1306 = vmatpush2.msra.mxu0 0.0
  %1307 = vmatprep.subr.mxu0 0.0
  %1308 = vmatpush2.msra.mxu0 0.0
  %1309 = vmatprep.subr.mxu0 0.0
  %1310 = vmatpush2.msra.mxu0 0.0
  %1311 = vmatprep.subr.mxu0 0.0
  %1312 = vmatpush2.msra.mxu0 0.0
  %1313 = vmatprep.subr.mxu0 0.0
  %1314 = vmatpush2.msra.mxu0 0.0
  %1315 = vmatprep.subr.mxu0 0.0
  %1316 = vmatpush2.msra.mxu0 0.0
  %1317 = vmatprep.subr.mxu0 0.0
  %1318 = vmatpush2.msra.mxu0 0.0
  %1319 = vmatprep.mubr.f32.mxu0 0.0
  %1320 = vmatmul.mubr.f32.gmra.mxu0 %v1253
  %v1321 = vpop.f32.mrf.mxu0
  %v1322 = vadd.f32 %v1251, %v1321
  %v1323 = vpop.f32.mrf.mxu0
  %1324 = vdwg.mxu0
  %v1325 = vmul.f32 %v1322, 0.5
  %v1326 = vmul.f32 %v1322, 0.044715
  %v1327 = vmul.f32 %v1326, %v1322
  %v1328 = vmul.f32 %v1327, %v1322
  %v1329 = vadd.f32 %v1322, %v1328
  %v1330 = vmul.f32 %v1329, 0.7978846
  %v1331 = vtanh.pop %v1330
  %v1332 = vadd.f32 %v1331, 1.0
  %v1333 = vmul.f32 %v1325, %v1332
  %v1334 = vld [vmem:[%s2 + $0x2b0] sm:$0xff]
  %v1335 = vld [vmem:[%s2 + $0x2b8] sm:$0xff]
  %v1336 = vld [vmem:[%s2 + $0x2c0] sm:$0xff]
  %v1337 = vld [vmem:[%s2 + $0x2c8] sm:$0xff]
  %v1338 = vld [vmem:[%s2 + $0x2d0] sm:$0xff]
  %v1339 = vld [vmem:[%s2 + $0x2d8] sm:$0xff]
  %v1340 = vld [vmem:[%s2 + $0x2e0] sm:$0xff]
  %v1341 = vld [vmem:[%s2 + $0x2e8] sm:$0xff]
  %v1342 = vld [vmem:[%s2 + $0x2f0] sm:$0xff]
  %v1343 = vld [vmem:[%s2 + $0x2f8] sm:$0xff]
  %v1344 = vld [vmem:[%s2 + $0x300] sm:$0xff]
  %v1345 = vld [vmem:[%s2 + $0x308] sm:$0xff]
  %v1346 = vld [vmem:[%s2 + $0x310] sm:$0xff]
  %v1347 = vld [vmem:[%s2 + $0x318] sm:$0xff]
  %v1348 = vld [vmem:[%s2 + $0x320] sm:$0xff]
  %v1349 = vld [vmem:[%s2 + $0x328] sm:$0xff]
  %v1350 = vld [vmem:[%s2 + $0x57f] sm:$0x1]
  %v1351 = vlaneseq
  %v1352 = vshrl.u32 %v1351, 7
  %v1353 = vsub.s32 0, %v1352
  %v1354 = vrot.slane %v1350, %v1353
  %1355 = vmatprep.subr.mxu0 0.0
  %1356 = vmatpush1.msra.mxu0 %v1349
  %1357 = vmatprep.subr.mxu0 0.0
  %1358 = vmatpush1.msra.mxu0 %v1348
  %1359 = vmatprep.subr.mxu0 0.0
  %1360 = vmatpush1.msra.mxu0 %v1347
  %1361 = vmatprep.subr.mxu0 0.0
  %1362 = vmatpush1.msra.mxu0 %v1346
  %1363 = vmatprep.subr.mxu0 0.0
  %1364 = vmatpush1.msra.mxu0 %v1345
  %1365 = vmatprep.subr.mxu0 0.0
  %1366 = vmatpush1.msra.mxu0 %v1344
  %1367 = vmatprep.subr.mxu0 0.0
  %1368 = vmatpush1.msra.mxu0 %v1343
  %1369 = vmatprep.subr.mxu0 0.0
  %1370 = vmatpush1.msra.mxu0 %v1342
  %1371 = vmatprep.subr.mxu0 0.0
  %1372 = vmatpush1.msra.mxu0 %v1341
  %1373 = vmatprep.subr.mxu0 0.0
  %1374 = vmatpush1.msra.mxu0 %v1340
  %1375 = vmatprep.subr.mxu0 0.0
  %1376 = vmatpush1.msra.mxu0 %v1339
  %1377 = vmatprep.subr.mxu0 0.0
  %1378 = vmatpush1.msra.mxu0 %v1338
  %1379 = vmatprep.subr.mxu0 0.0
  %1380 = vmatpush1.msra.mxu0 %v1337
  %1381 = vmatprep.subr.mxu0 0.0
  %1382 = vmatpush1.msra.mxu0 %v1336
  %1383 = vmatprep.subr.mxu0 0.0
  %1384 = vmatpush1.msra.mxu0 %v1335
  %1385 = vmatprep.subr.mxu0 0.0
  %1386 = vmatpush1.msra.mxu0 %v1334
  %1387 = vmatprep.subr.mxu0 0.0
  %1388 = vmatpush2.msra.mxu0 0.0
  %1389 = vmatprep.subr.mxu0 0.0
  %1390 = vmatpush2.msra.mxu0 0.0
  %1391 = vmatprep.subr.mxu0 0.0
  %1392 = vmatpush2.msra.mxu0 0.0
  %1393 = vmatprep.subr.mxu0 0.0
  %1394 = vmatpush2.msra.mxu0 0.0
  %1395 = vmatprep.subr.mxu0 0.0
  %1396 = vmatpush2.msra.mxu0 0.0
  %1397 = vmatprep.subr.mxu0 0.0
  %1398 = vmatpush2.msra.mxu0 0.0
  %1399 = vmatprep.subr.mxu0 0.0
  %1400 = vmatpush2.msra.mxu0 0.0
  %1401 = vmatprep.subr.mxu0 0.0
  %1402 = vmatpush2.msra.mxu0 0.0
  %1403 = vmatprep.subr.mxu0 0.0
  %1404 = vmatpush2.msra.mxu0 0.0
  %1405 = vmatprep.subr.mxu0 0.0
  %1406 = vmatpush2.msra.mxu0 0.0
  %1407 = vmatprep.subr.mxu0 0.0
  %1408 = vmatpush2.msra.mxu0 0.0
  %1409 = vmatprep.subr.mxu0 0.0
  %1410 = vmatpush2.msra.mxu0 0.0
  %1411 = vmatprep.subr.mxu0 0.0
  %1412 = vmatpush2.msra.mxu0 0.0
  %1413 = vmatprep.subr.mxu0 0.0
  %1414 = vmatpush2.msra.mxu0 0.0
  %1415 = vmatprep.subr.mxu0 0.0
  %1416 = vmatpush2.msra.mxu0 0.0
  %1417 = vmatprep.subr.mxu0 0.0
  %1418 = vmatpush2.msra.mxu0 0.0
  %1419 = vmatprep.mubr.f32.mxu0 0.0
  %1420 = vmatmul.mubr.f32.gmra.mxu0 %v1333
  %v1421 = vpop.f32.mrf.mxu0
  %v1422 = vadd.f32 %v1354, %v1421
  %v1423 = vpop.f32.mrf.mxu0
  %1424 = vdwg.mxu0
  %v1425 = vadd.f32 %v1242, %v1422
  %v1426 = vld [vmem:[%s2 + $0x583] sm:$0x1]
  %v1427 = vld [vmem:[%s2 + $0x587] sm:$0x1]
  %v1429 = vsel %vm177, %v1425, 0
  %1431 = vmatprep.subr.mxu0 0.0
  %1432 = vmatpush1.msra.mxu0 0.0
  %1433 = vmatprep.subr.mxu0 0.0
  %1434 = vmatpush1.msra.mxu0 0.0
  %1435 = vmatprep.subr.mxu0 0.0
  %1436 = vmatpush1.msra.mxu0 0.0
  %1437 = vmatprep.subr.mxu0 0.0
  %1438 = vmatpush1.msra.mxu0 0.0
  %1439 = vmatprep.subr.mxu0 0.0
  %1440 = vmatpush1.msra.mxu0 0.0
  %1441 = vmatprep.subr.mxu0 0.0
  %1442 = vmatpush1.msra.mxu0 0.0
  %1443 = vmatprep.subr.mxu0 0.0
  %1444 = vmatpush1.msra.mxu0 0.0
  %1445 = vmatprep.subr.mxu0 0.0
  %1446 = vmatpush1.msra.mxu0 0.0
  %1447 = vmatprep.subr.mxu0 0.0
  %1448 = vmatpush1.msra.mxu0 0.0
  %1449 = vmatprep.subr.mxu0 0.0
  %1450 = vmatpush1.msra.mxu0 0.0
  %1451 = vmatprep.subr.mxu0 0.0
  %1452 = vmatpush1.msra.mxu0 0.0
  %1453 = vmatprep.subr.mxu0 0.0
  %1454 = vmatpush1.msra.mxu0 0.0
  %1455 = vmatprep.subr.mxu0 0.0
  %1456 = vmatpush1.msra.mxu0 %v991
  %1457 = vmatprep.subr.mxu0 0.0
  %1458 = vmatpush1.msra.mxu0 %v990
  %1459 = vmatprep.subr.mxu0 0.0
  %1460 = vmatpush1.msra.mxu0 %v989
  %1461 = vmatprep.subr.mxu0 0.0
  %1462 = vmatpush1.msra.mxu0 %v988
  %1463 = vmatprep.subr.mxu0 0.0
  %1464 = vmatpush2.msra.mxu0 0.0
  %1465 = vmatprep.subr.mxu0 0.0
  %1466 = vmatpush2.msra.mxu0 0.0
  %1467 = vmatprep.subr.mxu0 0.0
  %1468 = vmatpush2.msra.mxu0 0.0
  %1469 = vmatprep.subr.mxu0 0.0
  %1470 = vmatpush2.msra.mxu0 0.0
  %1471 = vmatprep.subr.mxu0 0.0
  %1472 = vmatpush2.msra.mxu0 0.0
  %1473 = vmatprep.subr.mxu0 0.0
  %1474 = vmatpush2.msra.mxu0 0.0
  %1475 = vmatprep.subr.mxu0 0.0
  %1476 = vmatpush2.msra.mxu0 0.0
  %1477 = vmatprep.subr.mxu0 0.0
  %1478 = vmatpush2.msra.mxu0 0.0
  %1479 = vmatprep.subr.mxu0 0.0
  %1480 = vmatpush2.msra.mxu0 0.0
  %1481 = vmatprep.subr.mxu0 0.0
  %1482 = vmatpush2.msra.mxu0 0.0
  %1483 = vmatprep.subr.mxu0 0.0
  %1484 = vmatpush2.msra.mxu0 0.0
  %1485 = vmatprep.subr.mxu0 0.0
  %1486 = vmatpush2.msra.mxu0 0.0
  %1487 = vmatprep.subr.mxu0 0.0
  %1488 = vmatpush2.msra.mxu0 0.0
  %1489 = vmatprep.subr.mxu0 0.0
  %1490 = vmatpush2.msra.mxu0 0.0
  %1491 = vmatprep.subr.mxu0 0.0
  %1492 = vmatpush2.msra.mxu0 0.0
  %1493 = vmatprep.subr.mxu0 0.0
  %1494 = vmatpush2.msra.mxu0 0.0
  %1495 = vmatprep.mubr.f32.mxu0 0.0
  %1496 = vmatmul.mubr.f32.gmra.mxu0 %v1429
  %v1497 = vpop.f32.mrf.mxu0
  %v1498 = vadd.f32 0.0, %v1497
  %v1499 = vpop.f32.mrf.mxu0
  %1500 = vdwg.mxu0
  %v1501 = vsub.f32 %v1425, %v1498
  %v1502 = vmul.f32 %v1501, %v1501
  %v1504 = vsel %vm177, %v1502, 0
  %1506 = vmatprep.subr.mxu0 0.0
  %1507 = vmatpush1.msra.mxu0 0.0
  %1508 = vmatprep.subr.mxu0 0.0
  %1509 = vmatpush1.msra.mxu0 0.0
  %1510 = vmatprep.subr.mxu0 0.0
  %1511 = vmatpush1.msra.mxu0 0.0
  %1512 = vmatprep.subr.mxu0 0.0
  %1513 = vmatpush1.msra.mxu0 0.0
  %1514 = vmatprep.subr.mxu0 0.0
  %1515 = vmatpush1.msra.mxu0 0.0
  %1516 = vmatprep.subr.mxu0 0.0
  %1517 = vmatpush1.msra.mxu0 0.0
  %1518 = vmatprep.subr.mxu0 0.0
  %1519 = vmatpush1.msra.mxu0 0.0
  %1520 = vmatprep.subr.mxu0 0.0
  %1521 = vmatpush1.msra.mxu0 0.0
  %1522 = vmatprep.subr.mxu0 0.0
  %1523 = vmatpush1.msra.mxu0 0.0
  %1524 = vmatprep.subr.mxu0 0.0
  %1525 = vmatpush1.msra.mxu0 0.0
  %1526 = vmatprep.subr.mxu0 0.0
  %1527 = vmatpush1.msra.mxu0 0.0
  %1528 = vmatprep.subr.mxu0 0.0
  %1529 = vmatpush1.msra.mxu0 0.0
  %1530 = vmatprep.subr.mxu0 0.0
  %1531 = vmatpush1.msra.mxu0 %v991
  %1532 = vmatprep.subr.mxu0 0.0
  %1533 = vmatpush1.msra.mxu0 %v990
  %1534 = vmatprep.subr.mxu0 0.0
  %1535 = vmatpush1.msra.mxu0 %v989
  %1536 = vmatprep.subr.mxu0 0.0
  %1537 = vmatpush1.msra.mxu0 %v988
  %1538 = vmatprep.subr.mxu0 0.0
  %1539 = vmatpush2.msra.mxu0 0.0
  %1540 = vmatprep.subr.mxu0 0.0
  %1541 = vmatpush2.msra.mxu0 0.0
  %1542 = vmatprep.subr.mxu0 0.0
  %1543 = vmatpush2.msra.mxu0 0.0
  %1544 = vmatprep.subr.mxu0 0.0
  %1545 = vmatpush2.msra.mxu0 0.0
  %1546 = vmatprep.subr.mxu0 0.0
  %1547 = vmatpush2.msra.mxu0 0.0
  %1548 = vmatprep.subr.mxu0 0.0
  %1549 = vmatpush2.msra.mxu0 0.0
  %1550 = vmatprep.subr.mxu0 0.0
  %1551 = vmatpush2.msra.mxu0 0.0
  %1552 = vmatprep.subr.mxu0 0.0
  %1553 = vmatpush2.msra.mxu0 0.0
  %1554 = vmatprep.subr.mxu0 0.0
  %1555 = vmatpush2.msra.mxu0 0.0
  %1556 = vmatprep.subr.mxu0 0.0
  %1557 = vmatpush2.msra.mxu0 0.0
  %1558 = vmatprep.subr.mxu0 0.0
  %1559 = vmatpush2.msra.mxu0 0.0
  %1560 = vmatprep.subr.mxu0 0.0
  %1561 = vmatpush2.msra.mxu0 0.0
  %1562 = vmatprep.subr.mxu0 0.0
  %1563 = vmatpush2.msra.mxu0 0.0
  %1564 = vmatprep.subr.mxu0 0.0
  %1565 = vmatpush2.msra.mxu0 0.0
  %1566 = vmatprep.subr.mxu0 0.0
  %1567 = vmatpush2.msra.mxu0 0.0
  %1568 = vmatprep.subr.mxu0 0.0
  %1569 = vmatpush2.msra.mxu0 0.0
  %1570 = vmatprep.mubr.f32.mxu0 0.0
  %1571 = vmatmul.mubr.f32.gmra.mxu0 %v1504
  %v1572 = vpop.f32.mrf.mxu0
  %v1573 = vadd.f32 1e-05, %v1572
  %v1574 = vpop.f32.mrf.mxu0
  %1575 = vdwg.mxu0
  %v1576 = vrsqrt.pop %v1573
  %v1577 = vmul.f32 %v1501, %v1576
  %v1578 = vlaneseq
  %v1579 = vshrl.u32 %v1578, 7
  %v1580 = vsub.s32 0, %v1579
  %v1581 = vrot.slane %v1426, %v1580
  %v1582 = vmul.f32 %v1577, %v1581
  %v1583 = vlaneseq
  %v1584 = vshrl.u32 %v1583, 7
  %v1585 = vsub.s32 0, %v1584
  %v1586 = vrot.slane %v1427, %v1585
  %v1587 = vadd.f32 %v1582, %v1586
  %v1588 = vld [vmem:[%s2 + $0x250] sm:$0xff]
  %v1589 = vld [vmem:[%s2 + $0x258] sm:$0xff]
  %v1590 = vld [vmem:[%s2 + $0x260] sm:$0xff]
  %v1591 = vld [vmem:[%s2 + $0x268] sm:$0xff]
  %v1592 = vld [vmem:[%s2 + $0x574] sm:$0x1]
  %v1593 = vlaneseq
  %v1594 = vshrl.u32 %v1593, 7
  %v1595 = vsub.s32 0, %v1594
  %v1596 = vrot.slane %v1592, %v1595
  %v1598 = vsel %vm177, %v1587, 0
  %1600 = vmatprep.subr.mxu0 0.0
  %1601 = vmatpush1.msra.mxu0 0.0
  %1602 = vmatprep.subr.mxu0 0.0
  %1603 = vmatpush1.msra.mxu0 0.0
  %1604 = vmatprep.subr.mxu0 0.0
  %1605 = vmatpush1.msra.mxu0 0.0
  %1606 = vmatprep.subr.mxu0 0.0
  %1607 = vmatpush1.msra.mxu0 0.0
  %1608 = vmatprep.subr.mxu0 0.0
  %1609 = vmatpush1.msra.mxu0 0.0
  %1610 = vmatprep.subr.mxu0 0.0
  %1611 = vmatpush1.msra.mxu0 0.0
  %1612 = vmatprep.subr.mxu0 0.0
  %1613 = vmatpush1.msra.mxu0 0.0
  %1614 = vmatprep.subr.mxu0 0.0
  %1615 = vmatpush1.msra.mxu0 0.0
  %1616 = vmatprep.subr.mxu0 0.0
  %1617 = vmatpush1.msra.mxu0 0.0
  %1618 = vmatprep.subr.mxu0 0.0
  %1619 = vmatpush1.msra.mxu0 0.0
  %1620 = vmatprep.subr.mxu0 0.0
  %1621 = vmatpush1.msra.mxu0 0.0
  %1622 = vmatprep.subr.mxu0 0.0
  %1623 = vmatpush1.msra.mxu0 0.0
  %1624 = vmatprep.subr.mxu0 0.0
  %1625 = vmatpush1.msra.mxu0 %v1591
  %1626 = vmatprep.subr.mxu0 0.0
  %1627 = vmatpush1.msra.mxu0 %v1590
  %1628 = vmatprep.subr.mxu0 0.0
  %1629 = vmatpush1.msra.mxu0 %v1589
  %1630 = vmatprep.subr.mxu0 0.0
  %1631 = vmatpush1.msra.mxu0 %v1588
  %1632 = vmatprep.subr.mxu0 0.0
  %1633 = vmatpush2.msra.mxu0 0.0
  %1634 = vmatprep.subr.mxu0 0.0
  %1635 = vmatpush2.msra.mxu0 0.0
  %1636 = vmatprep.subr.mxu0 0.0
  %1637 = vmatpush2.msra.mxu0 0.0
  %1638 = vmatprep.subr.mxu0 0.0
  %1639 = vmatpush2.msra.mxu0 0.0
  %1640 = vmatprep.subr.mxu0 0.0
  %1641 = vmatpush2.msra.mxu0 0.0
  %1642 = vmatprep.subr.mxu0 0.0
  %1643 = vmatpush2.msra.mxu0 0.0
  %1644 = vmatprep.subr.mxu0 0.0
  %1645 = vmatpush2.msra.mxu0 0.0
  %1646 = vmatprep.subr.mxu0 0.0
  %1647 = vmatpush2.msra.mxu0 0.0
  %1648 = vmatprep.subr.mxu0 0.0
  %1649 = vmatpush2.msra.mxu0 0.0
  %1650 = vmatprep.subr.mxu0 0.0
  %1651 = vmatpush2.msra.mxu0 0.0
  %1652 = vmatprep.subr.mxu0 0.0
  %1653 = vmatpush2.msra.mxu0 0.0
  %1654 = vmatprep.subr.mxu0 0.0
  %1655 = vmatpush2.msra.mxu0 0.0
  %1656 = vmatprep.subr.mxu0 0.0
  %1657 = vmatpush2.msra.mxu0 0.0
  %1658 = vmatprep.subr.mxu0 0.0
  %1659 = vmatpush2.msra.mxu0 0.0
  %1660 = vmatprep.subr.mxu0 0.0
  %1661 = vmatpush2.msra.mxu0 0.0
  %1662 = vmatprep.subr.mxu0 0.0
  %1663 = vmatpush2.msra.mxu0 0.0
  %1664 = vmatprep.mubr.f32.mxu0 0.0
  %1665 = vmatmul.mubr.f32.gmra.mxu0 %v1598
  %v1666 = vpop.f32.mrf.mxu0
  %v1667 = vadd.f32 %v1596, %v1666
  %v1668 = vpop.f32.mrf.mxu0
  %1669 = vdwg.mxu0
  %v1670 = vadd.f32 %v1587, %v1667
  %v1671 = vld [vmem:[%s2 + $0x578] sm:$0x1]
  %v1672 = vld [vmem:[%s2 + $0x57c] sm:$0x1]
  %v1674 = vsel %vm177, %v1670, 0
  %1676 = vmatprep.subr.mxu0 0.0
  %1677 = vmatpush1.msra.mxu0 0.0
  %1678 = vmatprep.subr.mxu0 0.0
  %1679 = vmatpush1.msra.mxu0 0.0
  %1680 = vmatprep.subr.mxu0 0.0
  %1681 = vmatpush1.msra.mxu0 0.0
  %1682 = vmatprep.subr.mxu0 0.0
  %1683 = vmatpush1.msra.mxu0 0.0
  %1684 = vmatprep.subr.mxu0 0.0
  %1685 = vmatpush1.msra.mxu0 0.0
  %1686 = vmatprep.subr.mxu0 0.0
  %1687 = vmatpush1.msra.mxu0 0.0
  %1688 = vmatprep.subr.mxu0 0.0
  %1689 = vmatpush1.msra.mxu0 0.0
  %1690 = vmatprep.subr.mxu0 0.0
  %1691 = vmatpush1.msra.mxu0 0.0
  %1692 = vmatprep.subr.mxu0 0.0
  %1693 = vmatpush1.msra.mxu0 0.0
  %1694 = vmatprep.subr.mxu0 0.0
  %1695 = vmatpush1.msra.mxu0 0.0
  %1696 = vmatprep.subr.mxu0 0.0
  %1697 = vmatpush1.msra.mxu0 0.0
  %1698 = vmatprep.subr.mxu0 0.0
  %1699 = vmatpush1.msra.mxu0 0.0
  %1700 = vmatprep.subr.mxu0 0.0
  %1701 = vmatpush1.msra.mxu0 %v991
  %1702 = vmatprep.subr.mxu0 0.0
  %1703 = vmatpush1.msra.mxu0 %v990
  %1704 = vmatprep.subr.mxu0 0.0
  %1705 = vmatpush1.msra.mxu0 %v989
  %1706 = vmatprep.subr.mxu0 0.0
  %1707 = vmatpush1.msra.mxu0 %v988
  %1708 = vmatprep.subr.mxu0 0.0
  %1709 = vmatpush2.msra.mxu0 0.0
  %1710 = vmatprep.subr.mxu0 0.0
  %1711 = vmatpush2.msra.mxu0 0.0
  %1712 = vmatprep.subr.mxu0 0.0
  %1713 = vmatpush2.msra.mxu0 0.0
  %1714 = vmatprep.subr.mxu0 0.0
  %1715 = vmatpush2.msra.mxu0 0.0
  %1716 = vmatprep.subr.mxu0 0.0
  %1717 = vmatpush2.msra.mxu0 0.0
  %1718 = vmatprep.subr.mxu0 0.0
  %1719 = vmatpush2.msra.mxu0 0.0
  %1720 = vmatprep.subr.mxu0 0.0
  %1721 = vmatpush2.msra.mxu0 0.0
  %1722 = vmatprep.subr.mxu0 0.0
  %1723 = vmatpush2.msra.mxu0 0.0
  %1724 = vmatprep.subr.mxu0 0.0
  %1725 = vmatpush2.msra.mxu0 0.0
  %1726 = vmatprep.subr.mxu0 0.0
  %1727 = vmatpush2.msra.mxu0 0.0
  %1728 = vmatprep.subr.mxu0 0.0
  %1729 = vmatpush2.msra.mxu0 0.0
  %1730 = vmatprep.subr.mxu0 0.0
  %1731 = vmatpush2.msra.mxu0 0.0
  %1732 = vmatprep.subr.mxu0 0.0
  %1733 = vmatpush2.msra.mxu0 0.0
  %1734 = vmatprep.subr.mxu0 0.0
  %1735 = vmatpush2.msra.mxu0 0.0
  %1736 = vmatprep.subr.mxu0 0.0
  %1737 = vmatpush2.msra.mxu0 0.0
  %1738 = vmatprep.subr.mxu0 0.0
  %1739 = vmatpush2.msra.mxu0 0.0
  %1740 = vmatprep.mubr.f32.mxu0 0.0
  %1741 = vmatmul.mubr.f32.gmra.mxu0 %v1674
  %v1742 = vpop.f32.mrf.mxu0
  %v1743 = vadd.f32 0.0, %v1742
  %v1744 = vpop.f32.mrf.mxu0
  %1745 = vdwg.mxu0
  %v1746 = vsub.f32 %v1670, %v1743
  %v1747 = vmul.f32 %v1746, %v1746
  %v1749 = vsel %vm177, %v1747, 0
  %1751 = vmatprep.subr.mxu0 0.0
  %1752 = vmatpush1.msra.mxu0 0.0
  %1753 = vmatprep.subr.mxu0 0.0
  %1754 = vmatpush1.msra.mxu0 0.0
  %1755 = vmatprep.subr.mxu0 0.0
  %1756 = vmatpush1.msra.mxu0 0.0
  %1757 = vmatprep.subr.mxu0 0.0
  %1758 = vmatpush1.msra.mxu0 0.0
  %1759 = vmatprep.subr.mxu0 0.0
  %1760 = vmatpush1.msra.mxu0 0.0
  %1761 = vmatprep.subr.mxu0 0.0
  %1762 = vmatpush1.msra.mxu0 0.0
  %1763 = vmatprep.subr.mxu0 0.0
  %1764 = vmatpush1.msra.mxu0 0.0
  %1765 = vmatprep.subr.mxu0 0.0
  %1766 = vmatpush1.msra.mxu0 0.0
  %1767 = vmatprep.subr.mxu0 0.0
  %1768 = vmatpush1.msra.mxu0 0.0
  %1769 = vmatprep.subr.mxu0 0.0
  %1770 = vmatpush1.msra.mxu0 0.0
  %1771 = vmatprep.subr.mxu0 0.0
  %1772 = vmatpush1.msra.mxu0 0.0
  %1773 = vmatprep.subr.mxu0 0.0
  %1774 = vmatpush1.msra.mxu0 0.0
  %1775 = vmatprep.subr.mxu0 0.0
  %1776 = vmatpush1.msra.mxu0 %v991
  %1777 = vmatprep.subr.mxu0 0.0
  %1778 = vmatpush1.msra.mxu0 %v990
  %1779 = vmatprep.subr.mxu0 0.0
  %1780 = vmatpush1.msra.mxu0 %v989
  %1781 = vmatprep.subr.mxu0 0.0
  %1782 = vmatpush1.msra.mxu0 %v988
  %1783 = vmatprep.subr.mxu0 0.0
  %1784 = vmatpush2.msra.mxu0 0.0
  %1785 = vmatprep.subr.mxu0 0.0
  %1786 = vmatpush2.msra.mxu0 0.0
  %1787 = vmatprep.subr.mxu0 0.0
  %1788 = vmatpush2.msra.mxu0 0.0
  %1789 = vmatprep.subr.mxu0 0.0
  %1790 = vmatpush2.msra.mxu0 0.0
  %1791 = vmatprep.subr.mxu0 0.0
  %1792 = vmatpush2.msra.mxu0 0.0
  %1793 = vmatprep.subr.mxu0 0.0
  %1794 = vmatpush2.msra.mxu0 0.0
  %1795 = vmatprep.subr.mxu0 0.0
  %1796 = vmatpush2.msra.mxu0 0.0
  %1797 = vmatprep.subr.mxu0 0.0
  %1798 = vmatpush2.msra.mxu0 0.0
  %1799 = vmatprep.subr.mxu0 0.0
  %1800 = vmatpush2.msra.mxu0 0.0
  %1801 = vmatprep.subr.mxu0 0.0
  %1802 = vmatpush2.msra.mxu0 0.0
  %1803 = vmatprep.subr.mxu0 0.0
  %1804 = vmatpush2.msra.mxu0 0.0
  %1805 = vmatprep.subr.mxu0 0.0
  %1806 = vmatpush2.msra.mxu0 0.0
  %1807 = vmatprep.subr.mxu0 0.0
  %1808 = vmatpush2.msra.mxu0 0.0
  %1809 = vmatprep.subr.mxu0 0.0
  %1810 = vmatpush2.msra.mxu0 0.0
  %1811 = vmatprep.subr.mxu0 0.0
  %1812 = vmatpush2.msra.mxu0 0.0
  %1813 = vmatprep.subr.mxu0 0.0
  %1814 = vmatpush2.msra.mxu0 0.0
  %1815 = vmatprep.mubr.f32.mxu0 0.0
  %1816 = vmatmul.mubr.f32.gmra.mxu0 %v1749
  %v1817 = vpop.f32.mrf.mxu0
  %v1818 = vadd.f32 1e-05, %v1817
  %v1819 = vpop.f32.mrf.mxu0
  %1820 = vdwg.mxu0
  %v1821 = vrsqrt.pop %v1818
  %v1822 = vmul.f32 %v1746, %v1821
  %v1823 = vlaneseq
  %v1824 = vshrl.u32 %v1823, 7
  %v1825 = vsub.s32 0, %v1824
  %v1826 = vrot.slane %v1671, %v1825
  %v1827 = vmul.f32 %v1822, %v1826
  %v1828 = vlaneseq
  %v1829 = vshrl.u32 %v1828, 7
  %v1830 = vsub.s32 0, %v1829
  %v1831 = vrot.slane %v1672, %v1830
  %v1832 = vadd.f32 %v1827, %v1831
  %v1833 = vld [vmem:[%s1 + $0xb4] sm:$0xff]
  %v1834 = vld [vmem:[%s1 + $0xbc] sm:$0xff]
  %v1835 = vld [vmem:[%s1 + $0xc4] sm:$0xff]
  %v1836 = vld [vmem:[%s1 + $0xcc] sm:$0xff]
  %v1837 = vld [vmem:[%s1 + $0x115] sm:$0x1]
  %v1838 = vlaneseq
  %v1839 = vshrl.u32 %v1838, 7
  %v1840 = vsub.s32 0, %v1839
  %v1841 = vrot.slane %v1837, %v1840
  %v1843 = vsel %vm177, %v1832, 0
  %1845 = vmatprep.subr.mxu0 0.0
  %1846 = vmatpush1.msra.mxu0 0.0
  %1847 = vmatprep.subr.mxu0 0.0
  %1848 = vmatpush1.msra.mxu0 0.0
  %1849 = vmatprep.subr.mxu0 0.0
  %1850 = vmatpush1.msra.mxu0 0.0
  %1851 = vmatprep.subr.mxu0 0.0
  %1852 = vmatpush1.msra.mxu0 0.0
  %1853 = vmatprep.subr.mxu0 0.0
  %1854 = vmatpush1.msra.mxu0 0.0
  %1855 = vmatprep.subr.mxu0 0.0
  %1856 = vmatpush1.msra.mxu0 0.0
  %1857 = vmatprep.subr.mxu0 0.0
  %1858 = vmatpush1.msra.mxu0 0.0
  %1859 = vmatprep.subr.mxu0 0.0
  %1860 = vmatpush1.msra.mxu0 0.0
  %1861 = vmatprep.subr.mxu0 0.0
  %1862 = vmatpush1.msra.mxu0 0.0
  %1863 = vmatprep.subr.mxu0 0.0
  %1864 = vmatpush1.msra.mxu0 0.0
  %1865 = vmatprep.subr.mxu0 0.0
  %1866 = vmatpush1.msra.mxu0 0.0
  %1867 = vmatprep.subr.mxu0 0.0
  %1868 = vmatpush1.msra.mxu0 0.0
  %1869 = vmatprep.subr.mxu0 0.0
  %1870 = vmatpush1.msra.mxu0 %v1836
  %1871 = vmatprep.subr.mxu0 0.0
  %1872 = vmatpush1.msra.mxu0 %v1835
  %1873 = vmatprep.subr.mxu0 0.0
  %1874 = vmatpush1.msra.mxu0 %v1834
  %1875 = vmatprep.subr.mxu0 0.0
  %1876 = vmatpush1.msra.mxu0 %v1833
  %1877 = vmatprep.subr.mxu0 0.0
  %1878 = vmatpush2.msra.mxu0 0.0
  %1879 = vmatprep.subr.mxu0 0.0
  %1880 = vmatpush2.msra.mxu0 0.0
  %1881 = vmatprep.subr.mxu0 0.0
  %1882 = vmatpush2.msra.mxu0 0.0
  %1883 = vmatprep.subr.mxu0 0.0
  %1884 = vmatpush2.msra.mxu0 0.0
  %1885 = vmatprep.subr.mxu0 0.0
  %1886 = vmatpush2.msra.mxu0 0.0
  %1887 = vmatprep.subr.mxu0 0.0
  %1888 = vmatpush2.msra.mxu0 0.0
  %1889 = vmatprep.subr.mxu0 0.0
  %1890 = vmatpush2.msra.mxu0 0.0
  %1891 = vmatprep.subr.mxu0 0.0
  %1892 = vmatpush2.msra.mxu0 0.0
  %1893 = vmatprep.subr.mxu0 0.0
  %1894 = vmatpush2.msra.mxu0 0.0
  %1895 = vmatprep.subr.mxu0 0.0
  %1896 = vmatpush2.msra.mxu0 0.0
  %1897 = vmatprep.subr.mxu0 0.0
  %1898 = vmatpush2.msra.mxu0 0.0
  %1899 = vmatprep.subr.mxu0 0.0
  %1900 = vmatpush2.msra.mxu0 0.0
  %1901 = vmatprep.subr.mxu0 0.0
  %1902 = vmatpush2.msra.mxu0 0.0
  %1903 = vmatprep.subr.mxu0 0.0
  %1904 = vmatpush2.msra.mxu0 0.0
  %1905 = vmatprep.subr.mxu0 0.0
  %1906 = vmatpush2.msra.mxu0 0.0
  %1907 = vmatprep.subr.mxu0 0.0
  %1908 = vmatpush2.msra.mxu0 0.0
  %1909 = vmatprep.mubr.f32.mxu0 0.0
  %1910 = vmatmul.mubr.f32.gmra.mxu0 %v1843
  %v1911 = vpop.f32.mrf.mxu0
  %v1912 = vadd.f32 %v1841, %v1911
  %v1913 = vpop.f32.mrf.mxu0
  %1914 = vdwg.mxu0
  %v1915 = vmul.f32 %v1912, 0.5
  %v1916 = vmul.f32 %v1912, 0.044715
  %v1917 = vmul.f32 %v1916, %v1912
  %v1918 = vmul.f32 %v1917, %v1912
  %v1919 = vadd.f32 %v1912, %v1918
  %v1920 = vmul.f32 %v1919, 0.7978846
  %v1921 = vtanh.pop %v1920
  %v1922 = vadd.f32 %v1921, 1.0
  %v1923 = vmul.f32 %v1915, %v1922
  %v1924 = vld [vmem:[%s2 + $0x330] sm:$0xff]
  %v1925 = vld [vmem:[%s2 + $0x338] sm:$0xff]
  %v1926 = vld [vmem:[%s2 + $0x340] sm:$0xff]
  %v1927 = vld [vmem:[%s2 + $0x348] sm:$0xff]
  %v1928 = vld [vmem:[%s2 + $0x350] sm:$0xff]
  %v1929 = vld [vmem:[%s2 + $0x358] sm:$0xff]
  %v1930 = vld [vmem:[%s2 + $0x360] sm:$0xff]
  %v1931 = vld [vmem:[%s2 + $0x368] sm:$0xff]
  %v1932 = vld [vmem:[%s2 + $0x370] sm:$0xff]
  %v1933 = vld [vmem:[%s2 + $0x378] sm:$0xff]
  %v1934 = vld [vmem:[%s2 + $0x380] sm:$0xff]
  %v1935 = vld [vmem:[%s2 + $0x388] sm:$0xff]
  %v1936 = vld [vmem:[%s2 + $0x390] sm:$0xff]
  %v1937 = vld [vmem:[%s2 + $0x398] sm:$0xff]
  %v1938 = vld [vmem:[%s2 + $0x3a0] sm:$0xff]
  %v1939 = vld [vmem:[%s2 + $0x3a8] sm:$0xff]
  %v1940 = vld [vmem:[%s2 + $0x580] sm:$0x1]
  %v1941 = vlaneseq
  %v1942 = vshrl.u32 %v1941, 7
  %v1943 = vsub.s32 0, %v1942
  %v1944 = vrot.slane %v1940, %v1943
  %1945 = vmatprep.subr.mxu0 0.0
  %1946 = vmatpush1.msra.mxu0 %v1939
  %1947 = vmatprep.subr.mxu0 0.0
  %1948 = vmatpush1.msra.mxu0 %v1938
  %1949 = vmatprep.subr.mxu0 0.0
  %1950 = vmatpush1.msra.mxu0 %v1937
  %1951 = vmatprep.subr.mxu0 0.0
  %1952 = vmatpush1.msra.mxu0 %v1936
  %1953 = vmatprep.subr.mxu0 0.0
  %1954 = vmatpush1.msra.mxu0 %v1935
  %1955 = vmatprep.subr.mxu0 0.0
  %1956 = vmatpush1.msra.mxu0 %v1934
  %1957 = vmatprep.subr.mxu0 0.0
  %1958 = vmatpush1.msra.mxu0 %v1933
  %1959 = vmatprep.subr.mxu0 0.0
  %1960 = vmatpush1.msra.mxu0 %v1932
  %1961 = vmatprep.subr.mxu0 0.0
  %1962 = vmatpush1.msra.mxu0 %v1931
  %1963 = vmatprep.subr.mxu0 0.0
  %1964 = vmatpush1.msra.mxu0 %v1930
  %1965 = vmatprep.subr.mxu0 0.0
  %1966 = vmatpush1.msra.mxu0 %v1929
  %1967 = vmatprep.subr.mxu0 0.0
  %1968 = vmatpush1.msra.mxu0 %v1928
  %1969 = vmatprep.subr.mxu0 0.0
  %1970 = vmatpush1.msra.mxu0 %v1927
  %1971 = vmatprep.subr.mxu0 0.0
  %1972 = vmatpush1.msra.mxu0 %v1926
  %1973 = vmatprep.subr.mxu0 0.0
  %1974 = vmatpush1.msra.mxu0 %v1925
  %1975 = vmatprep.subr.mxu0 0.0
  %1976 = vmatpush1.msra.mxu0 %v1924
  %1977 = vmatprep.subr.mxu0 0.0
  %1978 = vmatpush2.msra.mxu0 0.0
  %1979 = vmatprep.subr.mxu0 0.0
  %1980 = vmatpush2.msra.mxu0 0.0
  %1981 = vmatprep.subr.mxu0 0.0
  %1982 = vmatpush2.msra.mxu0 0.0
  %1983 = vmatprep.subr.mxu0 0.0
  %1984 = vmatpush2.msra.mxu0 0.0
  %1985 = vmatprep.subr.mxu0 0.0
  %1986 = vmatpush2.msra.mxu0 0.0
  %1987 = vmatprep.subr.mxu0 0.0
  %1988 = vmatpush2.msra.mxu0 0.0
  %1989 = vmatprep.subr.mxu0 0.0
  %1990 = vmatpush2.msra.mxu0 0.0
  %1991 = vmatprep.subr.mxu0 0.0
  %1992 = vmatpush2.msra.mxu0 0.0
  %1993 = vmatprep.subr.mxu0 0.0
  %1994 = vmatpush2.msra.mxu0 0.0
  %1995 = vmatprep.subr.mxu0 0.0
  %1996 = vmatpush2.msra.mxu0 0.0
  %1997 = vmatprep.subr.mxu0 0.0
  %1998 = vmatpush2.msra.mxu0 0.0
  %1999 = vmatprep.subr.mxu0 0.0
  %2000 = vmatpush2.msra.mxu0 0.0
  %2001 = vmatprep.subr.mxu0 0.0
  %2002 = vmatpush2.msra.mxu0 0.0
  %2003 = vmatprep.subr.mxu0 0.0
  %2004 = vmatpush2.msra.mxu0 0.0
  %2005 = vmatprep.subr.mxu0 0.0
  %2006 = vmatpush2.msra.mxu0 0.0
  %2007 = vmatprep.subr.mxu0 0.0
  %2008 = vmatpush2.msra.mxu0 0.0
  %2009 = vmatprep.mubr.f32.mxu0 0.0
  %2010 = vmatmul.mubr.f32.gmra.mxu0 %v1923
  %v2011 = vpop.f32.mrf.mxu0
  %v2012 = vadd.f32 %v1944, %v2011
  %v2013 = vpop.f32.mrf.mxu0
  %2014 = vdwg.mxu0
  %v2015 = vadd.f32 %v1832, %v2012
  %v2016 = vld [vmem:[%s2 + $0x584] sm:$0x1]
  %v2017 = vld [vmem:[%s2 + $0x588] sm:$0x1]
  %v2019 = vsel %vm177, %v2015, 0
  %2021 = vmatprep.subr.mxu0 0.0
  %2022 = vmatpush1.msra.mxu0 0.0
  %2023 = vmatprep.subr.mxu0 0.0
  %2024 = vmatpush1.msra.mxu0 0.0
  %2025 = vmatprep.subr.mxu0 0.0
  %2026 = vmatpush1.msra.mxu0 0.0
  %2027 = vmatprep.subr.mxu0 0.0
  %2028 = vmatpush1.msra.mxu0 0.0
  %2029 = vmatprep.subr.mxu0 0.0
  %2030 = vmatpush1.msra.mxu0 0.0
  %2031 = vmatprep.subr.mxu0 0.0
  %2032 = vmatpush1.msra.mxu0 0.0
  %2033 = vmatprep.subr.mxu0 0.0
  %2034 = vmatpush1.msra.mxu0 0.0
  %2035 = vmatprep.subr.mxu0 0.0
  %2036 = vmatpush1.msra.mxu0 0.0
  %2037 = vmatprep.subr.mxu0 0.0
  %2038 = vmatpush1.msra.mxu0 0.0
  %2039 = vmatprep.subr.mxu0 0.0
  %2040 = vmatpush1.msra.mxu0 0.0
  %2041 = vmatprep.subr.mxu0 0.0
  %2042 = vmatpush1.msra.mxu0 0.0
  %2043 = vmatprep.subr.mxu0 0.0
  %2044 = vmatpush1.msra.mxu0 0.0
  %2045 = vmatprep.subr.mxu0 0.0
  %2046 = vmatpush1.msra.mxu0 %v991
  %2047 = vmatprep.subr.mxu0 0.0
  %2048 = vmatpush1.msra.mxu0 %v990
  %2049 = vmatprep.subr.mxu0 0.0
  %2050 = vmatpush1.msra.mxu0 %v989
  %2051 = vmatprep.subr.mxu0 0.0
  %2052 = vmatpush1.msra.mxu0 %v988
  %2053 = vmatprep.subr.mxu0 0.0
  %2054 = vmatpush2.msra.mxu0 0.0
  %2055 = vmatprep.subr.mxu0 0.0
  %2056 = vmatpush2.msra.mxu0 0.0
  %2057 = vmatprep.subr.mxu0 0.0
  %2058 = vmatpush2.msra.mxu0 0.0
  %2059 = vmatprep.subr.mxu0 0.0
  %2060 = vmatpush2.msra.mxu0 0.0
  %2061 = vmatprep.subr.mxu0 0.0
  %2062 = vmatpush2.msra.mxu0 0.0
  %2063 = vmatprep.subr.mxu0 0.0
  %2064 = vmatpush2.msra.mxu0 0.0
  %2065 = vmatprep.subr.mxu0 0.0
  %2066 = vmatpush2.msra.mxu0 0.0
  %2067 = vmatprep.subr.mxu0 0.0
  %2068 = vmatpush2.msra.mxu0 0.0
  %2069 = vmatprep.subr.mxu0 0.0
  %2070 = vmatpush2.msra.mxu0 0.0
  %2071 = vmatprep.subr.mxu0 0.0
  %2072 = vmatpush2.msra.mxu0 0.0
  %2073 = vmatprep.subr.mxu0 0.0
  %2074 = vmatpush2.msra.mxu0 0.0
  %2075 = vmatprep.subr.mxu0 0.0
  %2076 = vmatpush2.msra.mxu0 0.0
  %2077 = vmatprep.subr.mxu0 0.0
  %2078 = vmatpush2.msra.mxu0 0.0
  %2079 = vmatprep.subr.mxu0 0.0
  %2080 = vmatpush2.msra.mxu0 0.0
  %2081 = vmatprep.subr.mxu0 0.0
  %2082 = vmatpush2.msra.mxu0 0.0
  %2083 = vmatprep.subr.mxu0 0.0
  %2084 = vmatpush2.msra.mxu0 0.0
  %2085 = vmatprep.mubr.f32.mxu0 0.0
  %2086 = vmatmul.mubr.f32.gmra.mxu0 %v2019
  %v2087 = vpop.f32.mrf.mxu0
  %v2088 = vadd.f32 0.0, %v2087
  %v2089 = vpop.f32.mrf.mxu0
  %2090 = vdwg.mxu0
  %v2091 = vsub.f32 %v2015, %v2088
  %v2092 = vmul.f32 %v2091, %v2091
  %v2094 = vsel %vm177, %v2092, 0
  %2096 = vmatprep.subr.mxu0 0.0
  %2097 = vmatpush1.msra.mxu0 0.0
  %2098 = vmatprep.subr.mxu0 0.0
  %2099 = vmatpush1.msra.mxu0 0.0
  %2100 = vmatprep.subr.mxu0 0.0
  %2101 = vmatpush1.msra.mxu0 0.0
  %2102 = vmatprep.subr.mxu0 0.0
  %2103 = vmatpush1.msra.mxu0 0.0
  %2104 = vmatprep.subr.mxu0 0.0
  %2105 = vmatpush1.msra.mxu0 0.0
  %2106 = vmatprep.subr.mxu0 0.0
  %2107 = vmatpush1.msra.mxu0 0.0
  %2108 = vmatprep.subr.mxu0 0.0
  %2109 = vmatpush1.msra.mxu0 0.0
  %2110 = vmatprep.subr.mxu0 0.0
  %2111 = vmatpush1.msra.mxu0 0.0
  %2112 = vmatprep.subr.mxu0 0.0
  %2113 = vmatpush1.msra.mxu0 0.0
  %2114 = vmatprep.subr.mxu0 0.0
  %2115 = vmatpush1.msra.mxu0 0.0
  %2116 = vmatprep.subr.mxu0 0.0
  %2117 = vmatpush1.msra.mxu0 0.0
  %2118 = vmatprep.subr.mxu0 0.0
  %2119 = vmatpush1.msra.mxu0 0.0
  %2120 = vmatprep.subr.mxu0 0.0
  %2121 = vmatpush1.msra.mxu0 %v991
  %2122 = vmatprep.subr.mxu0 0.0
  %2123 = vmatpush1.msra.mxu0 %v990
  %2124 = vmatprep.subr.mxu0 0.0
  %2125 = vmatpush1.msra.mxu0 %v989
  %2126 = vmatprep.subr.mxu0 0.0
  %2127 = vmatpush1.msra.mxu0 %v988
  %2128 = vmatprep.subr.mxu0 0.0
  %2129 = vmatpush2.msra.mxu0 0.0
  %2130 = vmatprep.subr.mxu0 0.0
  %2131 = vmatpush2.msra.mxu0 0.0
  %2132 = vmatprep.subr.mxu0 0.0
  %2133 = vmatpush2.msra.mxu0 0.0
  %2134 = vmatprep.subr.mxu0 0.0
  %2135 = vmatpush2.msra.mxu0 0.0
  %2136 = vmatprep.subr.mxu0 0.0
  %2137 = vmatpush2.msra.mxu0 0.0
  %2138 = vmatprep.subr.mxu0 0.0
  %2139 = vmatpush2.msra.mxu0 0.0
  %2140 = vmatprep.subr.mxu0 0.0
  %2141 = vmatpush2.msra.mxu0 0.0
  %2142 = vmatprep.subr.mxu0 0.0
  %2143 = vmatpush2.msra.mxu0 0.0
  %2144 = vmatprep.subr.mxu0 0.0
  %2145 = vmatpush2.msra.mxu0 0.0
  %2146 = vmatprep.subr.mxu0 0.0
  %2147 = vmatpush2.msra.mxu0 0.0
  %2148 = vmatprep.subr.mxu0 0.0
  %2149 = vmatpush2.msra.mxu0 0.0
  %2150 = vmatprep.subr.mxu0 0.0
  %2151 = vmatpush2.msra.mxu0 0.0
  %2152 = vmatprep.subr.mxu0 0.0
  %2153 = vmatpush2.msra.mxu0 0.0
  %2154 = vmatprep.subr.mxu0 0.0
  %2155 = vmatpush2.msra.mxu0 0.0
  %2156 = vmatprep.subr.mxu0 0.0
  %2157 = vmatpush2.msra.mxu0 0.0
  %2158 = vmatprep.subr.mxu0 0.0
  %2159 = vmatpush2.msra.mxu0 0.0
  %2160 = vmatprep.mubr.f32.mxu0 0.0
  %2161 = vmatmul.mubr.f32.gmra.mxu0 %v2094
  %v2162 = vpop.f32.mrf.mxu0
  %v2163 = vadd.f32 1e-05, %v2162
  %v2164 = vpop.f32.mrf.mxu0
  %2165 = vdwg.mxu0
  %v2166 = vrsqrt.pop %v2163
  %v2167 = vmul.f32 %v2091, %v2166
  %v2168 = vlaneseq
  %v2169 = vshrl.u32 %v2168, 7
  %v2170 = vsub.s32 0, %v2169
  %v2171 = vrot.slane %v2016, %v2170
  %v2172 = vmul.f32 %v2167, %v2171
  %v2173 = vlaneseq
  %v2174 = vshrl.u32 %v2173, 7
  %v2175 = vsub.s32 0, %v2174
  %v2176 = vrot.slane %v2017, %v2175
  %v2177 = vadd.f32 %v2172, %v2176
  %v2178 = vld [vmem:[%s2 + $0x270] sm:$0xff]
  %v2179 = vld [vmem:[%s2 + $0x278] sm:$0xff]
  %v2180 = vld [vmem:[%s2 + $0x280] sm:$0xff]
  %v2181 = vld [vmem:[%s2 + $0x288] sm:$0xff]
  %v2182 = vld [vmem:[%s2 + $0x575] sm:$0x1]
  %v2183 = vlaneseq
  %v2184 = vshrl.u32 %v2183, 7
  %v2185 = vsub.s32 0, %v2184
  %v2186 = vrot.slane %v2182, %v2185
  %v2188 = vsel %vm177, %v2177, 0
  %2190 = vmatprep.subr.mxu0 0.0
  %2191 = vmatpush1.msra.mxu0 0.0
  %2192 = vmatprep.subr.mxu0 0.0
  %2193 = vmatpush1.msra.mxu0 0.0
  %2194 = vmatprep.subr.mxu0 0.0
  %2195 = vmatpush1.msra.mxu0 0.0
  %2196 = vmatprep.subr.mxu0 0.0
  %2197 = vmatpush1.msra.mxu0 0.0
  %2198 = vmatprep.subr.mxu0 0.0
  %2199 = vmatpush1.msra.mxu0 0.0
  %2200 = vmatprep.subr.mxu0 0.0
  %2201 = vmatpush1.msra.mxu0 0.0
  %2202 = vmatprep.subr.mxu0 0.0
  %2203 = vmatpush1.msra.mxu0 0.0
  %2204 = vmatprep.subr.mxu0 0.0
  %2205 = vmatpush1.msra.mxu0 0.0
  %2206 = vmatprep.subr.mxu0 0.0
  %2207 = vmatpush1.msra.mxu0 0.0
  %2208 = vmatprep.subr.mxu0 0.0
  %2209 = vmatpush1.msra.mxu0 0.0
  %2210 = vmatprep.subr.mxu0 0.0
  %2211 = vmatpush1.msra.mxu0 0.0
  %2212 = vmatprep.subr.mxu0 0.0
  %2213 = vmatpush1.msra.mxu0 0.0
  %2214 = vmatprep.subr.mxu0 0.0
  %2215 = vmatpush1.msra.mxu0 %v2181
  %2216 = vmatprep.subr.mxu0 0.0
  %2217 = vmatpush1.msra.mxu0 %v2180
  %2218 = vmatprep.subr.mxu0 0.0
  %2219 = vmatpush1.msra.mxu0 %v2179
  %2220 = vmatprep.subr.mxu0 0.0
  %2221 = vmatpush1.msra.mxu0 %v2178
  %2222 = vmatprep.subr.mxu0 0.0
  %2223 = vmatpush2.msra.mxu0 0.0
  %2224 = vmatprep.subr.mxu0 0.0
  %2225 = vmatpush2.msra.mxu0 0.0
  %2226 = vmatprep.subr.mxu0 0.0
  %2227 = vmatpush2.msra.mxu0 0.0
  %2228 = vmatprep.subr.mxu0 0.0
  %2229 = vmatpush2.msra.mxu0 0.0
  %2230 = vmatprep.subr.mxu0 0.0
  %2231 = vmatpush2.msra.mxu0 0.0
  %2232 = vmatprep.subr.mxu0 0.0
  %2233 = vmatpush2.msra.mxu0 0.0
  %2234 = vmatprep.subr.mxu0 0.0
  %2235 = vmatpush2.msra.mxu0 0.0
  %2236 = vmatprep.subr.mxu0 0.0
  %2237 = vmatpush2.msra.mxu0 0.0
  %2238 = vmatprep.subr.mxu0 0.0
  %2239 = vmatpush2.msra.mxu0 0.0
  %2240 = vmatprep.subr.mxu0 0.0
  %2241 = vmatpush2.msra.mxu0 0.0
  %2242 = vmatprep.subr.mxu0 0.0
  %2243 = vmatpush2.msra.mxu0 0.0
  %2244 = vmatprep.subr.mxu0 0.0
  %2245 = vmatpush2.msra.mxu0 0.0
  %2246 = vmatprep.subr.mxu0 0.0
  %2247 = vmatpush2.msra.mxu0 0.0
  %2248 = vmatprep.subr.mxu0 0.0
  %2249 = vmatpush2.msra.mxu0 0.0
  %2250 = vmatprep.subr.mxu0 0.0
  %2251 = vmatpush2.msra.mxu0 0.0
  %2252 = vmatprep.subr.mxu0 0.0
  %2253 = vmatpush2.msra.mxu0 0.0
  %2254 = vmatprep.mubr.f32.mxu0 0.0
  %2255 = vmatmul.mubr.f32.gmra.mxu0 %v2188
  %v2256 = vpop.f32.mrf.mxu0
  %v2257 = vadd.f32 %v2186, %v2256
  %v2258 = vpop.f32.mrf.mxu0
  %2259 = vdwg.mxu0
  %v2260 = vadd.f32 %v2177, %v2257
  %v2261 = vld [vmem:[%s2 + $0x579] sm:$0x1]
  %v2262 = vld [vmem:[%s2 + $0x57d] sm:$0x1]
  %v2264 = vsel %vm177, %v2260, 0
  %2266 = vmatprep.subr.mxu0 0.0
  %2267 = vmatpush1.msra.mxu0 0.0
  %2268 = vmatprep.subr.mxu0 0.0
  %2269 = vmatpush1.msra.mxu0 0.0
  %2270 = vmatprep.subr.mxu0 0.0
  %2271 = vmatpush1.msra.mxu0 0.0
  %2272 = vmatprep.subr.mxu0 0.0
  %2273 = vmatpush1.msra.mxu0 0.0
  %2274 = vmatprep.subr.mxu0 0.0
  %2275 = vmatpush1.msra.mxu0 0.0
  %2276 = vmatprep.subr.mxu0 0.0
  %2277 = vmatpush1.msra.mxu0 0.0
  %2278 = vmatprep.subr.mxu0 0.0
  %2279 = vmatpush1.msra.mxu0 0.0
  %2280 = vmatprep.subr.mxu0 0.0
  %2281 = vmatpush1.msra.mxu0 0.0
  %2282 = vmatprep.subr.mxu0 0.0
  %2283 = vmatpush1.msra.mxu0 0.0
  %2284 = vmatprep.subr.mxu0 0.0
  %2285 = vmatpush1.msra.mxu0 0.0
  %2286 = vmatprep.subr.mxu0 0.0
  %2287 = vmatpush1.msra.mxu0 0.0
  %2288 = vmatprep.subr.mxu0 0.0
  %2289 = vmatpush1.msra.mxu0 0.0
  %2290 = vmatprep.subr.mxu0 0.0
  %2291 = vmatpush1.msra.mxu0 %v991
  %2292 = vmatprep.subr.mxu0 0.0
  %2293 = vmatpush1.msra.mxu0 %v990
  %2294 = vmatprep.subr.mxu0 0.0
  %2295 = vmatpush1.msra.mxu0 %v989
  %2296 = vmatprep.subr.mxu0 0.0
  %2297 = vmatpush1.msra.mxu0 %v988
  %2298 = vmatprep.subr.mxu0 0.0
  %2299 = vmatpush2.msra.mxu0 0.0
  %2300 = vmatprep.subr.mxu0 0.0
  %2301 = vmatpush2.msra.mxu0 0.0
  %2302 = vmatprep.subr.mxu0 0.0
  %2303 = vmatpush2.msra.mxu0 0.0
  %2304 = vmatprep.subr.mxu0 0.0
  %2305 = vmatpush2.msra.mxu0 0.0
  %2306 = vmatprep.subr.mxu0 0.0
  %2307 = vmatpush2.msra.mxu0 0.0
  %2308 = vmatprep.subr.mxu0 0.0
  %2309 = vmatpush2.msra.mxu0 0.0
  %2310 = vmatprep.subr.mxu0 0.0
  %2311 = vmatpush2.msra.mxu0 0.0
  %2312 = vmatprep.subr.mxu0 0.0
  %2313 = vmatpush2.msra.mxu0 0.0
  %2314 = vmatprep.subr.mxu0 0.0
  %2315 = vmatpush2.msra.mxu0 0.0
  %2316 = vmatprep.subr.mxu0 0.0
  %2317 = vmatpush2.msra.mxu0 0.0
  %2318 = vmatprep.subr.mxu0 0.0
  %2319 = vmatpush2.msra.mxu0 0.0
  %2320 = vmatprep.subr.mxu0 0.0
  %2321 = vmatpush2.msra.mxu0 0.0
  %2322 = vmatprep.subr.mxu0 0.0
  %2323 = vmatpush2.msra.mxu0 0.0
  %2324 = vmatprep.subr.mxu0 0.0
  %2325 = vmatpush2.msra.mxu0 0.0
  %2326 = vmatprep.subr.mxu0 0.0
  %2327 = vmatpush2.msra.mxu0 0.0
  %2328 = vmatprep.subr.mxu0 0.0
  %2329 = vmatpush2.msra.mxu0 0.0
  %2330 = vmatprep.mubr.f32.mxu0 0.0
  %2331 = vmatmul.mubr.f32.gmra.mxu0 %v2264
  %v2332 = vpop.f32.mrf.mxu0
  %v2333 = vadd.f32 0.0, %v2332
  %v2334 = vpop.f32.mrf.mxu0
  %2335 = vdwg.mxu0
  %v2336 = vsub.f32 %v2260, %v2333
  %v2337 = vmul.f32 %v2336, %v2336
  %v2339 = vsel %vm177, %v2337, 0
  %2341 = vmatprep.subr.mxu0 0.0
  %2342 = vmatpush1.msra.mxu0 0.0
  %2343 = vmatprep.subr.mxu0 0.0
  %2344 = vmatpush1.msra.mxu0 0.0
  %2345 = vmatprep.subr.mxu0 0.0
  %2346 = vmatpush1.msra.mxu0 0.0
  %2347 = vmatprep.subr.mxu0 0.0
  %2348 = vmatpush1.msra.mxu0 0.0
  %2349 = vmatprep.subr.mxu0 0.0
  %2350 = vmatpush1.msra.mxu0 0.0
  %2351 = vmatprep.subr.mxu0 0.0
  %2352 = vmatpush1.msra.mxu0 0.0
  %2353 = vmatprep.subr.mxu0 0.0
  %2354 = vmatpush1.msra.mxu0 0.0
  %2355 = vmatprep.subr.mxu0 0.0
  %2356 = vmatpush1.msra.mxu0 0.0
  %2357 = vmatprep.subr.mxu0 0.0
  %2358 = vmatpush1.msra.mxu0 0.0
  %2359 = vmatprep.subr.mxu0 0.0
  %2360 = vmatpush1.msra.mxu0 0.0
  %2361 = vmatprep.subr.mxu0 0.0
  %2362 = vmatpush1.msra.mxu0 0.0
  %2363 = vmatprep.subr.mxu0 0.0
  %2364 = vmatpush1.msra.mxu0 0.0
  %2365 = vmatprep.subr.mxu0 0.0
  %2366 = vmatpush1.msra.mxu0 %v991
  %2367 = vmatprep.subr.mxu0 0.0
  %2368 = vmatpush1.msra.mxu0 %v990
  %2369 = vmatprep.subr.mxu0 0.0
  %2370 = vmatpush1.msra.mxu0 %v989
  %2371 = vmatprep.subr.mxu0 0.0
  %2372 = vmatpush1.msra.mxu0 %v988
  %2373 = vmatprep.subr.mxu0 0.0
  %2374 = vmatpush2.msra.mxu0 0.0
  %2375 = vmatprep.subr.mxu0 0.0
  %2376 = vmatpush2.msra.mxu0 0.0
  %2377 = vmatprep.subr.mxu0 0.0
  %2378 = vmatpush2.msra.mxu0 0.0
  %2379 = vmatprep.subr.mxu0 0.0
  %2380 = vmatpush2.msra.mxu0 0.0
  %2381 = vmatprep.subr.mxu0 0.0
  %2382 = vmatpush2.msra.mxu0 0.0
  %2383 = vmatprep.subr.mxu0 0.0
  %2384 = vmatpush2.msra.mxu0 0.0
  %2385 = vmatprep.subr.mxu0 0.0
  %2386 = vmatpush2.msra.mxu0 0.0
  %2387 = vmatprep.subr.mxu0 0.0
  %2388 = vmatpush2.msra.mxu0 0.0
  %2389 = vmatprep.subr.mxu0 0.0
  %2390 = vmatpush2.msra.mxu0 0.0
  %2391 = vmatprep.subr.mxu0 0.0
  %2392 = vmatpush2.msra.mxu0 0.0
  %2393 = vmatprep.subr.mxu0 0.0
  %2394 = vmatpush2.msra.mxu0 0.0
  %2395 = vmatprep.subr.mxu0 0.0
  %2396 = vmatpush2.msra.mxu0 0.0
  %2397 = vmatprep.subr.mxu0 0.0
  %2398 = vmatpush2.msra.mxu0 0.0
  %2399 = vmatprep.subr.mxu0 0.0
  %2400 = vmatpush2.msra.mxu0 0.0
  %2401 = vmatprep.subr.mxu0 0.0
  %2402 = vmatpush2.msra.mxu0 0.0
  %2403 = vmatprep.subr.mxu0 0.0
  %2404 = vmatpush2.msra.mxu0 0.0
  %2405 = vmatprep.mubr.f32.mxu0 0.0
  %2406 = vmatmul.mubr.f32.gmra.mxu0 %v2339
  %v2407 = vpop.f32.mrf.mxu0
  %v2408 = vadd.f32 1e-05, %v2407
  %v2409 = vpop.f32.mrf.mxu0
  %2410 = vdwg.mxu0
  %v2411 = vrsqrt.pop %v2408
  %v2412 = vmul.f32 %v2336, %v2411
  %v2413 = vlaneseq
  %v2414 = vshrl.u32 %v2413, 7
  %v2415 = vsub.s32 0, %v2414
  %v2416 = vrot.slane %v2261, %v2415
  %v2417 = vmul.f32 %v2412, %v2416
  %v2418 = vlaneseq
  %v2419 = vshrl.u32 %v2418, 7
  %v2420 = vsub.s32 0, %v2419
  %v2421 = vrot.slane %v2262, %v2420
  %v2422 = vadd.f32 %v2417, %v2421
  %v2423 = vld [vmem:[%s1 + $0xd4] sm:$0xff]
  %v2424 = vld [vmem:[%s1 + $0xdc] sm:$0xff]
  %v2425 = vld [vmem:[%s1 + $0xe4] sm:$0xff]
  %v2426 = vld [vmem:[%s1 + $0xec] sm:$0xff]
  %v2427 = vld [vmem:[%s1 + $0x116] sm:$0x1]
  %v2428 = vlaneseq
  %v2429 = vshrl.u32 %v2428, 7
  %v2430 = vsub.s32 0, %v2429
  %v2431 = vrot.slane %v2427, %v2430
  %v2433 = vsel %vm177, %v2422, 0
  %2435 = vmatprep.subr.mxu0 0.0
  %2436 = vmatpush1.msra.mxu0 0.0
  %2437 = vmatprep.subr.mxu0 0.0
  %2438 = vmatpush1.msra.mxu0 0.0
  %2439 = vmatprep.subr.mxu0 0.0
  %2440 = vmatpush1.msra.mxu0 0.0
  %2441 = vmatprep.subr.mxu0 0.0
  %2442 = vmatpush1.msra.mxu0 0.0
  %2443 = vmatprep.subr.mxu0 0.0
  %2444 = vmatpush1.msra.mxu0 0.0
  %2445 = vmatprep.subr.mxu0 0.0
  %2446 = vmatpush1.msra.mxu0 0.0
  %2447 = vmatprep.subr.mxu0 0.0
  %2448 = vmatpush1.msra.mxu0 0.0
  %2449 = vmatprep.subr.mxu0 0.0
  %2450 = vmatpush1.msra.mxu0 0.0
  %2451 = vmatprep.subr.mxu0 0.0
  %2452 = vmatpush1.msra.mxu0 0.0
  %2453 = vmatprep.subr.mxu0 0.0
  %2454 = vmatpush1.msra.mxu0 0.0
  %2455 = vmatprep.subr.mxu0 0.0
  %2456 = vmatpush1.msra.mxu0 0.0
  %2457 = vmatprep.subr.mxu0 0.0
  %2458 = vmatpush1.msra.mxu0 0.0
  %2459 = vmatprep.subr.mxu0 0.0
  %2460 = vmatpush1.msra.mxu0 %v2426
  %2461 = vmatprep.subr.mxu0 0.0
  %2462 = vmatpush1.msra.mxu0 %v2425
  %2463 = vmatprep.subr.mxu0 0.0
  %2464 = vmatpush1.msra.mxu0 %v2424
  %2465 = vmatprep.subr.mxu0 0.0
  %2466 = vmatpush1.msra.mxu0 %v2423
  %2467 = vmatprep.subr.mxu0 0.0
  %2468 = vmatpush2.msra.mxu0 0.0
  %2469 = vmatprep.subr.mxu0 0.0
  %2470 = vmatpush2.msra.mxu0 0.0
  %2471 = vmatprep.subr.mxu0 0.0
  %2472 = vmatpush2.msra.mxu0 0.0
  %2473 = vmatprep.subr.mxu0 0.0
  %2474 = vmatpush2.msra.mxu0 0.0
  %2475 = vmatprep.subr.mxu0 0.0
  %2476 = vmatpush2.msra.mxu0 0.0
  %2477 = vmatprep.subr.mxu0 0.0
  %2478 = vmatpush2.msra.mxu0 0.0
  %2479 = vmatprep.subr.mxu0 0.0
  %2480 = vmatpush2.msra.mxu0 0.0
  %2481 = vmatprep.subr.mxu0 0.0
  %2482 = vmatpush2.msra.mxu0 0.0
  %2483 = vmatprep.subr.mxu0 0.0
  %2484 = vmatpush2.msra.mxu0 0.0
  %2485 = vmatprep.subr.mxu0 0.0
  %2486 = vmatpush2.msra.mxu0 0.0
  %2487 = vmatprep.subr.mxu0 0.0
  %2488 = vmatpush2.msra.mxu0 0.0
  %2489 = vmatprep.subr.mxu0 0.0
  %2490 = vmatpush2.msra.mxu0 0.0
  %2491 = vmatprep.subr.mxu0 0.0
  %2492 = vmatpush2.msra.mxu0 0.0
  %2493 = vmatprep.subr.mxu0 0.0
  %2494 = vmatpush2.msra.mxu0 0.0
  %2495 = vmatprep.subr.mxu0 0.0
  %2496 = vmatpush2.msra.mxu0 0.0
  %2497 = vmatprep.subr.mxu0 0.0
  %2498 = vmatpush2.msra.mxu0 0.0
  %2499 = vmatprep.mubr.f32.mxu0 0.0
  %2500 = vmatmul.mubr.f32.gmra.mxu0 %v2433
  %v2501 = vpop.f32.mrf.mxu0
  %v2502 = vadd.f32 %v2431, %v2501
  %v2503 = vpop.f32.mrf.mxu0
  %2504 = vdwg.mxu0
  %v2505 = vmul.f32 %v2502, 0.5
  %v2506 = vmul.f32 %v2502, 0.044715
  %v2507 = vmul.f32 %v2506, %v2502
  %v2508 = vmul.f32 %v2507, %v2502
  %v2509 = vadd.f32 %v2502, %v2508
  %v2510 = vmul.f32 %v2509, 0.7978846
  %v2511 = vtanh.pop %v2510
  %v2512 = vadd.f32 %v2511, 1.0
  %v2513 = vmul.f32 %v2505, %v2512
  %v2514 = vld [vmem:[%s2 + $0x3b0] sm:$0xff]
  %v2515 = vld [vmem:[%s2 + $0x3b8] sm:$0xff]
  %v2516 = vld [vmem:[%s2 + $0x3c0] sm:$0xff]
  %v2517 = vld [vmem:[%s2 + $0x3c8] sm:$0xff]
  %v2518 = vld [vmem:[%s2 + $0x3d0] sm:$0xff]
  %v2519 = vld [vmem:[%s2 + $0x3d8] sm:$0xff]
  %v2520 = vld [vmem:[%s2 + $0x3e0] sm:$0xff]
  %v2521 = vld [vmem:[%s2 + $0x3e8] sm:$0xff]
  %v2522 = vld [vmem:[%s2 + $0x3f0] sm:$0xff]
  %v2523 = vld [vmem:[%s2 + $0x3f8] sm:$0xff]
  %v2524 = vld [vmem:[%s2 + $0x400] sm:$0xff]
  %v2525 = vld [vmem:[%s2 + $0x408] sm:$0xff]
  %v2526 = vld [vmem:[%s2 + $0x410] sm:$0xff]
  %v2527 = vld [vmem:[%s2 + $0x418] sm:$0xff]
  %v2528 = vld [vmem:[%s2 + $0x420] sm:$0xff]
  %v2529 = vld [vmem:[%s2 + $0x428] sm:$0xff]
  %v2530 = vld [vmem:[%s2 + $0x581] sm:$0x1]
  %v2531 = vlaneseq
  %v2532 = vshrl.u32 %v2531, 7
  %v2533 = vsub.s32 0, %v2532
  %v2534 = vrot.slane %v2530, %v2533
  %2535 = vmatprep.subr.mxu0 0.0
  %2536 = vmatpush1.msra.mxu0 %v2529
  %2537 = vmatprep.subr.mxu0 0.0
  %2538 = vmatpush1.msra.mxu0 %v2528
  %2539 = vmatprep.subr.mxu0 0.0
  %2540 = vmatpush1.msra.mxu0 %v2527
  %2541 = vmatprep.subr.mxu0 0.0
  %2542 = vmatpush1.msra.mxu0 %v2526
  %2543 = vmatprep.subr.mxu0 0.0
  %2544 = vmatpush1.msra.mxu0 %v2525
  %2545 = vmatprep.subr.mxu0 0.0
  %2546 = vmatpush1.msra.mxu0 %v2524
  %2547 = vmatprep.subr.mxu0 0.0
  %2548 = vmatpush1.msra.mxu0 %v2523
  %2549 = vmatprep.subr.mxu0 0.0
  %2550 = vmatpush1.msra.mxu0 %v2522
  %2551 = vmatprep.subr.mxu0 0.0
  %2552 = vmatpush1.msra.mxu0 %v2521
  %2553 = vmatprep.subr.mxu0 0.0
  %2554 = vmatpush1.msra.mxu0 %v2520
  %2555 = vmatprep.subr.mxu0 0.0
  %2556 = vmatpush1.msra.mxu0 %v2519
  %2557 = vmatprep.subr.mxu0 0.0
  %2558 = vmatpush1.msra.mxu0 %v2518
  %2559 = vmatprep.subr.mxu0 0.0
  %2560 = vmatpush1.msra.mxu0 %v2517
  %2561 = vmatprep.subr.mxu0 0.0
  %2562 = vmatpush1.msra.mxu0 %v2516
  %2563 = vmatprep.subr.mxu0 0.0
  %2564 = vmatpush1.msra.mxu0 %v2515
  %2565 = vmatprep.subr.mxu0 0.0
  %2566 = vmatpush1.msra.mxu0 %v2514
  %2567 = vmatprep.subr.mxu0 0.0
  %2568 = vmatpush2.msra.mxu0 0.0
  %2569 = vmatprep.subr.mxu0 0.0
  %2570 = vmatpush2.msra.mxu0 0.0
  %2571 = vmatprep.subr.mxu0 0.0
  %2572 = vmatpush2.msra.mxu0 0.0
  %2573 = vmatprep.subr.mxu0 0.0
  %2574 = vmatpush2.msra.mxu0 0.0
  %2575 = vmatprep.subr.mxu0 0.0
  %2576 = vmatpush2.msra.mxu0 0.0
  %2577 = vmatprep.subr.mxu0 0.0
  %2578 = vmatpush2.msra.mxu0 0.0
  %2579 = vmatprep.subr.mxu0 0.0
  %2580 = vmatpush2.msra.mxu0 0.0
  %2581 = vmatprep.subr.mxu0 0.0
  %2582 = vmatpush2.msra.mxu0 0.0
  %2583 = vmatprep.subr.mxu0 0.0
  %2584 = vmatpush2.msra.mxu0 0.0
  %2585 = vmatprep.subr.mxu0 0.0
  %2586 = vmatpush2.msra.mxu0 0.0
  %2587 = vmatprep.subr.mxu0 0.0
  %2588 = vmatpush2.msra.mxu0 0.0
  %2589 = vmatprep.subr.mxu0 0.0
  %2590 = vmatpush2.msra.mxu0 0.0
  %2591 = vmatprep.subr.mxu0 0.0
  %2592 = vmatpush2.msra.mxu0 0.0
  %2593 = vmatprep.subr.mxu0 0.0
  %2594 = vmatpush2.msra.mxu0 0.0
  %2595 = vmatprep.subr.mxu0 0.0
  %2596 = vmatpush2.msra.mxu0 0.0
  %2597 = vmatprep.subr.mxu0 0.0
  %2598 = vmatpush2.msra.mxu0 0.0
  %2599 = vmatprep.mubr.f32.mxu0 0.0
  %2600 = vmatmul.mubr.f32.gmra.mxu0 %v2513
  %v2601 = vpop.f32.mrf.mxu0
  %v2602 = vadd.f32 %v2534, %v2601
  %v2603 = vpop.f32.mrf.mxu0
  %2604 = vdwg.mxu0
  %v2605 = vadd.f32 %v2422, %v2602
  %v2606 = vld [vmem:[%s2 + $0x585] sm:$0x1]
  %v2607 = vld [vmem:[%s2 + $0x589] sm:$0x1]
  %v2609 = vsel %vm177, %v2605, 0
  %2611 = vmatprep.subr.mxu0 0.0
  %2612 = vmatpush1.msra.mxu0 0.0
  %2613 = vmatprep.subr.mxu0 0.0
  %2614 = vmatpush1.msra.mxu0 0.0
  %2615 = vmatprep.subr.mxu0 0.0
  %2616 = vmatpush1.msra.mxu0 0.0
  %2617 = vmatprep.subr.mxu0 0.0
  %2618 = vmatpush1.msra.mxu0 0.0
  %2619 = vmatprep.subr.mxu0 0.0
  %2620 = vmatpush1.msra.mxu0 0.0
  %2621 = vmatprep.subr.mxu0 0.0
  %2622 = vmatpush1.msra.mxu0 0.0
  %2623 = vmatprep.subr.mxu0 0.0
  %2624 = vmatpush1.msra.mxu0 0.0
  %2625 = vmatprep.subr.mxu0 0.0
  %2626 = vmatpush1.msra.mxu0 0.0
  %2627 = vmatprep.subr.mxu0 0.0
  %2628 = vmatpush1.msra.mxu0 0.0
  %2629 = vmatprep.subr.mxu0 0.0
  %2630 = vmatpush1.msra.mxu0 0.0
  %2631 = vmatprep.subr.mxu0 0.0
  %2632 = vmatpush1.msra.mxu0 0.0
  %2633 = vmatprep.subr.mxu0 0.0
  %2634 = vmatpush1.msra.mxu0 0.0
  %2635 = vmatprep.subr.mxu0 0.0
  %2636 = vmatpush1.msra.mxu0 %v991
  %2637 = vmatprep.subr.mxu0 0.0
  %2638 = vmatpush1.msra.mxu0 %v990
  %2639 = vmatprep.subr.mxu0 0.0
  %2640 = vmatpush1.msra.mxu0 %v989
  %2641 = vmatprep.subr.mxu0 0.0
  %2642 = vmatpush1.msra.mxu0 %v988
  %2643 = vmatprep.subr.mxu0 0.0
  %2644 = vmatpush2.msra.mxu0 0.0
  %2645 = vmatprep.subr.mxu0 0.0
  %2646 = vmatpush2.msra.mxu0 0.0
  %2647 = vmatprep.subr.mxu0 0.0
  %2648 = vmatpush2.msra.mxu0 0.0
  %2649 = vmatprep.subr.mxu0 0.0
  %2650 = vmatpush2.msra.mxu0 0.0
  %2651 = vmatprep.subr.mxu0 0.0
  %2652 = vmatpush2.msra.mxu0 0.0
  %2653 = vmatprep.subr.mxu0 0.0
  %2654 = vmatpush2.msra.mxu0 0.0
  %2655 = vmatprep.subr.mxu0 0.0
  %2656 = vmatpush2.msra.mxu0 0.0
  %2657 = vmatprep.subr.mxu0 0.0
  %2658 = vmatpush2.msra.mxu0 0.0
  %2659 = vmatprep.subr.mxu0 0.0
  %2660 = vmatpush2.msra.mxu0 0.0
  %2661 = vmatprep.subr.mxu0 0.0
  %2662 = vmatpush2.msra.mxu0 0.0
  %2663 = vmatprep.subr.mxu0 0.0
  %2664 = vmatpush2.msra.mxu0 0.0
  %2665 = vmatprep.subr.mxu0 0.0
  %2666 = vmatpush2.msra.mxu0 0.0
  %2667 = vmatprep.subr.mxu0 0.0
  %2668 = vmatpush2.msra.mxu0 0.0
  %2669 = vmatprep.subr.mxu0 0.0
  %2670 = vmatpush2.msra.mxu0 0.0
  %2671 = vmatprep.subr.mxu0 0.0
  %2672 = vmatpush2.msra.mxu0 0.0
  %2673 = vmatprep.subr.mxu0 0.0
  %2674 = vmatpush2.msra.mxu0 0.0
  %2675 = vmatprep.mubr.f32.mxu0 0.0
  %2676 = vmatmul.mubr.f32.gmra.mxu0 %v2609
  %v2677 = vpop.f32.mrf.mxu0
  %v2678 = vadd.f32 0.0, %v2677
  %v2679 = vpop.f32.mrf.mxu0
  %2680 = vdwg.mxu0
  %v2681 = vsub.f32 %v2605, %v2678
  %v2682 = vmul.f32 %v2681, %v2681
  %v2684 = vsel %vm177, %v2682, 0
  %2686 = vmatprep.subr.mxu0 0.0
  %2687 = vmatpush1.msra.mxu0 0.0
  %2688 = vmatprep.subr.mxu0 0.0
  %2689 = vmatpush1.msra.mxu0 0.0
  %2690 = vmatprep.subr.mxu0 0.0
  %2691 = vmatpush1.msra.mxu0 0.0
  %2692 = vmatprep.subr.mxu0 0.0
  %2693 = vmatpush1.msra.mxu0 0.0
  %2694 = vmatprep.subr.mxu0 0.0
  %2695 = vmatpush1.msra.mxu0 0.0
  %2696 = vmatprep.subr.mxu0 0.0
  %2697 = vmatpush1.msra.mxu0 0.0
  %2698 = vmatprep.subr.mxu0 0.0
  %2699 = vmatpush1.msra.mxu0 0.0
  %2700 = vmatprep.subr.mxu0 0.0
  %2701 = vmatpush1.msra.mxu0 0.0
  %2702 = vmatprep.subr.mxu0 0.0
  %2703 = vmatpush1.msra.mxu0 0.0
  %2704 = vmatprep.subr.mxu0 0.0
  %2705 = vmatpush1.msra.mxu0 0.0
  %2706 = vmatprep.subr.mxu0 0.0
  %2707 = vmatpush1.msra.mxu0 0.0
  %2708 = vmatprep.subr.mxu0 0.0
  %2709 = vmatpush1.msra.mxu0 0.0
  %2710 = vmatprep.subr.mxu0 0.0
  %2711 = vmatpush1.msra.mxu0 %v991
  %2712 = vmatprep.subr.mxu0 0.0
  %2713 = vmatpush1.msra.mxu0 %v990
  %2714 = vmatprep.subr.mxu0 0.0
  %2715 = vmatpush1.msra.mxu0 %v989
  %2716 = vmatprep.subr.mxu0 0.0
  %2717 = vmatpush1.msra.mxu0 %v988
  %2718 = vmatprep.subr.mxu0 0.0
  %2719 = vmatpush2.msra.mxu0 0.0
  %2720 = vmatprep.subr.mxu0 0.0
  %2721 = vmatpush2.msra.mxu0 0.0
  %2722 = vmatprep.subr.mxu0 0.0
  %2723 = vmatpush2.msra.mxu0 0.0
  %2724 = vmatprep.subr.mxu0 0.0
  %2725 = vmatpush2.msra.mxu0 0.0
  %2726 = vmatprep.subr.mxu0 0.0
  %2727 = vmatpush2.msra.mxu0 0.0
  %2728 = vmatprep.subr.mxu0 0.0
  %2729 = vmatpush2.msra.mxu0 0.0
  %2730 = vmatprep.subr.mxu0 0.0
  %2731 = vmatpush2.msra.mxu0 0.0
  %2732 = vmatprep.subr.mxu0 0.0
  %2733 = vmatpush2.msra.mxu0 0.0
  %2734 = vmatprep.subr.mxu0 0.0
  %2735 = vmatpush2.msra.mxu0 0.0
  %2736 = vmatprep.subr.mxu0 0.0
  %2737 = vmatpush2.msra.mxu0 0.0
  %2738 = vmatprep.subr.mxu0 0.0
  %2739 = vmatpush2.msra.mxu0 0.0
  %2740 = vmatprep.subr.mxu0 0.0
  %2741 = vmatpush2.msra.mxu0 0.0
  %2742 = vmatprep.subr.mxu0 0.0
  %2743 = vmatpush2.msra.mxu0 0.0
  %2744 = vmatprep.subr.mxu0 0.0
  %2745 = vmatpush2.msra.mxu0 0.0
  %2746 = vmatprep.subr.mxu0 0.0
  %2747 = vmatpush2.msra.mxu0 0.0
  %2748 = vmatprep.subr.mxu0 0.0
  %2749 = vmatpush2.msra.mxu0 0.0
  %2750 = vmatprep.mubr.f32.mxu0 0.0
  %2751 = vmatmul.mubr.f32.gmra.mxu0 %v2684
  %v2752 = vpop.f32.mrf.mxu0
  %v2753 = vadd.f32 1e-05, %v2752
  %v2754 = vpop.f32.mrf.mxu0
  %2755 = vdwg.mxu0
  %v2756 = vrsqrt.pop %v2753
  %v2757 = vmul.f32 %v2681, %v2756
  %v2758 = vlaneseq
  %v2759 = vshrl.u32 %v2758, 7
  %v2760 = vsub.s32 0, %v2759
  %v2761 = vrot.slane %v2606, %v2760
  %v2762 = vmul.f32 %v2757, %v2761
  %v2763 = vlaneseq
  %v2764 = vshrl.u32 %v2763, 7
  %v2765 = vsub.s32 0, %v2764
  %v2766 = vrot.slane %v2607, %v2765
  %v2767 = vadd.f32 %v2762, %v2766
  %v2768 = vld [vmem:[%s2 + $0x290] sm:$0xff]
  %v2769 = vld [vmem:[%s2 + $0x298] sm:$0xff]
  %v2770 = vld [vmem:[%s2 + $0x2a0] sm:$0xff]
  %v2771 = vld [vmem:[%s2 + $0x2a8] sm:$0xff]
  %v2772 = vld [vmem:[%s2 + $0x576] sm:$0x1]
  %v2773 = vlaneseq
  %v2774 = vshrl.u32 %v2773, 7
  %v2775 = vsub.s32 0, %v2774
  %v2776 = vrot.slane %v2772, %v2775
  %v2778 = vsel %vm177, %v2767, 0
  %2780 = vmatprep.subr.mxu0 0.0
  %2781 = vmatpush1.msra.mxu0 0.0
  %2782 = vmatprep.subr.mxu0 0.0
  %2783 = vmatpush1.msra.mxu0 0.0
  %2784 = vmatprep.subr.mxu0 0.0
  %2785 = vmatpush1.msra.mxu0 0.0
  %2786 = vmatprep.subr.mxu0 0.0
  %2787 = vmatpush1.msra.mxu0 0.0
  %2788 = vmatprep.subr.mxu0 0.0
  %2789 = vmatpush1.msra.mxu0 0.0
  %2790 = vmatprep.subr.mxu0 0.0
  %2791 = vmatpush1.msra.mxu0 0.0
  %2792 = vmatprep.subr.mxu0 0.0
  %2793 = vmatpush1.msra.mxu0 0.0
  %2794 = vmatprep.subr.mxu0 0.0
  %2795 = vmatpush1.msra.mxu0 0.0
  %2796 = vmatprep.subr.mxu0 0.0
  %2797 = vmatpush1.msra.mxu0 0.0
  %2798 = vmatprep.subr.mxu0 0.0
  %2799 = vmatpush1.msra.mxu0 0.0
  %2800 = vmatprep.subr.mxu0 0.0
  %2801 = vmatpush1.msra.mxu0 0.0
  %2802 = vmatprep.subr.mxu0 0.0
  %2803 = vmatpush1.msra.mxu0 0.0
  %2804 = vmatprep.subr.mxu0 0.0
  %2805 = vmatpush1.msra.mxu0 %v2771
  %2806 = vmatprep.subr.mxu0 0.0
  %2807 = vmatpush1.msra.mxu0 %v2770
  %2808 = vmatprep.subr.mxu0 0.0
  %2809 = vmatpush1.msra.mxu0 %v2769
  %2810 = vmatprep.subr.mxu0 0.0
  %2811 = vmatpush1.msra.mxu0 %v2768
  %2812 = vmatprep.subr.mxu0 0.0
  %2813 = vmatpush2.msra.mxu0 0.0
  %2814 = vmatprep.subr.mxu0 0.0
  %2815 = vmatpush2.msra.mxu0 0.0
  %2816 = vmatprep.subr.mxu0 0.0
  %2817 = vmatpush2.msra.mxu0 0.0
  %2818 = vmatprep.subr.mxu0 0.0
  %2819 = vmatpush2.msra.mxu0 0.0
  %2820 = vmatprep.subr.mxu0 0.0
  %2821 = vmatpush2.msra.mxu0 0.0
  %2822 = vmatprep.subr.mxu0 0.0
  %2823 = vmatpush2.msra.mxu0 0.0
  %2824 = vmatprep.subr.mxu0 0.0
  %2825 = vmatpush2.msra.mxu0 0.0
  %2826 = vmatprep.subr.mxu0 0.0
  %2827 = vmatpush2.msra.mxu0 0.0
  %2828 = vmatprep.subr.mxu0 0.0
  %2829 = vmatpush2.msra.mxu0 0.0
  %2830 = vmatprep.subr.mxu0 0.0
  %2831 = vmatpush2.msra.mxu0 0.0
  %2832 = vmatprep.subr.mxu0 0.0
  %2833 = vmatpush2.msra.mxu0 0.0
  %2834 = vmatprep.subr.mxu0 0.0
  %2835 = vmatpush2.msra.mxu0 0.0
  %2836 = vmatprep.subr.mxu0 0.0
  %2837 = vmatpush2.msra.mxu0 0.0
  %2838 = vmatprep.subr.mxu0 0.0
  %2839 = vmatpush2.msra.mxu0 0.0
  %2840 = vmatprep.subr.mxu0 0.0
  %2841 = vmatpush2.msra.mxu0 0.0
  %2842 = vmatprep.subr.mxu0 0.0
  %2843 = vmatpush2.msra.mxu0 0.0
  %2844 = vmatprep.mubr.f32.mxu0 0.0
  %2845 = vmatmul.mubr.f32.gmra.mxu0 %v2778
  %v2846 = vpop.f32.mrf.mxu0
  %v2847 = vadd.f32 %v2776, %v2846
  %v2848 = vpop.f32.mrf.mxu0
  %2849 = vdwg.mxu0
  %v2850 = vadd.f32 %v2767, %v2847
  %v2851 = vld [vmem:[%s2 + $0x57a] sm:$0x1]
  %v2852 = vld [vmem:[%s2 + $0x57e] sm:$0x1]
  %v2854 = vsel %vm177, %v2850, 0
  %2856 = vmatprep.subr.mxu0 0.0
  %2857 = vmatpush1.msra.mxu0 0.0
  %2858 = vmatprep.subr.mxu0 0.0
  %2859 = vmatpush1.msra.mxu0 0.0
  %2860 = vmatprep.subr.mxu0 0.0
  %2861 = vmatpush1.msra.mxu0 0.0
  %2862 = vmatprep.subr.mxu0 0.0
  %2863 = vmatpush1.msra.mxu0 0.0
  %2864 = vmatprep.subr.mxu0 0.0
  %2865 = vmatpush1.msra.mxu0 0.0
  %2866 = vmatprep.subr.mxu0 0.0
  %2867 = vmatpush1.msra.mxu0 0.0
  %2868 = vmatprep.subr.mxu0 0.0
  %2869 = vmatpush1.msra.mxu0 0.0
  %2870 = vmatprep.subr.mxu0 0.0
  %2871 = vmatpush1.msra.mxu0 0.0
  %2872 = vmatprep.subr.mxu0 0.0
  %2873 = vmatpush1.msra.mxu0 0.0
  %2874 = vmatprep.subr.mxu0 0.0
  %2875 = vmatpush1.msra.mxu0 0.0
  %2876 = vmatprep.subr.mxu0 0.0
  %2877 = vmatpush1.msra.mxu0 0.0
  %2878 = vmatprep.subr.mxu0 0.0
  %2879 = vmatpush1.msra.mxu0 0.0
  %2880 = vmatprep.subr.mxu0 0.0
  %2881 = vmatpush1.msra.mxu0 %v991
  %2882 = vmatprep.subr.mxu0 0.0
  %2883 = vmatpush1.msra.mxu0 %v990
  %2884 = vmatprep.subr.mxu0 0.0
  %2885 = vmatpush1.msra.mxu0 %v989
  %2886 = vmatprep.subr.mxu0 0.0
  %2887 = vmatpush1.msra.mxu0 %v988
  %2888 = vmatprep.subr.mxu0 0.0
  %2889 = vmatpush2.msra.mxu0 0.0
  %2890 = vmatprep.subr.mxu0 0.0
  %2891 = vmatpush2.msra.mxu0 0.0
  %2892 = vmatprep.subr.mxu0 0.0
  %2893 = vmatpush2.msra.mxu0 0.0
  %2894 = vmatprep.subr.mxu0 0.0
  %2895 = vmatpush2.msra.mxu0 0.0
  %2896 = vmatprep.subr.mxu0 0.0
  %2897 = vmatpush2.msra.mxu0 0.0
  %2898 = vmatprep.subr.mxu0 0.0
  %2899 = vmatpush2.msra.mxu0 0.0
  %2900 = vmatprep.subr.mxu0 0.0
  %2901 = vmatpush2.msra.mxu0 0.0
  %2902 = vmatprep.subr.mxu0 0.0
  %2903 = vmatpush2.msra.mxu0 0.0
  %2904 = vmatprep.subr.mxu0 0.0
  %2905 = vmatpush2.msra.mxu0 0.0
  %2906 = vmatprep.subr.mxu0 0.0
  %2907 = vmatpush2.msra.mxu0 0.0
  %2908 = vmatprep.subr.mxu0 0.0
  %2909 = vmatpush2.msra.mxu0 0.0
  %2910 = vmatprep.subr.mxu0 0.0
  %2911 = vmatpush2.msra.mxu0 0.0
  %2912 = vmatprep.subr.mxu0 0.0
  %2913 = vmatpush2.msra.mxu0 0.0
  %2914 = vmatprep.subr.mxu0 0.0
  %2915 = vmatpush2.msra.mxu0 0.0
  %2916 = vmatprep.subr.mxu0 0.0
  %2917 = vmatpush2.msra.mxu0 0.0
  %2918 = vmatprep.subr.mxu0 0.0
  %2919 = vmatpush2.msra.mxu0 0.0
  %2920 = vmatprep.mubr.f32.mxu0 0.0
  %2921 = vmatmul.mubr.f32.gmra.mxu0 %v2854
  %v2922 = vpop.f32.mrf.mxu0
  %v2923 = vadd.f32 0.0, %v2922
  %v2924 = vpop.f32.mrf.mxu0
  %2925 = vdwg.mxu0
  %v2926 = vsub.f32 %v2850, %v2923
  %v2927 = vmul.f32 %v2926, %v2926
  %v2929 = vsel %vm177, %v2927, 0
  %2931 = vmatprep.subr.mxu0 0.0
  %2932 = vmatpush1.msra.mxu0 0.0
  %2933 = vmatprep.subr.mxu0 0.0
  %2934 = vmatpush1.msra.mxu0 0.0
  %2935 = vmatprep.subr.mxu0 0.0
  %2936 = vmatpush1.msra.mxu0 0.0
  %2937 = vmatprep.subr.mxu0 0.0
  %2938 = vmatpush1.msra.mxu0 0.0
  %2939 = vmatprep.subr.mxu0 0.0
  %2940 = vmatpush1.msra.mxu0 0.0
  %2941 = vmatprep.subr.mxu0 0.0
  %2942 = vmatpush1.msra.mxu0 0.0
  %2943 = vmatprep.subr.mxu0 0.0
  %2944 = vmatpush1.msra.mxu0 0.0
  %2945 = vmatprep.subr.mxu0 0.0
  %2946 = vmatpush1.msra.mxu0 0.0
  %2947 = vmatprep.subr.mxu0 0.0
  %2948 = vmatpush1.msra.mxu0 0.0
  %2949 = vmatprep.subr.mxu0 0.0
  %2950 = vmatpush1.msra.mxu0 0.0
  %2951 = vmatprep.subr.mxu0 0.0
  %2952 = vmatpush1.msra.mxu0 0.0
  %2953 = vmatprep.subr.mxu0 0.0
  %2954 = vmatpush1.msra.mxu0 0.0
  %2955 = vmatprep.subr.mxu0 0.0
  %2956 = vmatpush1.msra.mxu0 %v991
  %2957 = vmatprep.subr.mxu0 0.0
  %2958 = vmatpush1.msra.mxu0 %v990
  %2959 = vmatprep.subr.mxu0 0.0
  %2960 = vmatpush1.msra.mxu0 %v989
  %2961 = vmatprep.subr.mxu0 0.0
  %2962 = vmatpush1.msra.mxu0 %v988
  %2963 = vmatprep.subr.mxu0 0.0
  %2964 = vmatpush2.msra.mxu0 0.0
  %2965 = vmatprep.subr.mxu0 0.0
  %2966 = vmatpush2.msra.mxu0 0.0
  %2967 = vmatprep.subr.mxu0 0.0
  %2968 = vmatpush2.msra.mxu0 0.0
  %2969 = vmatprep.subr.mxu0 0.0
  %2970 = vmatpush2.msra.mxu0 0.0
  %2971 = vmatprep.subr.mxu0 0.0
  %2972 = vmatpush2.msra.mxu0 0.0
  %2973 = vmatprep.subr.mxu0 0.0
  %2974 = vmatpush2.msra.mxu0 0.0
  %2975 = vmatprep.subr.mxu0 0.0
  %2976 = vmatpush2.msra.mxu0 0.0
  %2977 = vmatprep.subr.mxu0 0.0
  %2978 = vmatpush2.msra.mxu0 0.0
  %2979 = vmatprep.subr.mxu0 0.0
  %2980 = vmatpush2.msra.mxu0 0.0
  %2981 = vmatprep.subr.mxu0 0.0
  %2982 = vmatpush2.msra.mxu0 0.0
  %2983 = vmatprep.subr.mxu0 0.0
  %2984 = vmatpush2.msra.mxu0 0.0
  %2985 = vmatprep.subr.mxu0 0.0
  %2986 = vmatpush2.msra.mxu0 0.0
  %2987 = vmatprep.subr.mxu0 0.0
  %2988 = vmatpush2.msra.mxu0 0.0
  %2989 = vmatprep.subr.mxu0 0.0
  %2990 = vmatpush2.msra.mxu0 0.0
  %2991 = vmatprep.subr.mxu0 0.0
  %2992 = vmatpush2.msra.mxu0 0.0
  %2993 = vmatprep.subr.mxu0 0.0
  %2994 = vmatpush2.msra.mxu0 0.0
  %2995 = vmatprep.mubr.f32.mxu0 0.0
  %2996 = vmatmul.mubr.f32.gmra.mxu0 %v2929
  %v2997 = vpop.f32.mrf.mxu0
  %v2998 = vadd.f32 1e-05, %v2997
  %v2999 = vpop.f32.mrf.mxu0
  %3000 = vdwg.mxu0
  %v3001 = vrsqrt.pop %v2998
  %v3002 = vmul.f32 %v2926, %v3001
  %v3003 = vlaneseq
  %v3004 = vshrl.u32 %v3003, 7
  %v3005 = vsub.s32 0, %v3004
  %v3006 = vrot.slane %v2851, %v3005
  %v3007 = vmul.f32 %v3002, %v3006
  %v3008 = vlaneseq
  %v3009 = vshrl.u32 %v3008, 7
  %v3010 = vsub.s32 0, %v3009
  %v3011 = vrot.slane %v2852, %v3010
  %v3012 = vadd.f32 %v3007, %v3011
  %v3013 = vld [vmem:[%s1 + $0xf4] sm:$0xff]
  %v3014 = vld [vmem:[%s1 + $0xfc] sm:$0xff]
  %v3015 = vld [vmem:[%s1 + $0x104] sm:$0xff]
  %v3016 = vld [vmem:[%s1 + $0x10c] sm:$0xff]
  %v3017 = vld [vmem:[%s1 + $0x117] sm:$0x1]
  %v3018 = vlaneseq
  %v3019 = vshrl.u32 %v3018, 7
  %v3020 = vsub.s32 0, %v3019
  %v3021 = vrot.slane %v3017, %v3020
  %v3023 = vsel %vm177, %v3012, 0
  %3025 = vmatprep.subr.mxu0 0.0
  %3026 = vmatpush1.msra.mxu0 0.0
  %3027 = vmatprep.subr.mxu0 0.0
  %3028 = vmatpush1.msra.mxu0 0.0
  %3029 = vmatprep.subr.mxu0 0.0
  %3030 = vmatpush1.msra.mxu0 0.0
  %3031 = vmatprep.subr.mxu0 0.0
  %3032 = vmatpush1.msra.mxu0 0.0
  %3033 = vmatprep.subr.mxu0 0.0
  %3034 = vmatpush1.msra.mxu0 0.0
  %3035 = vmatprep.subr.mxu0 0.0
  %3036 = vmatpush1.msra.mxu0 0.0
  %3037 = vmatprep.subr.mxu0 0.0
  %3038 = vmatpush1.msra.mxu0 0.0
  %3039 = vmatprep.subr.mxu0 0.0
  %3040 = vmatpush1.msra.mxu0 0.0
  %3041 = vmatprep.subr.mxu0 0.0
  %3042 = vmatpush1.msra.mxu0 0.0
  %3043 = vmatprep.subr.mxu0 0.0
  %3044 = vmatpush1.msra.mxu0 0.0
  %3045 = vmatprep.subr.mxu0 0.0
  %3046 = vmatpush1.msra.mxu0 0.0
  %3047 = vmatprep.subr.mxu0 0.0
  %3048 = vmatpush1.msra.mxu0 0.0
  %3049 = vmatprep.subr.mxu0 0.0
  %3050 = vmatpush1.msra.mxu0 %v3016
  %3051 = vmatprep.subr.mxu0 0.0
  %3052 = vmatpush1.msra.mxu0 %v3015
  %3053 = vmatprep.subr.mxu0 0.0
  %3054 = vmatpush1.msra.mxu0 %v3014
  %3055 = vmatprep.subr.mxu0 0.0
  %3056 = vmatpush1.msra.mxu0 %v3013
  %3057 = vmatprep.subr.mxu0 0.0
  %3058 = vmatpush2.msra.mxu0 0.0
  %3059 = vmatprep.subr.mxu0 0.0
  %3060 = vmatpush2.msra.mxu0 0.0
  %3061 = vmatprep.subr.mxu0 0.0
  %3062 = vmatpush2.msra.mxu0 0.0
  %3063 = vmatprep.subr.mxu0 0.0
  %3064 = vmatpush2.msra.mxu0 0.0
  %3065 = vmatprep.subr.mxu0 0.0
  %3066 = vmatpush2.msra.mxu0 0.0
  %3067 = vmatprep.subr.mxu0 0.0
  %3068 = vmatpush2.msra.mxu0 0.0
  %3069 = vmatprep.subr.mxu0 0.0
  %3070 = vmatpush2.msra.mxu0 0.0
  %3071 = vmatprep.subr.mxu0 0.0
  %3072 = vmatpush2.msra.mxu0 0.0
  %3073 = vmatprep.subr.mxu0 0.0
  %3074 = vmatpush2.msra.mxu0 0.0
  %3075 = vmatprep.subr.mxu0 0.0
  %3076 = vmatpush2.msra.mxu0 0.0
  %3077 = vmatprep.subr.mxu0 0.0
  %3078 = vmatpush2.msra.mxu0 0.0
  %3079 = vmatprep.subr.mxu0 0.0
  %3080 = vmatpush2.msra.mxu0 0.0
  %3081 = vmatprep.subr.mxu0 0.0
  %3082 = vmatpush2.msra.mxu0 0.0
  %3083 = vmatprep.subr.mxu0 0.0
  %3084 = vmatpush2.msra.mxu0 0.0
  %3085 = vmatprep.subr.mxu0 0.0
  %3086 = vmatpush2.msra.mxu0 0.0
  %3087 = vmatprep.subr.mxu0 0.0
  %3088 = vmatpush2.msra.mxu0 0.0
  %3089 = vmatprep.mubr.f32.mxu0 0.0
  %3090 = vmatmul.mubr.f32.gmra.mxu0 %v3023
  %v3091 = vpop.f32.mrf.mxu0
  %v3092 = vadd.f32 %v3021, %v3091
  %v3093 = vpop.f32.mrf.mxu0
  %3094 = vdwg.mxu0
  %v3095 = vmul.f32 %v3092, 0.5
  %v3096 = vmul.f32 %v3092, 0.044715
  %v3097 = vmul.f32 %v3096, %v3092
  %v3098 = vmul.f32 %v3097, %v3092
  %v3099 = vadd.f32 %v3092, %v3098
  %v3100 = vmul.f32 %v3099, 0.7978846
  %v3101 = vtanh.pop %v3100
  %v3102 = vadd.f32 %v3101, 1.0
  %v3103 = vmul.f32 %v3095, %v3102
  %v3104 = vld [vmem:[%s2 + $0x430] sm:$0xff]
  %v3105 = vld [vmem:[%s2 + $0x438] sm:$0xff]
  %v3106 = vld [vmem:[%s2 + $0x440] sm:$0xff]
  %v3107 = vld [vmem:[%s2 + $0x448] sm:$0xff]
  %v3108 = vld [vmem:[%s2 + $0x450] sm:$0xff]
  %v3109 = vld [vmem:[%s2 + $0x458] sm:$0xff]
  %v3110 = vld [vmem:[%s2 + $0x460] sm:$0xff]
  %v3111 = vld [vmem:[%s2 + $0x468] sm:$0xff]
  %v3112 = vld [vmem:[%s2 + $0x470] sm:$0xff]
  %v3113 = vld [vmem:[%s2 + $0x478] sm:$0xff]
  %v3114 = vld [vmem:[%s2 + $0x480] sm:$0xff]
  %v3115 = vld [vmem:[%s2 + $0x488] sm:$0xff]
  %v3116 = vld [vmem:[%s2 + $0x490] sm:$0xff]
  %v3117 = vld [vmem:[%s2 + $0x498] sm:$0xff]
  %v3118 = vld [vmem:[%s2 + $0x4a0] sm:$0xff]
  %v3119 = vld [vmem:[%s2 + $0x4a8] sm:$0xff]
  %v3120 = vld [vmem:[%s2 + $0x582] sm:$0x1]
  %v3121 = vlaneseq
  %v3122 = vshrl.u32 %v3121, 7
  %v3123 = vsub.s32 0, %v3122
  %v3124 = vrot.slane %v3120, %v3123
  %3125 = vmatprep.subr.mxu0 0.0
  %3126 = vmatpush1.msra.mxu0 %v3119
  %3127 = vmatprep.subr.mxu0 0.0
  %3128 = vmatpush1.msra.mxu0 %v3118
  %3129 = vmatprep.subr.mxu0 0.0
  %3130 = vmatpush1.msra.mxu0 %v3117
  %3131 = vmatprep.subr.mxu0 0.0
  %3132 = vmatpush1.msra.mxu0 %v3116
  %3133 = vmatprep.subr.mxu0 0.0
  %3134 = vmatpush1.msra.mxu0 %v3115
  %3135 = vmatprep.subr.mxu0 0.0
  %3136 = vmatpush1.msra.mxu0 %v3114
  %3137 = vmatprep.subr.mxu0 0.0
  %3138 = vmatpush1.msra.mxu0 %v3113
  %3139 = vmatprep.subr.mxu0 0.0
  %3140 = vmatpush1.msra.mxu0 %v3112
  %3141 = vmatprep.subr.mxu0 0.0
  %3142 = vmatpush1.msra.mxu0 %v3111
  %3143 = vmatprep.subr.mxu0 0.0
  %3144 = vmatpush1.msra.mxu0 %v3110
  %3145 = vmatprep.subr.mxu0 0.0
  %3146 = vmatpush1.msra.mxu0 %v3109
  %3147 = vmatprep.subr.mxu0 0.0
  %3148 = vmatpush1.msra.mxu0 %v3108
  %3149 = vmatprep.subr.mxu0 0.0
  %3150 = vmatpush1.msra.mxu0 %v3107
  %3151 = vmatprep.subr.mxu0 0.0
  %3152 = vmatpush1.msra.mxu0 %v3106
  %3153 = vmatprep.subr.mxu0 0.0
  %3154 = vmatpush1.msra.mxu0 %v3105
  %3155 = vmatprep.subr.mxu0 0.0
  %3156 = vmatpush1.msra.mxu0 %v3104
  %3157 = vmatprep.subr.mxu0 0.0
  %3158 = vmatpush2.msra.mxu0 0.0
  %3159 = vmatprep.subr.mxu0 0.0
  %3160 = vmatpush2.msra.mxu0 0.0
  %3161 = vmatprep.subr.mxu0 0.0
  %3162 = vmatpush2.msra.mxu0 0.0
  %3163 = vmatprep.subr.mxu0 0.0
  %3164 = vmatpush2.msra.mxu0 0.0
  %3165 = vmatprep.subr.mxu0 0.0
  %3166 = vmatpush2.msra.mxu0 0.0
  %3167 = vmatprep.subr.mxu0 0.0
  %3168 = vmatpush2.msra.mxu0 0.0
  %3169 = vmatprep.subr.mxu0 0.0
  %3170 = vmatpush2.msra.mxu0 0.0
  %3171 = vmatprep.subr.mxu0 0.0
  %3172 = vmatpush2.msra.mxu0 0.0
  %3173 = vmatprep.subr.mxu0 0.0
  %3174 = vmatpush2.msra.mxu0 0.0
  %3175 = vmatprep.subr.mxu0 0.0
  %3176 = vmatpush2.msra.mxu0 0.0
  %3177 = vmatprep.subr.mxu0 0.0
  %3178 = vmatpush2.msra.mxu0 0.0
  %3179 = vmatprep.subr.mxu0 0.0
  %3180 = vmatpush2.msra.mxu0 0.0
  %3181 = vmatprep.subr.mxu0 0.0
  %3182 = vmatpush2.msra.mxu0 0.0
  %3183 = vmatprep.subr.mxu0 0.0
  %3184 = vmatpush2.msra.mxu0 0.0
  %3185 = vmatprep.subr.mxu0 0.0
  %3186 = vmatpush2.msra.mxu0 0.0
  %3187 = vmatprep.subr.mxu0 0.0
  %3188 = vmatpush2.msra.mxu0 0.0
  %3189 = vmatprep.mubr.f32.mxu0 0.0
  %3190 = vmatmul.mubr.f32.gmra.mxu0 %v3103
  %v3191 = vpop.f32.mrf.mxu0
  %v3192 = vadd.f32 %v3124, %v3191
  %v3193 = vpop.f32.mrf.mxu0
  %3194 = vdwg.mxu0
  %v3195 = vadd.f32 %v3012, %v3192
  %v3196 = vld [vmem:[%s2 + $0x586] sm:$0x1]
  %v3197 = vld [vmem:[%s2 + $0x58a] sm:$0x1]
  %v3199 = vsel %vm177, %v3195, 0
  %3201 = vmatprep.subr.mxu0 0.0
  %3202 = vmatpush1.msra.mxu0 0.0
  %3203 = vmatprep.subr.mxu0 0.0
  %3204 = vmatpush1.msra.mxu0 0.0
  %3205 = vmatprep.subr.mxu0 0.0
  %3206 = vmatpush1.msra.mxu0 0.0
  %3207 = vmatprep.subr.mxu0 0.0
  %3208 = vmatpush1.msra.mxu0 0.0
  %3209 = vmatprep.subr.mxu0 0.0
  %3210 = vmatpush1.msra.mxu0 0.0
  %3211 = vmatprep.subr.mxu0 0.0
  %3212 = vmatpush1.msra.mxu0 0.0
  %3213 = vmatprep.subr.mxu0 0.0
  %3214 = vmatpush1.msra.mxu0 0.0
  %3215 = vmatprep.subr.mxu0 0.0
  %3216 = vmatpush1.msra.mxu0 0.0
  %3217 = vmatprep.subr.mxu0 0.0
  %3218 = vmatpush1.msra.mxu0 0.0
  %3219 = vmatprep.subr.mxu0 0.0
  %3220 = vmatpush1.msra.mxu0 0.0
  %3221 = vmatprep.subr.mxu0 0.0
  %3222 = vmatpush1.msra.mxu0 0.0
  %3223 = vmatprep.subr.mxu0 0.0
  %3224 = vmatpush1.msra.mxu0 0.0
  %3225 = vmatprep.subr.mxu0 0.0
  %3226 = vmatpush1.msra.mxu0 %v991
  %3227 = vmatprep.subr.mxu0 0.0
  %3228 = vmatpush1.msra.mxu0 %v990
  %3229 = vmatprep.subr.mxu0 0.0
  %3230 = vmatpush1.msra.mxu0 %v989
  %3231 = vmatprep.subr.mxu0 0.0
  %3232 = vmatpush1.msra.mxu0 %v988
  %3233 = vmatprep.subr.mxu0 0.0
  %3234 = vmatpush2.msra.mxu0 0.0
  %3235 = vmatprep.subr.mxu0 0.0
  %3236 = vmatpush2.msra.mxu0 0.0
  %3237 = vmatprep.subr.mxu0 0.0
  %3238 = vmatpush2.msra.mxu0 0.0
  %3239 = vmatprep.subr.mxu0 0.0
  %3240 = vmatpush2.msra.mxu0 0.0
  %3241 = vmatprep.subr.mxu0 0.0
  %3242 = vmatpush2.msra.mxu0 0.0
  %3243 = vmatprep.subr.mxu0 0.0
  %3244 = vmatpush2.msra.mxu0 0.0
  %3245 = vmatprep.subr.mxu0 0.0
  %3246 = vmatpush2.msra.mxu0 0.0
  %3247 = vmatprep.subr.mxu0 0.0
  %3248 = vmatpush2.msra.mxu0 0.0
  %3249 = vmatprep.subr.mxu0 0.0
  %3250 = vmatpush2.msra.mxu0 0.0
  %3251 = vmatprep.subr.mxu0 0.0
  %3252 = vmatpush2.msra.mxu0 0.0
  %3253 = vmatprep.subr.mxu0 0.0
  %3254 = vmatpush2.msra.mxu0 0.0
  %3255 = vmatprep.subr.mxu0 0.0
  %3256 = vmatpush2.msra.mxu0 0.0
  %3257 = vmatprep.subr.mxu0 0.0
  %3258 = vmatpush2.msra.mxu0 0.0
  %3259 = vmatprep.subr.mxu0 0.0
  %3260 = vmatpush2.msra.mxu0 0.0
  %3261 = vmatprep.subr.mxu0 0.0
  %3262 = vmatpush2.msra.mxu0 0.0
  %3263 = vmatprep.subr.mxu0 0.0
  %3264 = vmatpush2.msra.mxu0 0.0
  %3265 = vmatprep.mubr.f32.mxu0 0.0
  %3266 = vmatmul.mubr.f32.gmra.mxu0 %v3199
  %v3267 = vpop.f32.mrf.mxu0
  %v3268 = vadd.f32 0.0, %v3267
  %v3269 = vpop.f32.mrf.mxu0
  %3270 = vdwg.mxu0
  %v3271 = vsub.f32 %v3195, %v3268
  %v3272 = vmul.f32 %v3271, %v3271
  %v3274 = vsel %vm177, %v3272, 0
  %3276 = vmatprep.subr.mxu0 0.0
  %3277 = vmatpush1.msra.mxu0 0.0
  %3278 = vmatprep.subr.mxu0 0.0
  %3279 = vmatpush1.msra.mxu0 0.0
  %3280 = vmatprep.subr.mxu0 0.0
  %3281 = vmatpush1.msra.mxu0 0.0
  %3282 = vmatprep.subr.mxu0 0.0
  %3283 = vmatpush1.msra.mxu0 0.0
  %3284 = vmatprep.subr.mxu0 0.0
  %3285 = vmatpush1.msra.mxu0 0.0
  %3286 = vmatprep.subr.mxu0 0.0
  %3287 = vmatpush1.msra.mxu0 0.0
  %3288 = vmatprep.subr.mxu0 0.0
  %3289 = vmatpush1.msra.mxu0 0.0
  %3290 = vmatprep.subr.mxu0 0.0
  %3291 = vmatpush1.msra.mxu0 0.0
  %3292 = vmatprep.subr.mxu0 0.0
  %3293 = vmatpush1.msra.mxu0 0.0
  %3294 = vmatprep.subr.mxu0 0.0
  %3295 = vmatpush1.msra.mxu0 0.0
  %3296 = vmatprep.subr.mxu0 0.0
  %3297 = vmatpush1.msra.mxu0 0.0
  %3298 = vmatprep.subr.mxu0 0.0
  %3299 = vmatpush1.msra.mxu0 0.0
  %3300 = vmatprep.subr.mxu0 0.0
  %3301 = vmatpush1.msra.mxu0 %v991
  %3302 = vmatprep.subr.mxu0 0.0
  %3303 = vmatpush1.msra.mxu0 %v990
  %3304 = vmatprep.subr.mxu0 0.0
  %3305 = vmatpush1.msra.mxu0 %v989
  %3306 = vmatprep.subr.mxu0 0.0
  %3307 = vmatpush1.msra.mxu0 %v988
  %3308 = vmatprep.subr.mxu0 0.0
  %3309 = vmatpush2.msra.mxu0 0.0
  %3310 = vmatprep.subr.mxu0 0.0
  %3311 = vmatpush2.msra.mxu0 0.0
  %3312 = vmatprep.subr.mxu0 0.0
  %3313 = vmatpush2.msra.mxu0 0.0
  %3314 = vmatprep.subr.mxu0 0.0
  %3315 = vmatpush2.msra.mxu0 0.0
  %3316 = vmatprep.subr.mxu0 0.0
  %3317 = vmatpush2.msra.mxu0 0.0
  %3318 = vmatprep.subr.mxu0 0.0
  %3319 = vmatpush2.msra.mxu0 0.0
  %3320 = vmatprep.subr.mxu0 0.0
  %3321 = vmatpush2.msra.mxu0 0.0
  %3322 = vmatprep.subr.mxu0 0.0
  %3323 = vmatpush2.msra.mxu0 0.0
  %3324 = vmatprep.subr.mxu0 0.0
  %3325 = vmatpush2.msra.mxu0 0.0
  %3326 = vmatprep.subr.mxu0 0.0
  %3327 = vmatpush2.msra.mxu0 0.0
  %3328 = vmatprep.subr.mxu0 0.0
  %3329 = vmatpush2.msra.mxu0 0.0
  %3330 = vmatprep.subr.mxu0 0.0
  %3331 = vmatpush2.msra.mxu0 0.0
  %3332 = vmatprep.subr.mxu0 0.0
  %3333 = vmatpush2.msra.mxu0 0.0
  %3334 = vmatprep.subr.mxu0 0.0
  %3335 = vmatpush2.msra.mxu0 0.0
  %3336 = vmatprep.subr.mxu0 0.0
  %3337 = vmatpush2.msra.mxu0 0.0
  %3338 = vmatprep.subr.mxu0 0.0
  %3339 = vmatpush2.msra.mxu0 0.0
  %3340 = vmatprep.mubr.f32.mxu0 0.0
  %3341 = vmatmul.mubr.f32.gmra.mxu0 %v3274
  %v3342 = vpop.f32.mrf.mxu0
  %v3343 = vadd.f32 1e-05, %v3342
  %v3344 = vpop.f32.mrf.mxu0
  %3345 = vdwg.mxu0
  %v3346 = vrsqrt.pop %v3343
  %v3347 = vmul.f32 %v3271, %v3346
  %v3348 = vlaneseq
  %v3349 = vshrl.u32 %v3348, 7
  %v3350 = vsub.s32 0, %v3349
  %v3351 = vrot.slane %v3196, %v3350
  %v3352 = vmul.f32 %v3347, %v3351
  %v3353 = vlaneseq
  %v3354 = vshrl.u32 %v3353, 7
  %v3355 = vsub.s32 0, %v3354
  %v3356 = vrot.slane %v3197, %v3355
  %v3357 = vadd.f32 %v3352, %v3356
  %v3358 = vld [vmem:[%s2 + $0x58d] sm:$0x1]
  %v3359 = vmul.f32 %v22, %v3357
  %v3360 = vsub.f32 1.0, %v22
  %v3361 = vlaneseq
  %v3362 = vshrl.u32 %v3361, 7
  %v3363 = vsub.s32 0, %v3362
  %v3364 = vrot.slane %v3358, %v3363
  %v3365 = vmul.f32 %v3360, %v3364
  %v3366 = vadd.f32 %v3359, %v3365
  %v3367 = vadd.f32 %v3366, %v996
  %v3368 = vld [vmem:[%s1 + $0x118] sm:$0xff]
  %v3369 = vld [vmem:[%s1 + $0x120] sm:$0xff]
  %v3370 = vld [vmem:[%s1 + $0x128] sm:$0xff]
  %v3371 = vld [vmem:[%s1 + $0x130] sm:$0xff]
  %v3372 = vld [vmem:[%s1 + $0x138] sm:$0x1]
  %v3373 = vlaneseq
  %v3374 = vshrl.u32 %v3373, 7
  %v3375 = vsub.s32 0, %v3374
  %v3376 = vrot.slane %v3372, %v3375
  %v3378 = vsel %vm177, %v3367, 0
  %3380 = vmatprep.subr.mxu0 0.0
  %3381 = vmatpush1.msra.mxu0 0.0
  %3382 = vmatprep.subr.mxu0 0.0
  %3383 = vmatpush1.msra.mxu0 0.0
  %3384 = vmatprep.subr.mxu0 0.0
  %3385 = vmatpush1.msra.mxu0 0.0
  %3386 = vmatprep.subr.mxu0 0.0
  %3387 = vmatpush1.msra.mxu0 0.0
  %3388 = vmatprep.subr.mxu0 0.0
  %3389 = vmatpush1.msra.mxu0 0.0
  %3390 = vmatprep.subr.mxu0 0.0
  %3391 = vmatpush1.msra.mxu0 0.0
  %3392 = vmatprep.subr.mxu0 0.0
  %3393 = vmatpush1.msra.mxu0 0.0
  %3394 = vmatprep.subr.mxu0 0.0
  %3395 = vmatpush1.msra.mxu0 0.0
  %3396 = vmatprep.subr.mxu0 0.0
  %3397 = vmatpush1.msra.mxu0 0.0
  %3398 = vmatprep.subr.mxu0 0.0
  %3399 = vmatpush1.msra.mxu0 0.0
  %3400 = vmatprep.subr.mxu0 0.0
  %3401 = vmatpush1.msra.mxu0 0.0
  %3402 = vmatprep.subr.mxu0 0.0
  %3403 = vmatpush1.msra.mxu0 0.0
  %3404 = vmatprep.subr.mxu0 0.0
  %3405 = vmatpush1.msra.mxu0 %v3371
  %3406 = vmatprep.subr.mxu0 0.0
  %3407 = vmatpush1.msra.mxu0 %v3370
  %3408 = vmatprep.subr.mxu0 0.0
  %3409 = vmatpush1.msra.mxu0 %v3369
  %3410 = vmatprep.subr.mxu0 0.0
  %3411 = vmatpush1.msra.mxu0 %v3368
  %3412 = vmatprep.subr.mxu0 0.0
  %3413 = vmatpush2.msra.mxu0 0.0
  %3414 = vmatprep.subr.mxu0 0.0
  %3415 = vmatpush2.msra.mxu0 0.0
  %3416 = vmatprep.subr.mxu0 0.0
  %3417 = vmatpush2.msra.mxu0 0.0
  %3418 = vmatprep.subr.mxu0 0.0
  %3419 = vmatpush2.msra.mxu0 0.0
  %3420 = vmatprep.subr.mxu0 0.0
  %3421 = vmatpush2.msra.mxu0 0.0
  %3422 = vmatprep.subr.mxu0 0.0
  %3423 = vmatpush2.msra.mxu0 0.0
  %3424 = vmatprep.subr.mxu0 0.0
  %3425 = vmatpush2.msra.mxu0 0.0
  %3426 = vmatprep.subr.mxu0 0.0
  %3427 = vmatpush2.msra.mxu0 0.0
  %3428 = vmatprep.subr.mxu0 0.0
  %3429 = vmatpush2.msra.mxu0 0.0
  %3430 = vmatprep.subr.mxu0 0.0
  %3431 = vmatpush2.msra.mxu0 0.0
  %3432 = vmatprep.subr.mxu0 0.0
  %3433 = vmatpush2.msra.mxu0 0.0
  %3434 = vmatprep.subr.mxu0 0.0
  %3435 = vmatpush2.msra.mxu0 0.0
  %3436 = vmatprep.subr.mxu0 0.0
  %3437 = vmatpush2.msra.mxu0 0.0
  %3438 = vmatprep.subr.mxu0 0.0
  %3439 = vmatpush2.msra.mxu0 0.0
  %3440 = vmatprep.subr.mxu0 0.0
  %3441 = vmatpush2.msra.mxu0 0.0
  %3442 = vmatprep.subr.mxu0 0.0
  %3443 = vmatpush2.msra.mxu0 0.0
  %3444 = vmatprep.mubr.f32.mxu0 0.0
  %3445 = vmatmul.mubr.f32.gmra.mxu0 %v3378
  %v3446 = vpop.f32.mrf.mxu0
  %v3447 = vadd.f32 %v3376, %v3446
  %v3448 = vpop.f32.mrf.mxu0
  %3449 = vdwg.mxu0
  %v3450 = vmul.f32 %v3447, 0.5
  %v3451 = vmul.f32 %v3447, 0.044715
  %v3452 = vmul.f32 %v3451, %v3447
  %v3453 = vmul.f32 %v3452, %v3447
  %v3454 = vadd.f32 %v3447, %v3453
  %v3455 = vmul.f32 %v3454, 0.7978846
  %v3456 = vtanh.pop %v3455
  %v3457 = vadd.f32 %v3456, 1.0
  %v3458 = vmul.f32 %v3450, %v3457
  %v3459 = vld [vmem:[%s2 + $0x4b0] sm:$0xff]
  %v3460 = vld [vmem:[%s2 + $0x4b8] sm:$0xff]
  %v3461 = vld [vmem:[%s2 + $0x4c0] sm:$0xff]
  %v3462 = vld [vmem:[%s2 + $0x4c8] sm:$0xff]
  %v3463 = vld [vmem:[%s2 + $0x4d0] sm:$0xff]
  %v3464 = vld [vmem:[%s2 + $0x4d8] sm:$0xff]
  %v3465 = vld [vmem:[%s2 + $0x4e0] sm:$0xff]
  %v3466 = vld [vmem:[%s2 + $0x4e8] sm:$0xff]
  %v3467 = vld [vmem:[%s2 + $0x4f0] sm:$0xff]
  %v3468 = vld [vmem:[%s2 + $0x4f8] sm:$0xff]
  %v3469 = vld [vmem:[%s2 + $0x500] sm:$0xff]
  %v3470 = vld [vmem:[%s2 + $0x508] sm:$0xff]
  %v3471 = vld [vmem:[%s2 + $0x510] sm:$0xff]
  %v3472 = vld [vmem:[%s2 + $0x518] sm:$0xff]
  %v3473 = vld [vmem:[%s2 + $0x520] sm:$0xff]
  %v3474 = vld [vmem:[%s2 + $0x528] sm:$0xff]
  %v3475 = vld [vmem:[%s2 + $0x58b] sm:$0x1]
  %v3476 = vlaneseq
  %v3477 = vshrl.u32 %v3476, 7
  %v3478 = vsub.s32 0, %v3477
  %v3479 = vrot.slane %v3475, %v3478
  %3480 = vmatprep.subr.mxu0 0.0
  %3481 = vmatpush1.msra.mxu0 %v3474
  %3482 = vmatprep.subr.mxu0 0.0
  %3483 = vmatpush1.msra.mxu0 %v3473
  %3484 = vmatprep.subr.mxu0 0.0
  %3485 = vmatpush1.msra.mxu0 %v3472
  %3486 = vmatprep.subr.mxu0 0.0
  %3487 = vmatpush1.msra.mxu0 %v3471
  %3488 = vmatprep.subr.mxu0 0.0
  %3489 = vmatpush1.msra.mxu0 %v3470
  %3490 = vmatprep.subr.mxu0 0.0
  %3491 = vmatpush1.msra.mxu0 %v3469
  %3492 = vmatprep.subr.mxu0 0.0
  %3493 = vmatpush1.msra.mxu0 %v3468
  %3494 = vmatprep.subr.mxu0 0.0
  %3495 = vmatpush1.msra.mxu0 %v3467
  %3496 = vmatprep.subr.mxu0 0.0
  %3497 = vmatpush1.msra.mxu0 %v3466
  %3498 = vmatprep.subr.mxu0 0.0
  %3499 = vmatpush1.msra.mxu0 %v3465
  %3500 = vmatprep.subr.mxu0 0.0
  %3501 = vmatpush1.msra.mxu0 %v3464
  %3502 = vmatprep.subr.mxu0 0.0
  %3503 = vmatpush1.msra.mxu0 %v3463
  %3504 = vmatprep.subr.mxu0 0.0
  %3505 = vmatpush1.msra.mxu0 %v3462
  %3506 = vmatprep.subr.mxu0 0.0
  %3507 = vmatpush1.msra.mxu0 %v3461
  %3508 = vmatprep.subr.mxu0 0.0
  %3509 = vmatpush1.msra.mxu0 %v3460
  %3510 = vmatprep.subr.mxu0 0.0
  %3511 = vmatpush1.msra.mxu0 %v3459
  %3512 = vmatprep.subr.mxu0 0.0
  %3513 = vmatpush2.msra.mxu0 0.0
  %3514 = vmatprep.subr.mxu0 0.0
  %3515 = vmatpush2.msra.mxu0 0.0
  %3516 = vmatprep.subr.mxu0 0.0
  %3517 = vmatpush2.msra.mxu0 0.0
  %3518 = vmatprep.subr.mxu0 0.0
  %3519 = vmatpush2.msra.mxu0 0.0
  %3520 = vmatprep.subr.mxu0 0.0
  %3521 = vmatpush2.msra.mxu0 0.0
  %3522 = vmatprep.subr.mxu0 0.0
  %3523 = vmatpush2.msra.mxu0 0.0
  %3524 = vmatprep.subr.mxu0 0.0
  %3525 = vmatpush2.msra.mxu0 0.0
  %3526 = vmatprep.subr.mxu0 0.0
  %3527 = vmatpush2.msra.mxu0 0.0
  %3528 = vmatprep.subr.mxu0 0.0
  %3529 = vmatpush2.msra.mxu0 0.0
  %3530 = vmatprep.subr.mxu0 0.0
  %3531 = vmatpush2.msra.mxu0 0.0
  %3532 = vmatprep.subr.mxu0 0.0
  %3533 = vmatpush2.msra.mxu0 0.0
  %3534 = vmatprep.subr.mxu0 0.0
  %3535 = vmatpush2.msra.mxu0 0.0
  %3536 = vmatprep.subr.mxu0 0.0
  %3537 = vmatpush2.msra.mxu0 0.0
  %3538 = vmatprep.subr.mxu0 0.0
  %3539 = vmatpush2.msra.mxu0 0.0
  %3540 = vmatprep.subr.mxu0 0.0
  %3541 = vmatpush2.msra.mxu0 0.0
  %3542 = vmatprep.subr.mxu0 0.0
  %3543 = vmatpush2.msra.mxu0 0.0
  %3544 = vmatprep.mubr.f32.mxu0 0.0
  %3545 = vmatmul.mubr.f32.gmra.mxu0 %v3458
  %v3546 = vpop.f32.mrf.mxu0
  %v3547 = vadd.f32 %v3479, %v3546
  %v3548 = vpop.f32.mrf.mxu0
  %3549 = vdwg.mxu0
  %v3550 = vld [vmem:[%s2 + $0x550] sm:$0xff]
  %v3551 = vld [vmem:[%s2 + $0x558] sm:$0xff]
  %v3552 = vld [vmem:[%s2 + $0x560] sm:$0xff]
  %v3553 = vld [vmem:[%s2 + $0x568] sm:$0xff]
  %v3554 = vld [vmem:[%s2 + $0x58e] sm:$0x1]
  %v3555 = vlaneseq
  %v3556 = vshrl.u32 %v3555, 7
  %v3557 = vsub.s32 0, %v3556
  %v3558 = vrot.slane %v3554, %v3557
  %v3560 = vsel %vm177, %v3547, 0
  %3562 = vmatprep.subr.mxu0 0.0
  %3563 = vmatpush1.msra.mxu0 0.0
  %3564 = vmatprep.subr.mxu0 0.0
  %3565 = vmatpush1.msra.mxu0 0.0
  %3566 = vmatprep.subr.mxu0 0.0
  %3567 = vmatpush1.msra.mxu0 0.0
  %3568 = vmatprep.subr.mxu0 0.0
  %3569 = vmatpush1.msra.mxu0 0.0
  %3570 = vmatprep.subr.mxu0 0.0
  %3571 = vmatpush1.msra.mxu0 0.0
  %3572 = vmatprep.subr.mxu0 0.0
  %3573 = vmatpush1.msra.mxu0 0.0
  %3574 = vmatprep.subr.mxu0 0.0
  %3575 = vmatpush1.msra.mxu0 0.0
  %3576 = vmatprep.subr.mxu0 0.0
  %3577 = vmatpush1.msra.mxu0 0.0
  %3578 = vmatprep.subr.mxu0 0.0
  %3579 = vmatpush1.msra.mxu0 0.0
  %3580 = vmatprep.subr.mxu0 0.0
  %3581 = vmatpush1.msra.mxu0 0.0
  %3582 = vmatprep.subr.mxu0 0.0
  %3583 = vmatpush1.msra.mxu0 0.0
  %3584 = vmatprep.subr.mxu0 0.0
  %3585 = vmatpush1.msra.mxu0 0.0
  %3586 = vmatprep.subr.mxu0 0.0
  %3587 = vmatpush1.msra.mxu0 %v3553
  %3588 = vmatprep.subr.mxu0 0.0
  %3589 = vmatpush1.msra.mxu0 %v3552
  %3590 = vmatprep.subr.mxu0 0.0
  %3591 = vmatpush1.msra.mxu0 %v3551
  %3592 = vmatprep.subr.mxu0 0.0
  %3593 = vmatpush1.msra.mxu0 %v3550
  %3594 = vmatprep.subr.mxu0 0.0
  %3595 = vmatpush2.msra.mxu0 0.0
  %3596 = vmatprep.subr.mxu0 0.0
  %3597 = vmatpush2.msra.mxu0 0.0
  %3598 = vmatprep.subr.mxu0 0.0
  %3599 = vmatpush2.msra.mxu0 0.0
  %3600 = vmatprep.subr.mxu0 0.0
  %3601 = vmatpush2.msra.mxu0 0.0
  %3602 = vmatprep.subr.mxu0 0.0
  %3603 = vmatpush2.msra.mxu0 0.0
  %3604 = vmatprep.subr.mxu0 0.0
  %3605 = vmatpush2.msra.mxu0 0.0
  %3606 = vmatprep.subr.mxu0 0.0
  %3607 = vmatpush2.msra.mxu0 0.0
  %3608 = vmatprep.subr.mxu0 0.0
  %3609 = vmatpush2.msra.mxu0 0.0
  %3610 = vmatprep.subr.mxu0 0.0
  %3611 = vmatpush2.msra.mxu0 0.0
  %3612 = vmatprep.subr.mxu0 0.0
  %3613 = vmatpush2.msra.mxu0 0.0
  %3614 = vmatprep.subr.mxu0 0.0
  %3615 = vmatpush2.msra.mxu0 0.0
  %3616 = vmatprep.subr.mxu0 0.0
  %3617 = vmatpush2.msra.mxu0 0.0
  %3618 = vmatprep.subr.mxu0 0.0
  %3619 = vmatpush2.msra.mxu0 0.0
  %3620 = vmatprep.subr.mxu0 0.0
  %3621 = vmatpush2.msra.mxu0 0.0
  %3622 = vmatprep.subr.mxu0 0.0
  %3623 = vmatpush2.msra.mxu0 0.0
  %3624 = vmatprep.subr.mxu0 0.0
  %3625 = vmatpush2.msra.mxu0 0.0
  %3626 = vmatprep.mubr.f32.mxu0 0.0
  %3627 = vmatmul.mubr.f32.gmra.mxu0 %v3560
  %v3628 = vpop.f32.mrf.mxu0
  %v3629 = vadd.f32 %v3558, %v3628
  %v3630 = vpop.f32.mrf.mxu0
  %3631 = vdwg.mxu0
  %v3632 = vsub.f32 %v3547, %v987
  %v3633 = vmul.f32 %v3632, %v3360
  %v3634 = vmul.f32 %v3633, %v3633
  %v3635 = vsel %vm177, %v3634, 0.0
  %3636 = vadd.xlane.f32.xlu0 %v3635
  %v3637 = vpop.xlane.xlu0 %3636
  %v3638 = vrot.slane %v3637, 4
  %v3639 = vadd.f32 %v3637, %v3638
  %v3640 = vrot.slane %v3639, 2
  %v3641 = vadd.f32 %v3639, %v3640
  %v3642 = vrot.slane %v3641, 1
  %v3643 = vadd.f32 %v3641, %v3642
  %v3644 = vmul.f32 %v3643, 0.0078125
  %3646 = vrot.lane.b32.xlu0 %v3629, 32
  %v3647 = vpop.permute.xlu0 %3646
  %v3649 = vsel %vm177, %v987, %v3647
  %vm3650 = vcmask 523264
  %v3651 = vsel %vm3650, %v3649, %v3644
  %vm3652 = vcmask 785408
  %v3653 = vsel %vm3652, %v3651, 0.0
  %3654 = vst [vmem:[%s3] sm:$0xff] %v3653
  // Predicated region
  $region21: #{gmae_forward.1} parent=0 // pred_check
    _
  $region22: #{gmae_forward.1} parent=0 // pred_check_branch
    %3656 = sbr.rel (0) target = $region24
  $region23: #{gmae_forward.1} parent=0 // pred_region
    _
  $region24: #{gmae_forward.1} parent=0 // pred_fallthru
    _
  // Predicated region
  $region25: #{gmae_forward.1} parent=0 // pred_check
    _
  $region26: #{gmae_forward.1} parent=0 // pred_check_branch
    %3658 = sbr.rel (0) target = $region28
  $region27: #{gmae_forward.1} parent=0 // pred_region
    _
  $region28: #{gmae_forward.1} parent=0 // pred_fallthru
    _

</llo_original>
